<compile_context>
chip_gen: v7x
topology: tpu7x:2x2x1
jax: 0.10.0
libtpu: 0.0.40
codegen_flags: <defaults>
</compile_context>

<pallas_src>
import jax
import jax.numpy as jnp
from jax import lax
from jax.experimental import pallas as pl
from jax.experimental.pallas import tpu as pltpu


def _round_up(x, m):
    return ((x + m - 1) // m) * m


def _make_kernel(hidden_width: int, num_rest: int):
    """Fused ModifiedMLP forward kernel (native-x input, batch-on-lanes compute)."""
    H = hidden_width

    def kernel(*refs):
        x_ref, wenc_ref, benc_ref = refs[0], refs[1], refs[2]
        if num_rest > 0:
            wh_ref, bh_ref, wlast_ref, out_ref = refs[3], refs[4], refs[5], refs[6]
        else:
            wlast_ref, out_ref = refs[3], refs[4]

        x = x_ref[...]  # (tile, d_in): native layout, batch on sublanes.

        # Fused encoder_u / encoder_v / first hidden layer: contract over d_in
        # (dim 1 of both operands) -> (3H, tile), i.e. W @ X^T on the MXU.
        # Result is batch-on-lanes; one EUP tanh pass covers u, v and h1.
        z0 = lax.dot_general(
            wenc_ref[...], x,
            dimension_numbers=(((1,), (1,)), ((), ())),
            preferred_element_type=jnp.float32,
        )
        t = jnp.tanh(z0 + benc_ref[...])          # (3H, tile)
        u = t[:H, :]
        v = t[H:2 * H, :]
        h1 = t[2 * H:, :]

        # Gate:  (1 - a)*u + a*v  with a = tanh(z)/2  ==  u + tanh(z) * d
        d = 0.5 * (v - u)
        h = u + h1 * d

        # Remaining H -> H gated hidden layers (static unroll, tiny trip count).
        for i in range(num_rest):
            z = jnp.dot(wh_ref[i], h, preferred_element_type=jnp.float32) + bh_ref[i]
            h = u + jnp.tanh(z) * d

        # Final projection, lane-dense (d_out, tile) store.
        out_ref[...] = jnp.dot(
            wlast_ref[...], h, preferred_element_type=jnp.float32
        ).astype(out_ref.dtype)

    return kernel


def modified_mlp_forward(x, params, *, target_steps=2, max_tile=8192):
    """Fused ModifiedMLP forward via pallas_call.

    params (PyTorch-native layouts):
      'wu','bu','wv','bv' : encoder weights (H, d_in) and biases (H,)
      'hidden'            : list of (W_i (out,in), b_i (out,)) gated hidden layers
      'w_last'            : final projection (d_out, H), no bias
    """
    n, d_in = x.shape
    wu, bu = params["wu"], params["bu"]
    wv, bv = params["wv"], params["bv"]
    hidden = params["hidden"]
    w_last = params["w_last"]
    H = wu.shape[0]
    d_out = w_last.shape[0]
    assert hidden[0][0].shape == (H, d_in)
    # H must be sublane-aligned so the u / v / h1 slices of the fused (3H, tile)
    # activation stay on 8-sublane boundaries (slices are not views on TPU).
    assert H % 8 == 0, "hidden width must be a multiple of 8"

    # --- pack weights once, outside the kernel ---------------------------------
    w0, b0 = hidden[0]
    w_enc = jnp.concatenate([wu, wv, w0], axis=0)                    # (3H, d_in)
    b_enc = jnp.concatenate([bu, bv, b0], axis=0).reshape(3 * H, 1)  # (3H, 1)
    rest = hidden[1:]
    num_rest = len(rest)
    if num_rest:
        w_hid = jnp.stack([w for (w, _) in rest], axis=0)            # (R, H, H)
        b_hid = jnp.stack([b for (_, b) in rest], axis=0).reshape(num_rest, H, 1)

    # --- tile / grid selection ---------------------------------------------------
    # Aim for `target_steps` grid steps: >=2 shards batch tiles across v7x's two
    # TensorCores ("parallel" axis); the extra step is ~0.35us on single-TC
    # v5e/v6e.  Cap tile for VMEM headroom (v7x: 64 MiB physical / 32 MiB scoped).
    tile = _round_up(max(pl.cdiv(n, target_steps), 128), 128)
    tile = min(tile, max_tile)
    n_pad = _round_up(n, tile)
    # Only pad when the batch is ragged; the common (divisible) case touches x
    # zero times on the host/XLA side before the kernel.
    x_in = x if n_pad == n else jnp.pad(x, ((0, n_pad - n), (0, 0)))
    grid = (n_pad // tile,)

    const2 = lambda i: (0, 0)
    const3 = lambda i: (0, 0, 0)

    in_specs = [
        # Native (N, d_in) layout: last dim equals the full array dim, so the
        # (8,128) rule is satisfied without any pre-transpose/pad of x.
        pl.BlockSpec((tile, d_in), lambda i: (i, 0)),
        pl.BlockSpec(w_enc.shape, const2),
        pl.BlockSpec(b_enc.shape, const2),
    ]
    args = [x_in, w_enc, b_enc]
    if num_rest:
        in_specs += [
            pl.BlockSpec(w_hid.shape, const3),
            pl.BlockSpec(b_hid.shape, const3),
        ]
        args += [w_hid, b_hid]
    in_specs.append(pl.BlockSpec(w_last.shape, const2))
    args.append(w_last)

    out_specs = pl.BlockSpec((d_out, tile), lambda i: (0, i))

    # Advisory cost hint so XLA can overlap this us-scale call with neighbors.
    flops = 2 * n_pad * (3 * H * d_in + num_rest * H * H + H * d_out)
    transc = n_pad * (3 * H + num_rest * H)
    w_bytes = w_enc.size + b_enc.size + w_last.size
    if num_rest:
        w_bytes += w_hid.size + b_hid.size
    nbytes = 4 * (n_pad * (d_in + d_out) + w_bytes)
    cost = pl.CostEstimate(
        flops=int(flops), transcendentals=int(transc), bytes_accessed=int(nbytes)
    )

    fn = pl.pallas_call(
        _make_kernel(H, num_rest),
        out_shape=jax.ShapeDtypeStruct((d_out, n_pad), jnp.float32),
        grid=grid,
        in_specs=in_specs,
        out_specs=out_specs,
        compiler_params=pltpu.CompilerParams(
            dimension_semantics=("parallel",)
        ),
        cost_estimate=cost,
    )
    out_t = fn(*args)           # (d_out, n_pad), lane-dense store
    return out_t[:, :n].T       # (n, d_out); tiny (d_out rows) host-side view


def init_params(key, mlp_layers):
    """Deterministic init mirroring nn.Linear (weights stored as (out, in))."""
    def linear(k, fan_in, fan_out, bias=True):
        kw, kb = jax.random.split(k)
        bound = 1.0 / jnp.sqrt(fan_in)
        w = jax.random.uniform(kw, (fan_out, fan_in), jnp.float32,
                               minval=-bound, maxval=bound)
        if bias:
            b = jax.random.uniform(kb, (fan_out,), jnp.float32,
                                   minval=-bound, maxval=bound)
            return w, b
        return w, None

    keys = jax.random.split(key, len(mlp_layers) + 2)
    wu, bu = linear(keys[0], mlp_layers[0], mlp_layers[1])
    wv, bv = linear(keys[1], mlp_layers[0], mlp_layers[1])
    hidden = [
        linear(keys[2 + i], mlp_layers[i], mlp_layers[i + 1])
        for i in range(len(mlp_layers) - 2)
    ]
    w_last, _ = linear(keys[-1], mlp_layers[-2], mlp_layers[-1], bias=False)
    return {"wu": wu, "bu": bu, "wv": wv, "bv": bv,
            "hidden": hidden, "w_last": w_last}


def reference_forward(x, params):
    """Pure-JAX reference matching the PyTorch forward exactly."""
    u = jnp.tanh(x @ params["wu"].T + params["bu"])
    v = jnp.tanh(x @ params["wv"].T + params["bv"])
    h = x
    for (w, b) in params["hidden"]:
        h = jnp.tanh(h @ w.T + b)
        h = h / 2.0
        h = (1.0 - h) * u + h * v
    return h @ params["w_last"].T


if __name__ == "__main__":
    # mlp_layers = [in_dim, hidden, hidden, hidden, out_dim] (elliptic 20d PINN baseline)
    mlp_layers = [20, 32, 32, 32, 1]

    key = jax.random.PRNGKey(0)
    kx, kp = jax.random.split(key)
    params = init_params(kp, mlp_layers)

    # N=4096: even 2-step grid (megacore-friendly), no padding.
    # N=1000: exercises the ragged-batch padding path.
    for N in (4096, 1000):
        x = jax.random.normal(jax.random.fold_in(kx, N),
                              (N, mlp_layers[0]), jnp.float32)
        out = jax.block_until_ready(modified_mlp_forward(x, params))
        ref = reference_forward(x, params)
        assert out.shape == (N, mlp_layers[-1])
        assert jnp.allclose(out, ref, atol=1e-4, rtol=1e-4), \
            f"mismatch vs reference at N={N}"

    # TODO(synk): optional bf16 weight casts (v6e/v7x only) and Buffered(1) on
    # constant-operand BlockSpecs were deferred; negligible at H=32 / 2-step grid.
    print("KERNEL_OK")
</pallas_src>

<mosaic_0001>
module attributes {stable_mosaic.version = 11 : i64} {
  func.func @kernel(%arg0: i32, %arg1: memref<2048x20xf32, #tpu.memory_space<vmem>>, %arg2: memref<96x20xf32, #tpu.memory_space<vmem>>, %arg3: memref<96x1xf32, #tpu.memory_space<vmem>>, %arg4: memref<2x32x32xf32, #tpu.memory_space<vmem>>, %arg5: memref<2x32x1xf32, #tpu.memory_space<vmem>>, %arg6: memref<1x32xf32, #tpu.memory_space<vmem>>, %arg7: memref<1x2048xf32, #tpu.memory_space<vmem>>) attributes {dimension_semantics = [#tpu.dimension_semantics<parallel>], iteration_bounds = array<i64: 2>, scalar_prefetch = 0 : i64, scratch_operands = 0 : i64, tpu.core_type = #tpu.core_type<tc>, window_params = [{transform_indices = @transform_0, window_bounds = array<i64: 2048, 20>}, {pipeline_mode = #tpu.pipeline_mode<synchronous>, transform_indices = @transform_1, window_bounds = array<i64: 96, 20>}, {pipeline_mode = #tpu.pipeline_mode<synchronous>, transform_indices = @transform_2, window_bounds = array<i64: 96, 1>}, {pipeline_mode = #tpu.pipeline_mode<synchronous>, transform_indices = @transform_3, window_bounds = array<i64: 2, 32, 32>}, {pipeline_mode = #tpu.pipeline_mode<synchronous>, transform_indices = @transform_4, window_bounds = array<i64: 2, 32, 1>}, {pipeline_mode = #tpu.pipeline_mode<synchronous>, transform_indices = @transform_5, window_bounds = array<i64: 1, 32>}, {transform_indices = @transform_6, window_bounds = array<i64: 1, 2048>}]} {
    %c0 = arith.constant 0 : index
    %c0_0 = arith.constant 0 : index
    %0 = vector.load %arg1[%c0, %c0_0] : memref<2048x20xf32, #tpu.memory_space<vmem>>, vector<2048x20xf32>
    %c0_1 = arith.constant 0 : index
    %c0_2 = arith.constant 0 : index
    %1 = vector.load %arg2[%c0_1, %c0_2] : memref<96x20xf32, #tpu.memory_space<vmem>>, vector<96x20xf32>
    %cst = arith.constant dense<0.000000e+00> : vector<96x2048xf32>
    %2 = tpu.matmul %1, %0, %cst {dimension_numbers = #tpu.dot_dimension_numbers<[1], [1], [0], [0], [0, 0, 1, 0], [], []>} : vector<96x20xf32>, vector<2048x20xf32>, vector<96x2048xf32> -> vector<96x2048xf32>
    %c0_3 = arith.constant 0 : index
    %c0_4 = arith.constant 0 : index
    %3 = vector.load %arg3[%c0_3, %c0_4] : memref<96x1xf32, #tpu.memory_space<vmem>>, vector<96x1xf32>
    %4 = vector.broadcast %3 : vector<96x1xf32> to vector<96x2048xf32>
    %5 = arith.addf %2, %4 : vector<96x2048xf32>
    %6 = math.tanh %5 : vector<96x2048xf32>
    %7 = vector.extract_strided_slice %6 {offsets = [0, 0], sizes = [32, 2048], strides = [1, 1]} : vector<96x2048xf32> to vector<32x2048xf32>
    %8 = vector.extract_strided_slice %6 {offsets = [32, 0], sizes = [32, 2048], strides = [1, 1]} : vector<96x2048xf32> to vector<32x2048xf32>
    %9 = vector.extract_strided_slice %6 {offsets = [64, 0], sizes = [32, 2048], strides = [1, 1]} : vector<96x2048xf32> to vector<32x2048xf32>
    %10 = arith.subf %8, %7 : vector<32x2048xf32>
    %cst_5 = arith.constant 5.000000e-01 : f32
    %11 = vector.broadcast %cst_5 : f32 to vector<32x2048xf32>
    %12 = arith.mulf %11, %10 : vector<32x2048xf32>
    %13 = arith.mulf %9, %12 : vector<32x2048xf32>
    %14 = arith.addf %7, %13 : vector<32x2048xf32>
    %c0_6 = arith.constant 0 : index
    %c0_7 = arith.constant 0 : index
    %c0_8 = arith.constant 0 : index
    %15 = vector.load %arg4[%c0_6, %c0_7, %c0_8] : memref<2x32x32xf32, #tpu.memory_space<vmem>>, vector<1x32x32xf32>
    %16 = vector.shape_cast %15 : vector<1x32x32xf32> to vector<32x32xf32>
    %cst_9 = arith.constant dense<0.000000e+00> : vector<32x2048xf32>
    %17 = tpu.matmul %16, %14, %cst_9 {dimension_numbers = #tpu.dot_dimension_numbers<[1], [0], [0], [1], [0, 0, 1, 1], [], []>} : vector<32x32xf32>, vector<32x2048xf32>, vector<32x2048xf32> -> vector<32x2048xf32>
    %c0_10 = arith.constant 0 : index
    %c0_11 = arith.constant 0 : index
    %c0_12 = arith.constant 0 : index
    %18 = vector.load %arg5[%c0_10, %c0_11, %c0_12] : memref<2x32x1xf32, #tpu.memory_space<vmem>>, vector<1x32x1xf32>
    %19 = vector.shape_cast %18 : vector<1x32x1xf32> to vector<32x1xf32>
    %20 = vector.broadcast %19 : vector<32x1xf32> to vector<32x2048xf32>
    %21 = arith.addf %17, %20 : vector<32x2048xf32>
    %22 = math.tanh %21 : vector<32x2048xf32>
    %23 = arith.mulf %22, %12 : vector<32x2048xf32>
    %24 = arith.addf %7, %23 : vector<32x2048xf32>
    %c1 = arith.constant 1 : index
    %c0_13 = arith.constant 0 : index
    %c0_14 = arith.constant 0 : index
    %25 = vector.load %arg4[%c1, %c0_13, %c0_14] : memref<2x32x32xf32, #tpu.memory_space<vmem>>, vector<1x32x32xf32>
    %26 = vector.shape_cast %25 : vector<1x32x32xf32> to vector<32x32xf32>
    %cst_15 = arith.constant dense<0.000000e+00> : vector<32x2048xf32>
    %27 = tpu.matmul %26, %24, %cst_15 {dimension_numbers = #tpu.dot_dimension_numbers<[1], [0], [0], [1], [0, 0, 1, 1], [], []>} : vector<32x32xf32>, vector<32x2048xf32>, vector<32x2048xf32> -> vector<32x2048xf32>
    %c1_16 = arith.constant 1 : index
    %c0_17 = arith.constant 0 : index
    %c0_18 = arith.constant 0 : index
    %28 = vector.load %arg5[%c1_16, %c0_17, %c0_18] : memref<2x32x1xf32, #tpu.memory_space<vmem>>, vector<1x32x1xf32>
    %29 = vector.shape_cast %28 : vector<1x32x1xf32> to vector<32x1xf32>
    %30 = vector.broadcast %29 : vector<32x1xf32> to vector<32x2048xf32>
    %31 = arith.addf %27, %30 : vector<32x2048xf32>
    %32 = math.tanh %31 : vector<32x2048xf32>
    %33 = arith.mulf %32, %12 : vector<32x2048xf32>
    %34 = arith.addf %7, %33 : vector<32x2048xf32>
    %c0_19 = arith.constant 0 : index
    %c0_20 = arith.constant 0 : index
    %35 = vector.load %arg6[%c0_19, %c0_20] : memref<1x32xf32, #tpu.memory_space<vmem>>, vector<1x32xf32>
    %cst_21 = arith.constant dense<0.000000e+00> : vector<1x2048xf32>
    %36 = tpu.matmul %35, %34, %cst_21 {dimension_numbers = #tpu.dot_dimension_numbers<[1], [0], [0], [1], [0, 0, 1, 1], [], []>} : vector<1x32xf32>, vector<32x2048xf32>, vector<1x2048xf32> -> vector<1x2048xf32>
    %c0_22 = arith.constant 0 : index
    %c0_23 = arith.constant 0 : index
    %37 = vector.load %arg7[%c0_22, %c0_23] : memref<1x2048xf32, #tpu.memory_space<vmem>>, vector<1x2048xf32>
    tpu.vector_store %arg7[%c0_22, %c0_23], %36 {strides = array<i32>} : memref<1x2048xf32, #tpu.memory_space<vmem>>, vector<1x2048xf32>,
    return
  }
  func.func @transform_0(%arg0: i32) -> (i32, i32) {
    %c0_i32 = arith.constant 0 : i32
    %c0_i32_0 = arith.constant 0 : i32
    return %arg0, %c0_i32 : i32, i32
  }
  func.func @transform_1(%arg0: i32) -> (i32, i32) {
    %c0_i32 = arith.constant 0 : i32
    %c0_i32_0 = arith.constant 0 : i32
    %c0_i32_1 = arith.constant 0 : i32
    return %c0_i32, %c0_i32_0 : i32, i32
  }
  func.func @transform_2(%arg0: i32) -> (i32, i32) {
    %c0_i32 = arith.constant 0 : i32
    %c0_i32_0 = arith.constant 0 : i32
    %c0_i32_1 = arith.constant 0 : i32
    return %c0_i32, %c0_i32_0 : i32, i32
  }
  func.func @transform_3(%arg0: i32) -> (i32, i32, i32) {
    %c0_i32 = arith.constant 0 : i32
    %c0_i32_0 = arith.constant 0 : i32
    %c0_i32_1 = arith.constant 0 : i32
    %c0_i32_2 = arith.constant 0 : i32
    return %c0_i32, %c0_i32_0, %c0_i32_1 : i32, i32, i32
  }
  func.func @transform_4(%arg0: i32) -> (i32, i32, i32) {
    %c0_i32 = arith.constant 0 : i32
    %c0_i32_0 = arith.constant 0 : i32
    %c0_i32_1 = arith.constant 0 : i32
    %c0_i32_2 = arith.constant 0 : i32
    return %c0_i32, %c0_i32_0, %c0_i32_1 : i32, i32, i32
  }
  func.func @transform_5(%arg0: i32) -> (i32, i32) {
    %c0_i32 = arith.constant 0 : i32
    %c0_i32_0 = arith.constant 0 : i32
    %c0_i32_1 = arith.constant 0 : i32
    return %c0_i32, %c0_i32_0 : i32, i32
  }
  func.func @transform_6(%arg0: i32) -> (i32, i32) {
    %c0_i32 = arith.constant 0 : i32
    %c0_i32_0 = arith.constant 0 : i32
    return %c0_i32, %arg0 : i32, i32
  }
}

</mosaic_0001>

<llo_original>
// kernel: tpu_custom_call.1
$region0: #{tpu_custom_call.1}
  #allocation0 [shape = 'u32[]', space=smem, size = 0x4, offset = 0x4, fixed_abs, tag = 'smem constant byte address 0x4 - core index']
  #allocation1 [shape = 'u32[144,128]{1,0:T(1,128)}', space=vmem, size = 0x12000, scoped, tag = 'internal scratch']
  %s0 = inlined_call_operand.vmem [shape: f32[4096,20], index: 0, kind: input, shape index: {}]
  %s1 = inlined_call_operand.vmem [shape: f32[96,20], index: 1, kind: input, shape index: {}]
  %s2 = inlined_call_operand.vmem [shape: f32[96,1], index: 2, kind: input, shape index: {}]
  %s3 = inlined_call_operand.vmem [shape: f32[2,32,32], index: 3, kind: input, shape index: {}]
  %s4 = inlined_call_operand.vmem [shape: f32[2,32,1], index: 4, kind: input, shape index: {}]
  %s5 = inlined_call_operand.vmem [shape: f32[1,32], index: 5, kind: input, shape index: {}]
  %s6 = inlined_call_operand.hbm [shape: f32[1,4096], index: 6, kind: output, shape index: {}]
  %s7 = sld [smem:[#allocation0]]
  $region57: #{tpu_custom_call.1} parent=0
    _
  %s9 = ssub.s32 1, %s7
  %s10 = scalar_select 0, %s9, %s7
  $region1: #{tpu_custom_call.1} parent=0
    #allocation2 [shape = 'u8[16384]{0}', space=vmem, size = 0x4000, scoped, tag = 'output window, operand 0']
    #allocation3 [shape = 's32[2]{0}', space=sflag, size = 0x8, scoped, tag = 'scoped memory for tpu_custom_call.1']
    %11 = vsyncpa [#allocation3], 0
    %s12 = scalar_lea.sflag [#allocation3], 1
    %13 = vsyncpa %s12, 0
    loop: start=0, step=1, limit=4
    $region2: #{tpu_custom_call.1} parent=1 // loop_pre_header
      _
    $region3: #{tpu_custom_call.1} parent=1 // loop_header
      %s15 = sphi 0, %s19
      %p16 = scmp.ge.s32.totalorder %s15, 4
      %s25 = sphi 0, %s27
      %s28 = sphi 0, %s25
      %s29 = sphi 0, %s28
      %s45 = sphi 0, %s29
      %s49 = sphi 0, %s49
      %s51 = sphi 0, %s49
      %s52 = sphi 0, %s51
      %s66 = sphi 0, %s52
      %s70 = sphi 0, %s70
      %s72 = sphi 0, %s70
      %s73 = sphi 0, %s72
      %s87 = sphi 0, %s73
      %s91 = sphi 0, %s91
      %s93 = sphi 0, %s91
      %s94 = sphi 0, %s93
      %s108 = sphi 0, %s94
      %s112 = sphi 0, %s112
      %s114 = sphi 0, %s112
      %s115 = sphi 0, %s114
      %s129 = sphi 0, %s115
      %s133 = sphi 0, %s133
      %s135 = sphi 0, %s133
      %s136 = sphi 0, %s135
      %s150 = sphi 0, %s136
      %s156 = sphi 0, %s158
      %s159 = sphi 0, %s156
      %s160 = sphi 0, %s159
      %s176 = sphi 0, %s160
    $region4: #{tpu_custom_call.1} parent=1 // loop_header_branch
      %18 = sbr.rel (%p16) target = $region8
    $region5: #{tpu_custom_call.1} parent=1 // loop_body
      %s20 = ssub.s32 %s15, 1
      %s21 = ssub.s32 %s15, 2
      %s22 = sadd.s32 %s15, 1
      %s23 = ssub.s32 %s15, %s22
      %p24 = scmp.eq.s32.totalorder %s23, 0
      %s26 = sadd.s32 %s25, 1
      %s27 = scalar_select %p24, %s25, %s26
      %p30 = pneg %p24
      %p31 = scmp.eq.s32.totalorder %s15, 1
      %p32 = por %p30, %p31
      %p33 = scmp.ne.s32.totalorder %s25, %s28
      %p34 = scmp.eq.s32.totalorder %s15, 0
      %p35 = por %p33, %p34
      %p36 = scmp.ne.s32.totalorder %s25, %s28
      %p37 = scmp.eq.s32.totalorder %s20, 1
      %p38 = por %p36, %p37
      %p39 = scmp.ne.s32.totalorder %s28, %s29
      %p40 = scmp.eq.s32.totalorder %s20, 0
      %p41 = por %p39, %p40
      %p42 = scmp.ne.s32.totalorder %s28, %s29
      %p43 = scmp.eq.s32.totalorder %s21, 1
      %p44 = por %p42, %p43
      %p46 = scmp.ne.s32.totalorder %s29, %s45
      %p47 = scmp.eq.s32.totalorder %s21, 0
      %p48 = por %p46, %p47
      %s50 = sadd.s32 %s49, 1
      %p53 = scmp.eq.s32.totalorder %s15, 1
      %p54 = scmp.ne.s32.totalorder %s49, %s51
      %p55 = scmp.eq.s32.totalorder %s15, 0
      %p56 = por %p54, %p55
      %p57 = scmp.ne.s32.totalorder %s49, %s51
      %p58 = scmp.eq.s32.totalorder %s20, 1
      %p59 = por %p57, %p58
      %p60 = scmp.ne.s32.totalorder %s51, %s52
      %p61 = scmp.eq.s32.totalorder %s20, 0
      %p62 = por %p60, %p61
      %p63 = scmp.ne.s32.totalorder %s51, %s52
      %p64 = scmp.eq.s32.totalorder %s21, 1
      %p65 = por %p63, %p64
      %p67 = scmp.ne.s32.totalorder %s52, %s66
      %p68 = scmp.eq.s32.totalorder %s21, 0
      %p69 = por %p67, %p68
      %s71 = sadd.s32 %s70, 1
      %p74 = scmp.eq.s32.totalorder %s15, 1
      %p75 = scmp.ne.s32.totalorder %s70, %s72
      %p76 = scmp.eq.s32.totalorder %s15, 0
      %p77 = por %p75, %p76
      %p78 = scmp.ne.s32.totalorder %s70, %s72
      %p79 = scmp.eq.s32.totalorder %s20, 1
      %p80 = por %p78, %p79
      %p81 = scmp.ne.s32.totalorder %s72, %s73
      %p82 = scmp.eq.s32.totalorder %s20, 0
      %p83 = por %p81, %p82
      %p84 = scmp.ne.s32.totalorder %s72, %s73
      %p85 = scmp.eq.s32.totalorder %s21, 1
      %p86 = por %p84, %p85
      %p88 = scmp.ne.s32.totalorder %s73, %s87
      %p89 = scmp.eq.s32.totalorder %s21, 0
      %p90 = por %p88, %p89
      %s92 = sadd.s32 %s91, 1
      %p95 = scmp.eq.s32.totalorder %s15, 1
      %p96 = scmp.ne.s32.totalorder %s91, %s93
      %p97 = scmp.eq.s32.totalorder %s15, 0
      %p98 = por %p96, %p97
      %p99 = scmp.ne.s32.totalorder %s91, %s93
      %p100 = scmp.eq.s32.totalorder %s20, 1
      %p101 = por %p99, %p100
      %p102 = scmp.ne.s32.totalorder %s93, %s94
      %p103 = scmp.eq.s32.totalorder %s20, 0
      %p104 = por %p102, %p103
      %p105 = scmp.ne.s32.totalorder %s93, %s94
      %p106 = scmp.eq.s32.totalorder %s21, 1
      %p107 = por %p105, %p106
      %p109 = scmp.ne.s32.totalorder %s94, %s108
      %p110 = scmp.eq.s32.totalorder %s21, 0
      %p111 = por %p109, %p110
      %s113 = sadd.s32 %s112, 1
      %p116 = scmp.eq.s32.totalorder %s15, 1
      %p117 = scmp.ne.s32.totalorder %s112, %s114
      %p118 = scmp.eq.s32.totalorder %s15, 0
      %p119 = por %p117, %p118
      %p120 = scmp.ne.s32.totalorder %s112, %s114
      %p121 = scmp.eq.s32.totalorder %s20, 1
      %p122 = por %p120, %p121
      %p123 = scmp.ne.s32.totalorder %s114, %s115
      %p124 = scmp.eq.s32.totalorder %s20, 0
      %p125 = por %p123, %p124
      %p126 = scmp.ne.s32.totalorder %s114, %s115
      %p127 = scmp.eq.s32.totalorder %s21, 1
      %p128 = por %p126, %p127
      %p130 = scmp.ne.s32.totalorder %s115, %s129
      %p131 = scmp.eq.s32.totalorder %s21, 0
      %p132 = por %p130, %p131
      %s134 = sadd.s32 %s133, 1
      %p137 = scmp.eq.s32.totalorder %s15, 1
      %p138 = scmp.ne.s32.totalorder %s133, %s135
      %p139 = scmp.eq.s32.totalorder %s15, 0
      %p140 = por %p138, %p139
      %p141 = scmp.ne.s32.totalorder %s133, %s135
      %p142 = scmp.eq.s32.totalorder %s20, 1
      %p143 = por %p141, %p142
      %p144 = scmp.ne.s32.totalorder %s135, %s136
      %p145 = scmp.eq.s32.totalorder %s20, 0
      %p146 = por %p144, %p145
      %p147 = scmp.ne.s32.totalorder %s135, %s136
      %p148 = scmp.eq.s32.totalorder %s21, 1
      %p149 = por %p147, %p148
      %p151 = scmp.ne.s32.totalorder %s136, %s150
      %p152 = scmp.eq.s32.totalorder %s21, 0
      %p153 = por %p151, %p152
      %s154 = ssub.s32 %s15, %s22
      %p155 = scmp.eq.s32.totalorder %s154, 0
      %s157 = sadd.s32 %s156, 1
      %s158 = scalar_select %p155, %s156, %s157
      %p161 = pneg %p155
      %p162 = scmp.eq.s32.totalorder %s15, 1
      %p163 = por %p161, %p162
      %p164 = scmp.ne.s32.totalorder %s156, %s159
      %p165 = scmp.eq.s32.totalorder %s15, 0
      %p166 = por %p164, %p165
      %p167 = scmp.ne.s32.totalorder %s156, %s159
      %p168 = scmp.eq.s32.totalorder %s20, 1
      %p169 = por %p167, %p168
      %p170 = scmp.ne.s32.totalorder %s159, %s160
      %p171 = scmp.eq.s32.totalorder %s20, 0
      %p172 = por %p170, %p171
      %p173 = scmp.ne.s32.totalorder %s159, %s160
      %p174 = scmp.eq.s32.totalorder %s21, 1
      %p175 = por %p173, %p174
      %p177 = scmp.ne.s32.totalorder %s160, %s176
      %p178 = scmp.eq.s32.totalorder %s21, 0
      %p179 = por %p177, %p178
      %p180 = scmp.le.s32.totalorder 1, %s15
      %p181 = scmp.lt.s32.totalorder %s15, 3
      %p182 = pnand %p180, %p181
      %p183 = pneg %p182
      // Predicated region
      $region9: #{tpu_custom_call.1} parent=5 // pred_check
        _
      $region10: #{tpu_custom_call.1} parent=5 // pred_check_branch
        %185 = sbr.rel (%p182) target = $region12
      $region11: #{tpu_custom_call.1} parent=5 // pred_region
        %s186 = ssub.s32 %s15, 1
        // Predicated region
        $region13: #{tpu_custom_call.1} parent=11 // pred_check
          %p187 = pneg %p62
        $region14: #{tpu_custom_call.1} parent=11 // pred_check_branch
          %189 = sbr.rel (%p187) target = $region16
        $region15: #{tpu_custom_call.1} parent=11 // pred_region
          _
        $region16: #{tpu_custom_call.1} parent=11 // pred_fallthru
          _
        // Predicated region
        $region17: #{tpu_custom_call.1} parent=11 // pred_check
          %p190 = pneg %p83
        $region18: #{tpu_custom_call.1} parent=11 // pred_check_branch
          %192 = sbr.rel (%p190) target = $region20
        $region19: #{tpu_custom_call.1} parent=11 // pred_region
          _
        $region20: #{tpu_custom_call.1} parent=11 // pred_fallthru
          _
        // Predicated region
        $region21: #{tpu_custom_call.1} parent=11 // pred_check
          %p193 = pneg %p104
        $region22: #{tpu_custom_call.1} parent=11 // pred_check_branch
          %195 = sbr.rel (%p193) target = $region24
        $region23: #{tpu_custom_call.1} parent=11 // pred_region
          _
        $region24: #{tpu_custom_call.1} parent=11 // pred_fallthru
          _
        // Predicated region
        $region25: #{tpu_custom_call.1} parent=11 // pred_check
          %p196 = pneg %p125
        $region26: #{tpu_custom_call.1} parent=11 // pred_check_branch
          %198 = sbr.rel (%p196) target = $region28
        $region27: #{tpu_custom_call.1} parent=11 // pred_region
          _
        $region28: #{tpu_custom_call.1} parent=11 // pred_fallthru
          _
        // Predicated region
        $region29: #{tpu_custom_call.1} parent=11 // pred_check
          %p199 = pneg %p146
        $region30: #{tpu_custom_call.1} parent=11 // pred_check_branch
          %201 = sbr.rel (%p199) target = $region32
        $region31: #{tpu_custom_call.1} parent=11 // pred_region
          _
        $region32: #{tpu_custom_call.1} parent=11 // pred_fallthru
          _
      $region12: #{tpu_custom_call.1} parent=5 // pred_fallthru
        _
      %p202 = scmp.lt.s32.totalorder %s15, 2
      // Predicated region
      $region33: #{tpu_custom_call.1} parent=5 // pred_check
        %p203 = pneg %p202
      $region34: #{tpu_custom_call.1} parent=5 // pred_check_branch
        %205 = sbr.rel (%p203) target = $region36
      $region35: #{tpu_custom_call.1} parent=5 // pred_region
        // Predicated region
        $region37: #{tpu_custom_call.1} parent=35 // pred_check
          %p206 = pneg %p35
        $region38: #{tpu_custom_call.1} parent=35 // pred_check_branch
          %208 = sbr.rel (%p206) target = $region40
        $region39: #{tpu_custom_call.1} parent=35 // pred_region
          %s209 = smul.u32 256, %s15
          %p210 = scmp.lt.s32.totalorder %s209, 511
          %s211 = scalar_select %p210, %s209, 511
          %s212 = smul.addr %s211, 8
          %s213 = scalar_lea.vmem %s0, %s212
          %s214 = smul.u32 256, %s15
        $region40: #{tpu_custom_call.1} parent=35 // pred_fallthru
          _
      $region36: #{tpu_custom_call.1} parent=5 // pred_fallthru
        _
      %p215 = scmp.le.s32.totalorder 1, %s15
      %p216 = scmp.lt.s32.totalorder %s15, 3
      %p217 = pnand %p215, %p216
      %p218 = pneg %p217
      // Predicated region
      $region41: #{tpu_custom_call.1} parent=5 // pred_check
        _
      $region42: #{tpu_custom_call.1} parent=5 // pred_check_branch
        %220 = sbr.rel (%p217) target = $region44
      $region43: #{tpu_custom_call.1} parent=5 // pred_region
        %s221 = ssub.s32 %s15, 1
        %s222 = smul.u32 256, %s20
        %p223 = scmp.lt.s32.totalorder %s222, 511
        %s224 = scalar_select %p223, %s222, 511
        %s225 = smul.addr %s224, 8
        %s226 = scalar_lea.vmem %s0, %s225
        %p227 = pneg %p41
        %p228 = pneg %p38
        %p229 = pneg %p62
        %p230 = pneg %p59
        %p231 = pneg %p83
        %p232 = pneg %p80
        %p233 = pneg %p104
        %p234 = pneg %p101
        %p235 = pneg %p125
        %p236 = pneg %p122
        %p237 = pneg %p146
        %p238 = pneg %p143
        %p239 = pneg %p172
        %p240 = pneg %p169
        %s241 = sand.u32 %s159, 1
        %s242 = scalar_lea.sflag [#allocation3], %s241
        %s243 = sand.u32 %s159, 1
        %s244 = smul.addr %s243, 16
        %s245 = scalar_lea.vmem [#allocation2], %s244
        %s246 = smul.u32 256, %s20
        %p247 = scmp.lt.s32.totalorder %s246, 511
        %s248 = scalar_select %p247, %s246, 511
        %s249 = smul.addr %s248, 8
        %s250 = scalar_lea.vmem %s0, %s249
        %s251 = smul.u32 256, %s20
        %s252 = smul.u32 16, %s20
        %v253 = vld [vmem:[%s250] sm:$0xff]
        %v254 = vld [vmem:[%s250 + $0x8] sm:$0xff]
        %v255 = vld [vmem:[%s250 + $0x10] sm:$0xff]
        %v256 = vld [vmem:[%s250 + $0x18] sm:$0xff]
        %v257 = vld [vmem:[%s250 + $0x20] sm:$0xff]
        %v258 = vld [vmem:[%s250 + $0x28] sm:$0xff]
        %v259 = vld [vmem:[%s250 + $0x30] sm:$0xff]
        %v260 = vld [vmem:[%s250 + $0x38] sm:$0xff]
        %v261 = vld [vmem:[%s250 + $0x40] sm:$0xff]
        %v262 = vld [vmem:[%s250 + $0x48] sm:$0xff]
        %v263 = vld [vmem:[%s250 + $0x50] sm:$0xff]
        %v264 = vld [vmem:[%s250 + $0x58] sm:$0xff]
        %v265 = vld [vmem:[%s250 + $0x60] sm:$0xff]
        %v266 = vld [vmem:[%s250 + $0x68] sm:$0xff]
        %v267 = vld [vmem:[%s250 + $0x70] sm:$0xff]
        %v268 = vld [vmem:[%s250 + $0x78] sm:$0xff]
        %v269 = vld [vmem:[%s250 + $0x80] sm:$0xff]
        %v270 = vld [vmem:[%s250 + $0x88] sm:$0xff]
        %v271 = vld [vmem:[%s250 + $0x90] sm:$0xff]
        %v272 = vld [vmem:[%s250 + $0x98] sm:$0xff]
        %v273 = vld [vmem:[%s250 + $0xa0] sm:$0xff]
        %v274 = vld [vmem:[%s250 + $0xa8] sm:$0xff]
        %v275 = vld [vmem:[%s250 + $0xb0] sm:$0xff]
        %v276 = vld [vmem:[%s250 + $0xb8] sm:$0xff]
        %v277 = vld [vmem:[%s250 + $0xc0] sm:$0xff]
        %v278 = vld [vmem:[%s250 + $0xc8] sm:$0xff]
        %v279 = vld [vmem:[%s250 + $0xd0] sm:$0xff]
        %v280 = vld [vmem:[%s250 + $0xd8] sm:$0xff]
        %v281 = vld [vmem:[%s250 + $0xe0] sm:$0xff]
        %v282 = vld [vmem:[%s250 + $0xe8] sm:$0xff]
        %v283 = vld [vmem:[%s250 + $0xf0] sm:$0xff]
        %v284 = vld [vmem:[%s250 + $0xf8] sm:$0xff]
        %v285 = vld [vmem:[%s250 + $0x100] sm:$0xff]
        %v286 = vld [vmem:[%s250 + $0x108] sm:$0xff]
        %v287 = vld [vmem:[%s250 + $0x110] sm:$0xff]
        %v288 = vld [vmem:[%s250 + $0x118] sm:$0xff]
        %v289 = vld [vmem:[%s250 + $0x120] sm:$0xff]
        %v290 = vld [vmem:[%s250 + $0x128] sm:$0xff]
        %v291 = vld [vmem:[%s250 + $0x130] sm:$0xff]
        %v292 = vld [vmem:[%s250 + $0x138] sm:$0xff]
        %v293 = vld [vmem:[%s250 + $0x140] sm:$0xff]
        %v294 = vld [vmem:[%s250 + $0x148] sm:$0xff]
        %v295 = vld [vmem:[%s250 + $0x150] sm:$0xff]
        %v296 = vld [vmem:[%s250 + $0x158] sm:$0xff]
        %v297 = vld [vmem:[%s250 + $0x160] sm:$0xff]
        %v298 = vld [vmem:[%s250 + $0x168] sm:$0xff]
        %v299 = vld [vmem:[%s250 + $0x170] sm:$0xff]
        %v300 = vld [vmem:[%s250 + $0x178] sm:$0xff]
        %v301 = vld [vmem:[%s250 + $0x180] sm:$0xff]
        %v302 = vld [vmem:[%s250 + $0x188] sm:$0xff]
        %v303 = vld [vmem:[%s250 + $0x190] sm:$0xff]
        %v304 = vld [vmem:[%s250 + $0x198] sm:$0xff]
        %v305 = vld [vmem:[%s250 + $0x1a0] sm:$0xff]
        %v306 = vld [vmem:[%s250 + $0x1a8] sm:$0xff]
        %v307 = vld [vmem:[%s250 + $0x1b0] sm:$0xff]
        %v308 = vld [vmem:[%s250 + $0x1b8] sm:$0xff]
        %v309 = vld [vmem:[%s250 + $0x1c0] sm:$0xff]
        %v310 = vld [vmem:[%s250 + $0x1c8] sm:$0xff]
        %v311 = vld [vmem:[%s250 + $0x1d0] sm:$0xff]
        %v312 = vld [vmem:[%s250 + $0x1d8] sm:$0xff]
        %v313 = vld [vmem:[%s250 + $0x1e0] sm:$0xff]
        %v314 = vld [vmem:[%s250 + $0x1e8] sm:$0xff]
        %v315 = vld [vmem:[%s250 + $0x1f0] sm:$0xff]
        %v316 = vld [vmem:[%s250 + $0x1f8] sm:$0xff]
        %v317 = vld [vmem:[%s250 + $0x200] sm:$0xff]
        %v318 = vld [vmem:[%s250 + $0x208] sm:$0xff]
        %v319 = vld [vmem:[%s250 + $0x210] sm:$0xff]
        %v320 = vld [vmem:[%s250 + $0x218] sm:$0xff]
        %v321 = vld [vmem:[%s250 + $0x220] sm:$0xff]
        %v322 = vld [vmem:[%s250 + $0x228] sm:$0xff]
        %v323 = vld [vmem:[%s250 + $0x230] sm:$0xff]
        %v324 = vld [vmem:[%s250 + $0x238] sm:$0xff]
        %v325 = vld [vmem:[%s250 + $0x240] sm:$0xff]
        %v326 = vld [vmem:[%s250 + $0x248] sm:$0xff]
        %v327 = vld [vmem:[%s250 + $0x250] sm:$0xff]
        %v328 = vld [vmem:[%s250 + $0x258] sm:$0xff]
        %v329 = vld [vmem:[%s250 + $0x260] sm:$0xff]
        %v330 = vld [vmem:[%s250 + $0x268] sm:$0xff]
        %v331 = vld [vmem:[%s250 + $0x270] sm:$0xff]
        %v332 = vld [vmem:[%s250 + $0x278] sm:$0xff]
        %v333 = vld [vmem:[%s250 + $0x280] sm:$0xff]
        %v334 = vld [vmem:[%s250 + $0x288] sm:$0xff]
        %v335 = vld [vmem:[%s250 + $0x290] sm:$0xff]
        %v336 = vld [vmem:[%s250 + $0x298] sm:$0xff]
        %v337 = vld [vmem:[%s250 + $0x2a0] sm:$0xff]
        %v338 = vld [vmem:[%s250 + $0x2a8] sm:$0xff]
        %v339 = vld [vmem:[%s250 + $0x2b0] sm:$0xff]
        %v340 = vld [vmem:[%s250 + $0x2b8] sm:$0xff]
        %v341 = vld [vmem:[%s250 + $0x2c0] sm:$0xff]
        %v342 = vld [vmem:[%s250 + $0x2c8] sm:$0xff]
        %v343 = vld [vmem:[%s250 + $0x2d0] sm:$0xff]
        %v344 = vld [vmem:[%s250 + $0x2d8] sm:$0xff]
        %v345 = vld [vmem:[%s250 + $0x2e0] sm:$0xff]
        %v346 = vld [vmem:[%s250 + $0x2e8] sm:$0xff]
        %v347 = vld [vmem:[%s250 + $0x2f0] sm:$0xff]
        %v348 = vld [vmem:[%s250 + $0x2f8] sm:$0xff]
        %v349 = vld [vmem:[%s250 + $0x300] sm:$0xff]
        %v350 = vld [vmem:[%s250 + $0x308] sm:$0xff]
        %v351 = vld [vmem:[%s250 + $0x310] sm:$0xff]
        %v352 = vld [vmem:[%s250 + $0x318] sm:$0xff]
        %v353 = vld [vmem:[%s250 + $0x320] sm:$0xff]
        %v354 = vld [vmem:[%s250 + $0x328] sm:$0xff]
        %v355 = vld [vmem:[%s250 + $0x330] sm:$0xff]
        %v356 = vld [vmem:[%s250 + $0x338] sm:$0xff]
        %v357 = vld [vmem:[%s250 + $0x340] sm:$0xff]
        %v358 = vld [vmem:[%s250 + $0x348] sm:$0xff]
        %v359 = vld [vmem:[%s250 + $0x350] sm:$0xff]
        %v360 = vld [vmem:[%s250 + $0x358] sm:$0xff]
        %v361 = vld [vmem:[%s250 + $0x360] sm:$0xff]
        %v362 = vld [vmem:[%s250 + $0x368] sm:$0xff]
        %v363 = vld [vmem:[%s250 + $0x370] sm:$0xff]
        %v364 = vld [vmem:[%s250 + $0x378] sm:$0xff]
        %v365 = vld [vmem:[%s250 + $0x380] sm:$0xff]
        %v366 = vld [vmem:[%s250 + $0x388] sm:$0xff]
        %v367 = vld [vmem:[%s250 + $0x390] sm:$0xff]
        %v368 = vld [vmem:[%s250 + $0x398] sm:$0xff]
        %v369 = vld [vmem:[%s250 + $0x3a0] sm:$0xff]
        %v370 = vld [vmem:[%s250 + $0x3a8] sm:$0xff]
        %v371 = vld [vmem:[%s250 + $0x3b0] sm:$0xff]
        %v372 = vld [vmem:[%s250 + $0x3b8] sm:$0xff]
        %v373 = vld [vmem:[%s250 + $0x3c0] sm:$0xff]
        %v374 = vld [vmem:[%s250 + $0x3c8] sm:$0xff]
        %v375 = vld [vmem:[%s250 + $0x3d0] sm:$0xff]
        %v376 = vld [vmem:[%s250 + $0x3d8] sm:$0xff]
        %v377 = vld [vmem:[%s250 + $0x3e0] sm:$0xff]
        %v378 = vld [vmem:[%s250 + $0x3e8] sm:$0xff]
        %v379 = vld [vmem:[%s250 + $0x3f0] sm:$0xff]
        %v380 = vld [vmem:[%s250 + $0x3f8] sm:$0xff]
        %v381 = vld [vmem:[%s250 + $0x400] sm:$0xff]
        %v382 = vld [vmem:[%s250 + $0x408] sm:$0xff]
        %v383 = vld [vmem:[%s250 + $0x410] sm:$0xff]
        %v384 = vld [vmem:[%s250 + $0x418] sm:$0xff]
        %v385 = vld [vmem:[%s250 + $0x420] sm:$0xff]
        %v386 = vld [vmem:[%s250 + $0x428] sm:$0xff]
        %v387 = vld [vmem:[%s250 + $0x430] sm:$0xff]
        %v388 = vld [vmem:[%s250 + $0x438] sm:$0xff]
        %v389 = vld [vmem:[%s250 + $0x440] sm:$0xff]
        %v390 = vld [vmem:[%s250 + $0x448] sm:$0xff]
        %v391 = vld [vmem:[%s250 + $0x450] sm:$0xff]
        %v392 = vld [vmem:[%s250 + $0x458] sm:$0xff]
        %v393 = vld [vmem:[%s250 + $0x460] sm:$0xff]
        %v394 = vld [vmem:[%s250 + $0x468] sm:$0xff]
        %v395 = vld [vmem:[%s250 + $0x470] sm:$0xff]
        %v396 = vld [vmem:[%s250 + $0x478] sm:$0xff]
        %v397 = vld [vmem:[%s250 + $0x480] sm:$0xff]
        %v398 = vld [vmem:[%s250 + $0x488] sm:$0xff]
        %v399 = vld [vmem:[%s250 + $0x490] sm:$0xff]
        %v400 = vld [vmem:[%s250 + $0x498] sm:$0xff]
        %v401 = vld [vmem:[%s250 + $0x4a0] sm:$0xff]
        %v402 = vld [vmem:[%s250 + $0x4a8] sm:$0xff]
        %v403 = vld [vmem:[%s250 + $0x4b0] sm:$0xff]
        %v404 = vld [vmem:[%s250 + $0x4b8] sm:$0xff]
        %v405 = vld [vmem:[%s250 + $0x4c0] sm:$0xff]
        %v406 = vld [vmem:[%s250 + $0x4c8] sm:$0xff]
        %v407 = vld [vmem:[%s250 + $0x4d0] sm:$0xff]
        %v408 = vld [vmem:[%s250 + $0x4d8] sm:$0xff]
        %v409 = vld [vmem:[%s250 + $0x4e0] sm:$0xff]
        %v410 = vld [vmem:[%s250 + $0x4e8] sm:$0xff]
        %v411 = vld [vmem:[%s250 + $0x4f0] sm:$0xff]
        %v412 = vld [vmem:[%s250 + $0x4f8] sm:$0xff]
        %v413 = vld [vmem:[%s250 + $0x500] sm:$0xff]
        %v414 = vld [vmem:[%s250 + $0x508] sm:$0xff]
        %v415 = vld [vmem:[%s250 + $0x510] sm:$0xff]
        %v416 = vld [vmem:[%s250 + $0x518] sm:$0xff]
        %v417 = vld [vmem:[%s250 + $0x520] sm:$0xff]
        %v418 = vld [vmem:[%s250 + $0x528] sm:$0xff]
        %v419 = vld [vmem:[%s250 + $0x530] sm:$0xff]
        %v420 = vld [vmem:[%s250 + $0x538] sm:$0xff]
        %v421 = vld [vmem:[%s250 + $0x540] sm:$0xff]
        %v422 = vld [vmem:[%s250 + $0x548] sm:$0xff]
        %v423 = vld [vmem:[%s250 + $0x550] sm:$0xff]
        %v424 = vld [vmem:[%s250 + $0x558] sm:$0xff]
        %v425 = vld [vmem:[%s250 + $0x560] sm:$0xff]
        %v426 = vld [vmem:[%s250 + $0x568] sm:$0xff]
        %v427 = vld [vmem:[%s250 + $0x570] sm:$0xff]
        %v428 = vld [vmem:[%s250 + $0x578] sm:$0xff]
        %v429 = vld [vmem:[%s250 + $0x580] sm:$0xff]
        %v430 = vld [vmem:[%s250 + $0x588] sm:$0xff]
        %v431 = vld [vmem:[%s250 + $0x590] sm:$0xff]
        %v432 = vld [vmem:[%s250 + $0x598] sm:$0xff]
        %v433 = vld [vmem:[%s250 + $0x5a0] sm:$0xff]
        %v434 = vld [vmem:[%s250 + $0x5a8] sm:$0xff]
        %v435 = vld [vmem:[%s250 + $0x5b0] sm:$0xff]
        %v436 = vld [vmem:[%s250 + $0x5b8] sm:$0xff]
        %v437 = vld [vmem:[%s250 + $0x5c0] sm:$0xff]
        %v438 = vld [vmem:[%s250 + $0x5c8] sm:$0xff]
        %v439 = vld [vmem:[%s250 + $0x5d0] sm:$0xff]
        %v440 = vld [vmem:[%s250 + $0x5d8] sm:$0xff]
        %v441 = vld [vmem:[%s250 + $0x5e0] sm:$0xff]
        %v442 = vld [vmem:[%s250 + $0x5e8] sm:$0xff]
        %v443 = vld [vmem:[%s250 + $0x5f0] sm:$0xff]
        %v444 = vld [vmem:[%s250 + $0x5f8] sm:$0xff]
        %v445 = vld [vmem:[%s250 + $0x600] sm:$0xff]
        %v446 = vld [vmem:[%s250 + $0x608] sm:$0xff]
        %v447 = vld [vmem:[%s250 + $0x610] sm:$0xff]
        %v448 = vld [vmem:[%s250 + $0x618] sm:$0xff]
        %v449 = vld [vmem:[%s250 + $0x620] sm:$0xff]
        %v450 = vld [vmem:[%s250 + $0x628] sm:$0xff]
        %v451 = vld [vmem:[%s250 + $0x630] sm:$0xff]
        %v452 = vld [vmem:[%s250 + $0x638] sm:$0xff]
        %v453 = vld [vmem:[%s250 + $0x640] sm:$0xff]
        %v454 = vld [vmem:[%s250 + $0x648] sm:$0xff]
        %v455 = vld [vmem:[%s250 + $0x650] sm:$0xff]
        %v456 = vld [vmem:[%s250 + $0x658] sm:$0xff]
        %v457 = vld [vmem:[%s250 + $0x660] sm:$0xff]
        %v458 = vld [vmem:[%s250 + $0x668] sm:$0xff]
        %v459 = vld [vmem:[%s250 + $0x670] sm:$0xff]
        %v460 = vld [vmem:[%s250 + $0x678] sm:$0xff]
        %v461 = vld [vmem:[%s250 + $0x680] sm:$0xff]
        %v462 = vld [vmem:[%s250 + $0x688] sm:$0xff]
        %v463 = vld [vmem:[%s250 + $0x690] sm:$0xff]
        %v464 = vld [vmem:[%s250 + $0x698] sm:$0xff]
        %v465 = vld [vmem:[%s250 + $0x6a0] sm:$0xff]
        %v466 = vld [vmem:[%s250 + $0x6a8] sm:$0xff]
        %v467 = vld [vmem:[%s250 + $0x6b0] sm:$0xff]
        %v468 = vld [vmem:[%s250 + $0x6b8] sm:$0xff]
        %v469 = vld [vmem:[%s250 + $0x6c0] sm:$0xff]
        %v470 = vld [vmem:[%s250 + $0x6c8] sm:$0xff]
        %v471 = vld [vmem:[%s250 + $0x6d0] sm:$0xff]
        %v472 = vld [vmem:[%s250 + $0x6d8] sm:$0xff]
        %v473 = vld [vmem:[%s250 + $0x6e0] sm:$0xff]
        %v474 = vld [vmem:[%s250 + $0x6e8] sm:$0xff]
        %v475 = vld [vmem:[%s250 + $0x6f0] sm:$0xff]
        %v476 = vld [vmem:[%s250 + $0x6f8] sm:$0xff]
        %v477 = vld [vmem:[%s250 + $0x700] sm:$0xff]
        %v478 = vld [vmem:[%s250 + $0x708] sm:$0xff]
        %v479 = vld [vmem:[%s250 + $0x710] sm:$0xff]
        %v480 = vld [vmem:[%s250 + $0x718] sm:$0xff]
        %v481 = vld [vmem:[%s250 + $0x720] sm:$0xff]
        %v482 = vld [vmem:[%s250 + $0x728] sm:$0xff]
        %v483 = vld [vmem:[%s250 + $0x730] sm:$0xff]
        %v484 = vld [vmem:[%s250 + $0x738] sm:$0xff]
        %v485 = vld [vmem:[%s250 + $0x740] sm:$0xff]
        %v486 = vld [vmem:[%s250 + $0x748] sm:$0xff]
        %v487 = vld [vmem:[%s250 + $0x750] sm:$0xff]
        %v488 = vld [vmem:[%s250 + $0x758] sm:$0xff]
        %v489 = vld [vmem:[%s250 + $0x760] sm:$0xff]
        %v490 = vld [vmem:[%s250 + $0x768] sm:$0xff]
        %v491 = vld [vmem:[%s250 + $0x770] sm:$0xff]
        %v492 = vld [vmem:[%s250 + $0x778] sm:$0xff]
        %v493 = vld [vmem:[%s250 + $0x780] sm:$0xff]
        %v494 = vld [vmem:[%s250 + $0x788] sm:$0xff]
        %v495 = vld [vmem:[%s250 + $0x790] sm:$0xff]
        %v496 = vld [vmem:[%s250 + $0x798] sm:$0xff]
        %v497 = vld [vmem:[%s250 + $0x7a0] sm:$0xff]
        %v498 = vld [vmem:[%s250 + $0x7a8] sm:$0xff]
        %v499 = vld [vmem:[%s250 + $0x7b0] sm:$0xff]
        %v500 = vld [vmem:[%s250 + $0x7b8] sm:$0xff]
        %v501 = vld [vmem:[%s250 + $0x7c0] sm:$0xff]
        %v502 = vld [vmem:[%s250 + $0x7c8] sm:$0xff]
        %v503 = vld [vmem:[%s250 + $0x7d0] sm:$0xff]
        %v504 = vld [vmem:[%s250 + $0x7d8] sm:$0xff]
        %v505 = vld [vmem:[%s250 + $0x7e0] sm:$0xff]
        %v506 = vld [vmem:[%s250 + $0x7e8] sm:$0xff]
        %v507 = vld [vmem:[%s250 + $0x7f0] sm:$0xff]
        %v508 = vld [vmem:[%s250 + $0x7f8] sm:$0xff]
        %v509 = vld [vmem:[%s1] sm:$0xff]
        %v510 = vld [vmem:[%s1 + $0x8] sm:$0xff]
        %v511 = vld [vmem:[%s1 + $0x10] sm:$0xff]
        %v512 = vld [vmem:[%s1 + $0x18] sm:$0xff]
        %v513 = vld [vmem:[%s1 + $0x20] sm:$0xff]
        %v514 = vld [vmem:[%s1 + $0x28] sm:$0xff]
        %v515 = vld [vmem:[%s1 + $0x30] sm:$0xff]
        %v516 = vld [vmem:[%s1 + $0x38] sm:$0xff]
        %v517 = vld [vmem:[%s1 + $0x40] sm:$0xff]
        %v518 = vld [vmem:[%s1 + $0x48] sm:$0xff]
        %v519 = vld [vmem:[%s1 + $0x50] sm:$0xff]
        %v520 = vld [vmem:[%s1 + $0x58] sm:$0xff]
        %v521 = vld [vmem:[%s2] sm:$0xff]
        %v522 = vld [vmem:[%s2 + $0x8] sm:$0xff]
        %v523 = vld [vmem:[%s2 + $0x10] sm:$0xff]
        %v524 = vld [vmem:[%s2 + $0x18] sm:$0xff]
        %v525 = vld [vmem:[%s2 + $0x20] sm:$0xff]
        %v526 = vld [vmem:[%s2 + $0x28] sm:$0xff]
        %v527 = vld [vmem:[%s2 + $0x30] sm:$0xff]
        %v528 = vld [vmem:[%s2 + $0x38] sm:$0xff]
        %v529 = vld [vmem:[%s2 + $0x40] sm:$0xff]
        %v530 = vld [vmem:[%s2 + $0x48] sm:$0xff]
        %v531 = vld [vmem:[%s2 + $0x50] sm:$0xff]
        %v532 = vld [vmem:[%s2 + $0x58] sm:$0xff]
        %534 = vset.pattern.permute.xlu0 0
        %535 = vperm.xlu0 %534, %v521
        %v536 = vpop.permute.xlu0 %535
        %539 = vset.pattern.permute.xlu0 0
        %540 = vperm.xlu0 %539, %v522
        %v541 = vpop.permute.xlu0 %540
        %544 = vset.pattern.permute.xlu0 0
        %545 = vperm.xlu0 %544, %v523
        %v546 = vpop.permute.xlu0 %545
        %549 = vset.pattern.permute.xlu0 0
        %550 = vperm.xlu0 %549, %v524
        %v551 = vpop.permute.xlu0 %550
        %554 = vset.pattern.permute.xlu0 0
        %555 = vperm.xlu0 %554, %v525
        %v556 = vpop.permute.xlu0 %555
        %559 = vset.pattern.permute.xlu0 0
        %560 = vperm.xlu0 %559, %v526
        %v561 = vpop.permute.xlu0 %560
        %564 = vset.pattern.permute.xlu0 0
        %565 = vperm.xlu0 %564, %v527
        %v566 = vpop.permute.xlu0 %565
        %569 = vset.pattern.permute.xlu0 0
        %570 = vperm.xlu0 %569, %v528
        %v571 = vpop.permute.xlu0 %570
        %574 = vset.pattern.permute.xlu0 0
        %575 = vperm.xlu0 %574, %v529
        %v576 = vpop.permute.xlu0 %575
        %579 = vset.pattern.permute.xlu0 0
        %580 = vperm.xlu0 %579, %v530
        %v581 = vpop.permute.xlu0 %580
        %584 = vset.pattern.permute.xlu0 0
        %585 = vperm.xlu0 %584, %v531
        %v586 = vpop.permute.xlu0 %585
        %589 = vset.pattern.permute.xlu0 0
        %590 = vperm.xlu0 %589, %v532
        %v591 = vpop.permute.xlu0 %590
        %vm593 = vcmask 162816
        %v595 = vsel %vm593, %v509, 0
        %v598 = vsel %vm593, %v510, 0
        %v601 = vsel %vm593, %v511, 0
        %v604 = vsel %vm593, %v512, 0
        %v607 = vsel %vm593, %v513, 0
        %v610 = vsel %vm593, %v514, 0
        %v613 = vsel %vm593, %v515, 0
        %v616 = vsel %vm593, %v516, 0
        %v619 = vsel %vm593, %v517, 0
        %v622 = vsel %vm593, %v518, 0
        %v625 = vsel %vm593, %v519, 0
        %v628 = vsel %vm593, %v520, 0
        %v631 = vsel %vm593, %v253, 0
        %v634 = vsel %vm593, %v254, 0
        %v637 = vsel %vm593, %v255, 0
        %v640 = vsel %vm593, %v256, 0
        %v643 = vsel %vm593, %v257, 0
        %v646 = vsel %vm593, %v258, 0
        %v649 = vsel %vm593, %v259, 0
        %v652 = vsel %vm593, %v260, 0
        %v655 = vsel %vm593, %v261, 0
        %v658 = vsel %vm593, %v262, 0
        %v661 = vsel %vm593, %v263, 0
        %v664 = vsel %vm593, %v264, 0
        %v667 = vsel %vm593, %v265, 0
        %v670 = vsel %vm593, %v266, 0
        %v673 = vsel %vm593, %v267, 0
        %v676 = vsel %vm593, %v268, 0
        %v679 = vsel %vm593, %v269, 0
        %v682 = vsel %vm593, %v270, 0
        %v685 = vsel %vm593, %v271, 0
        %v688 = vsel %vm593, %v272, 0
        %v691 = vsel %vm593, %v273, 0
        %v694 = vsel %vm593, %v274, 0
        %v697 = vsel %vm593, %v275, 0
        %v700 = vsel %vm593, %v276, 0
        %v703 = vsel %vm593, %v277, 0
        %v706 = vsel %vm593, %v278, 0
        %v709 = vsel %vm593, %v279, 0
        %v712 = vsel %vm593, %v280, 0
        %v715 = vsel %vm593, %v281, 0
        %v718 = vsel %vm593, %v282, 0
        %v721 = vsel %vm593, %v283, 0
        %v724 = vsel %vm593, %v284, 0
        %v727 = vsel %vm593, %v285, 0
        %v730 = vsel %vm593, %v286, 0
        %v733 = vsel %vm593, %v287, 0
        %v736 = vsel %vm593, %v288, 0
        %v739 = vsel %vm593, %v289, 0
        %v742 = vsel %vm593, %v290, 0
        %v745 = vsel %vm593, %v291, 0
        %v748 = vsel %vm593, %v292, 0
        %v751 = vsel %vm593, %v293, 0
        %v754 = vsel %vm593, %v294, 0
        %v757 = vsel %vm593, %v295, 0
        %v760 = vsel %vm593, %v296, 0
        %v763 = vsel %vm593, %v297, 0
        %v766 = vsel %vm593, %v298, 0
        %v769 = vsel %vm593, %v299, 0
        %v772 = vsel %vm593, %v300, 0
        %v775 = vsel %vm593, %v301, 0
        %v778 = vsel %vm593, %v302, 0
        %v781 = vsel %vm593, %v303, 0
        %v784 = vsel %vm593, %v304, 0
        %v787 = vsel %vm593, %v305, 0
        %v790 = vsel %vm593, %v306, 0
        %v793 = vsel %vm593, %v307, 0
        %v796 = vsel %vm593, %v308, 0
        %v799 = vsel %vm593, %v309, 0
        %v802 = vsel %vm593, %v310, 0
        %v805 = vsel %vm593, %v311, 0
        %v808 = vsel %vm593, %v312, 0
        %v811 = vsel %vm593, %v313, 0
        %v814 = vsel %vm593, %v314, 0
        %v817 = vsel %vm593, %v315, 0
        %v820 = vsel %vm593, %v316, 0
        %v823 = vsel %vm593, %v317, 0
        %v826 = vsel %vm593, %v318, 0
        %v829 = vsel %vm593, %v319, 0
        %v832 = vsel %vm593, %v320, 0
        %v835 = vsel %vm593, %v321, 0
        %v838 = vsel %vm593, %v322, 0
        %v841 = vsel %vm593, %v323, 0
        %v844 = vsel %vm593, %v324, 0
        %v847 = vsel %vm593, %v325, 0
        %v850 = vsel %vm593, %v326, 0
        %v853 = vsel %vm593, %v327, 0
        %v856 = vsel %vm593, %v328, 0
        %v859 = vsel %vm593, %v329, 0
        %v862 = vsel %vm593, %v330, 0
        %v865 = vsel %vm593, %v331, 0
        %v868 = vsel %vm593, %v332, 0
        %v871 = vsel %vm593, %v333, 0
        %v874 = vsel %vm593, %v334, 0
        %v877 = vsel %vm593, %v335, 0
        %v880 = vsel %vm593, %v336, 0
        %v883 = vsel %vm593, %v337, 0
        %v886 = vsel %vm593, %v338, 0
        %v889 = vsel %vm593, %v339, 0
        %v892 = vsel %vm593, %v340, 0
        %v895 = vsel %vm593, %v341, 0
        %v898 = vsel %vm593, %v342, 0
        %v901 = vsel %vm593, %v343, 0
        %v904 = vsel %vm593, %v344, 0
        %v907 = vsel %vm593, %v345, 0
        %v910 = vsel %vm593, %v346, 0
        %v913 = vsel %vm593, %v347, 0
        %v916 = vsel %vm593, %v348, 0
        %v919 = vsel %vm593, %v349, 0
        %v922 = vsel %vm593, %v350, 0
        %v925 = vsel %vm593, %v351, 0
        %v928 = vsel %vm593, %v352, 0
        %v931 = vsel %vm593, %v353, 0
        %v934 = vsel %vm593, %v354, 0
        %v937 = vsel %vm593, %v355, 0
        %v940 = vsel %vm593, %v356, 0
        %v943 = vsel %vm593, %v357, 0
        %v946 = vsel %vm593, %v358, 0
        %v949 = vsel %vm593, %v359, 0
        %v952 = vsel %vm593, %v360, 0
        %v955 = vsel %vm593, %v361, 0
        %v958 = vsel %vm593, %v362, 0
        %v961 = vsel %vm593, %v363, 0
        %v964 = vsel %vm593, %v364, 0
        %v967 = vsel %vm593, %v365, 0
        %v970 = vsel %vm593, %v366, 0
        %v973 = vsel %vm593, %v367, 0
        %v976 = vsel %vm593, %v368, 0
        %v979 = vsel %vm593, %v369, 0
        %v982 = vsel %vm593, %v370, 0
        %v985 = vsel %vm593, %v371, 0
        %v988 = vsel %vm593, %v372, 0
        %v991 = vsel %vm593, %v373, 0
        %v994 = vsel %vm593, %v374, 0
        %v997 = vsel %vm593, %v375, 0
        %v1000 = vsel %vm593, %v376, 0
        %v1003 = vsel %vm593, %v377, 0
        %v1006 = vsel %vm593, %v378, 0
        %v1009 = vsel %vm593, %v379, 0
        %v1012 = vsel %vm593, %v380, 0
        %v1015 = vsel %vm593, %v381, 0
        %v1018 = vsel %vm593, %v382, 0
        %v1021 = vsel %vm593, %v383, 0
        %v1024 = vsel %vm593, %v384, 0
        %v1027 = vsel %vm593, %v385, 0
        %v1030 = vsel %vm593, %v386, 0
        %v1033 = vsel %vm593, %v387, 0
        %v1036 = vsel %vm593, %v388, 0
        %v1039 = vsel %vm593, %v389, 0
        %v1042 = vsel %vm593, %v390, 0
        %v1045 = vsel %vm593, %v391, 0
        %v1048 = vsel %vm593, %v392, 0
        %v1051 = vsel %vm593, %v393, 0
        %v1054 = vsel %vm593, %v394, 0
        %v1057 = vsel %vm593, %v395, 0
        %v1060 = vsel %vm593, %v396, 0
        %v1063 = vsel %vm593, %v397, 0
        %v1066 = vsel %vm593, %v398, 0
        %v1069 = vsel %vm593, %v399, 0
        %v1072 = vsel %vm593, %v400, 0
        %v1075 = vsel %vm593, %v401, 0
        %v1078 = vsel %vm593, %v402, 0
        %v1081 = vsel %vm593, %v403, 0
        %v1084 = vsel %vm593, %v404, 0
        %v1087 = vsel %vm593, %v405, 0
        %v1090 = vsel %vm593, %v406, 0
        %v1093 = vsel %vm593, %v407, 0
        %v1096 = vsel %vm593, %v408, 0
        %v1099 = vsel %vm593, %v409, 0
        %v1102 = vsel %vm593, %v410, 0
        %v1105 = vsel %vm593, %v411, 0
        %v1108 = vsel %vm593, %v412, 0
        %v1111 = vsel %vm593, %v413, 0
        %v1114 = vsel %vm593, %v414, 0
        %v1117 = vsel %vm593, %v415, 0
        %v1120 = vsel %vm593, %v416, 0
        %v1123 = vsel %vm593, %v417, 0
        %v1126 = vsel %vm593, %v418, 0
        %v1129 = vsel %vm593, %v419, 0
        %v1132 = vsel %vm593, %v420, 0
        %v1135 = vsel %vm593, %v421, 0
        %v1138 = vsel %vm593, %v422, 0
        %v1141 = vsel %vm593, %v423, 0
        %v1144 = vsel %vm593, %v424, 0
        %v1147 = vsel %vm593, %v425, 0
        %v1150 = vsel %vm593, %v426, 0
        %v1153 = vsel %vm593, %v427, 0
        %v1156 = vsel %vm593, %v428, 0
        %v1159 = vsel %vm593, %v429, 0
        %v1162 = vsel %vm593, %v430, 0
        %v1165 = vsel %vm593, %v431, 0
        %v1168 = vsel %vm593, %v432, 0
        %v1171 = vsel %vm593, %v433, 0
        %v1174 = vsel %vm593, %v434, 0
        %v1177 = vsel %vm593, %v435, 0
        %v1180 = vsel %vm593, %v436, 0
        %v1183 = vsel %vm593, %v437, 0
        %v1186 = vsel %vm593, %v438, 0
        %v1189 = vsel %vm593, %v439, 0
        %v1192 = vsel %vm593, %v440, 0
        %v1195 = vsel %vm593, %v441, 0
        %v1198 = vsel %vm593, %v442, 0
        %v1201 = vsel %vm593, %v443, 0
        %v1204 = vsel %vm593, %v444, 0
        %v1207 = vsel %vm593, %v445, 0
        %v1210 = vsel %vm593, %v446, 0
        %v1213 = vsel %vm593, %v447, 0
        %v1216 = vsel %vm593, %v448, 0
        %v1219 = vsel %vm593, %v449, 0
        %v1222 = vsel %vm593, %v450, 0
        %v1225 = vsel %vm593, %v451, 0
        %v1228 = vsel %vm593, %v452, 0
        %v1231 = vsel %vm593, %v453, 0
        %v1234 = vsel %vm593, %v454, 0
        %v1237 = vsel %vm593, %v455, 0
        %v1240 = vsel %vm593, %v456, 0
        %v1243 = vsel %vm593, %v457, 0
        %v1246 = vsel %vm593, %v458, 0
        %v1249 = vsel %vm593, %v459, 0
        %v1252 = vsel %vm593, %v460, 0
        %v1255 = vsel %vm593, %v461, 0
        %v1258 = vsel %vm593, %v462, 0
        %v1261 = vsel %vm593, %v463, 0
        %v1264 = vsel %vm593, %v464, 0
        %v1267 = vsel %vm593, %v465, 0
        %v1270 = vsel %vm593, %v466, 0
        %v1273 = vsel %vm593, %v467, 0
        %v1276 = vsel %vm593, %v468, 0
        %v1279 = vsel %vm593, %v469, 0
        %v1282 = vsel %vm593, %v470, 0
        %v1285 = vsel %vm593, %v471, 0
        %v1288 = vsel %vm593, %v472, 0
        %v1291 = vsel %vm593, %v473, 0
        %v1294 = vsel %vm593, %v474, 0
        %v1297 = vsel %vm593, %v475, 0
        %v1300 = vsel %vm593, %v476, 0
        %v1303 = vsel %vm593, %v477, 0
        %v1306 = vsel %vm593, %v478, 0
        %v1309 = vsel %vm593, %v479, 0
        %v1312 = vsel %vm593, %v480, 0
        %v1315 = vsel %vm593, %v481, 0
        %v1318 = vsel %vm593, %v482, 0
        %v1321 = vsel %vm593, %v483, 0
        %v1324 = vsel %vm593, %v484, 0
        %v1327 = vsel %vm593, %v485, 0
        %v1330 = vsel %vm593, %v486, 0
        %v1333 = vsel %vm593, %v487, 0
        %v1336 = vsel %vm593, %v488, 0
        %v1339 = vsel %vm593, %v489, 0
        %v1342 = vsel %vm593, %v490, 0
        %v1345 = vsel %vm593, %v491, 0
        %v1348 = vsel %vm593, %v492, 0
        %v1351 = vsel %vm593, %v493, 0
        %v1354 = vsel %vm593, %v494, 0
        %v1357 = vsel %vm593, %v495, 0
        %v1360 = vsel %vm593, %v496, 0
        %v1363 = vsel %vm593, %v497, 0
        %v1366 = vsel %vm593, %v498, 0
        %v1369 = vsel %vm593, %v499, 0
        %v1372 = vsel %vm593, %v500, 0
        %v1375 = vsel %vm593, %v501, 0
        %v1378 = vsel %vm593, %v502, 0
        %v1381 = vsel %vm593, %v503, 0
        %v1384 = vsel %vm593, %v504, 0
        %v1387 = vsel %vm593, %v505, 0
        %v1390 = vsel %vm593, %v506, 0
        %v1393 = vsel %vm593, %v507, 0
        %v1396 = vsel %vm593, %v508, 0
        %1398 = vmatprep.subr.mxu0 0.0
        %1399 = vmatpush1.xpose.msra.mxu0 %v631
        %1400 = vmatprep.subr.mxu0 0.0
        %1401 = vmatpush1.xpose.msra.mxu0 %v634
        %1402 = vmatprep.subr.mxu0 0.0
        %1403 = vmatpush1.xpose.msra.mxu0 %v637
        %1404 = vmatprep.subr.mxu0 0.0
        %1405 = vmatpush1.xpose.msra.mxu0 %v640
        %1406 = vmatprep.subr.mxu0 0.0
        %1407 = vmatpush1.xpose.msra.mxu0 %v643
        %1408 = vmatprep.subr.mxu0 0.0
        %1409 = vmatpush1.xpose.msra.mxu0 %v646
        %1410 = vmatprep.subr.mxu0 0.0
        %1411 = vmatpush1.xpose.msra.mxu0 %v649
        %1412 = vmatprep.subr.mxu0 0.0
        %1413 = vmatpush1.xpose.msra.mxu0 %v652
        %1414 = vmatprep.subr.mxu0 0.0
        %1415 = vmatpush1.xpose.msra.mxu0 %v655
        %1416 = vmatprep.subr.mxu0 0.0
        %1417 = vmatpush1.xpose.msra.mxu0 %v658
        %1418 = vmatprep.subr.mxu0 0.0
        %1419 = vmatpush1.xpose.msra.mxu0 %v661
        %1420 = vmatprep.subr.mxu0 0.0
        %1421 = vmatpush1.xpose.msra.mxu0 %v664
        %1422 = vmatprep.subr.mxu0 0.0
        %1423 = vmatpush1.xpose.msra.mxu0 %v667
        %1424 = vmatprep.subr.mxu0 0.0
        %1425 = vmatpush1.xpose.msra.mxu0 %v670
        %1426 = vmatprep.subr.mxu0 0.0
        %1427 = vmatpush1.xpose.msra.mxu0 %v673
        %1428 = vmatprep.subr.mxu0 0.0
        %1429 = vmatpush1.xpose.msra.mxu0 %v676
        %1430 = vmatprep.subr.mxu0 0.0
        %1431 = vmatpush1.xpose.msra.mxu0 %v679
        %1432 = vmatprep.subr.mxu0 0.0
        %1433 = vmatpush1.xpose.msra.mxu0 %v682
        %1434 = vmatprep.subr.mxu0 0.0
        %1435 = vmatpush1.xpose.msra.mxu0 %v685
        %1436 = vmatprep.subr.mxu0 0.0
        %1437 = vmatpush1.xpose.msra.mxu0 %v688
        %1438 = vmatprep.subr.mxu0 0.0
        %1439 = vmatpush1.xpose.msra.mxu0 %v691
        %1440 = vmatprep.subr.mxu0 0.0
        %1441 = vmatpush1.xpose.msra.mxu0 %v694
        %1442 = vmatprep.subr.mxu0 0.0
        %1443 = vmatpush1.xpose.msra.mxu0 %v697
        %1444 = vmatprep.subr.mxu0 0.0
        %1445 = vmatpush1.xpose.msra.mxu0 %v700
        %1446 = vmatprep.subr.mxu0 0.0
        %1447 = vmatpush1.xpose.msra.mxu0 %v703
        %1448 = vmatprep.subr.mxu0 0.0
        %1449 = vmatpush1.xpose.msra.mxu0 %v706
        %1450 = vmatprep.subr.mxu0 0.0
        %1451 = vmatpush1.xpose.msra.mxu0 %v709
        %1452 = vmatprep.subr.mxu0 0.0
        %1453 = vmatpush1.xpose.msra.mxu0 %v712
        %1454 = vmatprep.subr.mxu0 0.0
        %1455 = vmatpush1.xpose.msra.mxu0 %v715
        %1456 = vmatprep.subr.mxu0 0.0
        %1457 = vmatpush1.xpose.msra.mxu0 %v718
        %1458 = vmatprep.subr.mxu0 0.0
        %1459 = vmatpush1.xpose.msra.mxu0 %v721
        %1460 = vmatprep.subr.mxu0 0.0
        %1461 = vmatpush1.xpose.msra.mxu0 %v724
        %1462 = vmatprep.mubr.f32.mxu0 0.0
        %1463 = vmatmul.mubr.f32.gmra.mrb[0].mxu0 %v595
        %v1464 = vpop.f32.mrb[0].mxu0
        %v1465 = vadd.f32 %v536, %v1464
        %v1466 = vpop.f32.mrb[0].mxu0
        %v1467 = vadd.f32 %v536, %v1466
        %1468 = vmatprep.mubr.f32.mxu0 0.0
        %1469 = vmatmul.mubr.f32.gmra.mrb[0].mxu0 %v598
        %v1470 = vpop.f32.mrb[0].mxu0
        %v1471 = vadd.f32 %v541, %v1470
        %v1472 = vpop.f32.mrb[0].mxu0
        %v1473 = vadd.f32 %v541, %v1472
        %1474 = vmatprep.mubr.f32.mxu0 0.0
        %1475 = vmatmul.mubr.f32.gmra.mrb[0].mxu0 %v601
        %v1476 = vpop.f32.mrb[0].mxu0
        %v1477 = vadd.f32 %v546, %v1476
        %v1478 = vpop.f32.mrb[0].mxu0
        %v1479 = vadd.f32 %v546, %v1478
        %1480 = vmatprep.mubr.f32.mxu0 0.0
        %1481 = vmatmul.mubr.f32.gmra.mrb[0].mxu0 %v604
        %v1482 = vpop.f32.mrb[0].mxu0
        %v1483 = vadd.f32 %v551, %v1482
        %v1484 = vpop.f32.mrb[0].mxu0
        %v1485 = vadd.f32 %v551, %v1484
        %1486 = vmatprep.mubr.f32.mxu0 0.0
        %1487 = vmatmul.mubr.f32.gmra.mrb[0].mxu0 %v607
        %v1488 = vpop.f32.mrb[0].mxu0
        %v1489 = vadd.f32 %v556, %v1488
        %v1490 = vpop.f32.mrb[0].mxu0
        %v1491 = vadd.f32 %v556, %v1490
        %1492 = vmatprep.mubr.f32.mxu0 0.0
        %1493 = vmatmul.mubr.f32.gmra.mrb[0].mxu0 %v610
        %v1494 = vpop.f32.mrb[0].mxu0
        %v1495 = vadd.f32 %v561, %v1494
        %v1496 = vpop.f32.mrb[0].mxu0
        %v1497 = vadd.f32 %v561, %v1496
        %1498 = vmatprep.mubr.f32.mxu0 0.0
        %1499 = vmatmul.mubr.f32.gmra.mrb[0].mxu0 %v613
        %v1500 = vpop.f32.mrb[0].mxu0
        %v1501 = vadd.f32 %v566, %v1500
        %v1502 = vpop.f32.mrb[0].mxu0
        %v1503 = vadd.f32 %v566, %v1502
        %1504 = vmatprep.mubr.f32.mxu0 0.0
        %1505 = vmatmul.mubr.f32.gmra.mrb[0].mxu0 %v616
        %v1506 = vpop.f32.mrb[0].mxu0
        %v1507 = vadd.f32 %v571, %v1506
        %v1508 = vpop.f32.mrb[0].mxu0
        %v1509 = vadd.f32 %v571, %v1508
        %1510 = vmatprep.mubr.f32.mxu0 0.0
        %1511 = vmatmul.mubr.f32.gmra.mrb[0].mxu0 %v619
        %v1512 = vpop.f32.mrb[0].mxu0
        %v1513 = vadd.f32 %v576, %v1512
        %v1514 = vpop.f32.mrb[0].mxu0
        %v1515 = vadd.f32 %v576, %v1514
        %1516 = vmatprep.mubr.f32.mxu0 0.0
        %1517 = vmatmul.mubr.f32.gmra.mrb[0].mxu0 %v622
        %v1518 = vpop.f32.mrb[0].mxu0
        %v1519 = vadd.f32 %v581, %v1518
        %v1520 = vpop.f32.mrb[0].mxu0
        %v1521 = vadd.f32 %v581, %v1520
        %1522 = vmatprep.mubr.f32.mxu0 0.0
        %1523 = vmatmul.mubr.f32.gmra.mrb[0].mxu0 %v625
        %v1524 = vpop.f32.mrb[0].mxu0
        %v1525 = vadd.f32 %v586, %v1524
        %v1526 = vpop.f32.mrb[0].mxu0
        %v1527 = vadd.f32 %v586, %v1526
        %1528 = vmatprep.mubr.f32.mxu0 0.0
        %1529 = vmatmul.mubr.f32.gmra.mrb[0].mxu0 %v628
        %v1530 = vpop.f32.mrb[0].mxu0
        %v1531 = vadd.f32 %v591, %v1530
        %v1532 = vpop.f32.mrb[0].mxu0
        %v1533 = vadd.f32 %v591, %v1532
        %1534 = vdwg.mxu0
        %1535 = vmatprep.subr.mxu0 0.0
        %1536 = vmatpush1.xpose.msra.mxu0 %v727
        %1537 = vmatprep.subr.mxu0 0.0
        %1538 = vmatpush1.xpose.msra.mxu0 %v730
        %1539 = vmatprep.subr.mxu0 0.0
        %1540 = vmatpush1.xpose.msra.mxu0 %v733
        %1541 = vmatprep.subr.mxu0 0.0
        %1542 = vmatpush1.xpose.msra.mxu0 %v736
        %1543 = vmatprep.subr.mxu0 0.0
        %1544 = vmatpush1.xpose.msra.mxu0 %v739
        %1545 = vmatprep.subr.mxu0 0.0
        %1546 = vmatpush1.xpose.msra.mxu0 %v742
        %1547 = vmatprep.subr.mxu0 0.0
        %1548 = vmatpush1.xpose.msra.mxu0 %v745
        %1549 = vmatprep.subr.mxu0 0.0
        %1550 = vmatpush1.xpose.msra.mxu0 %v748
        %1551 = vmatprep.subr.mxu0 0.0
        %1552 = vmatpush1.xpose.msra.mxu0 %v751
        %1553 = vmatprep.subr.mxu0 0.0
        %1554 = vmatpush1.xpose.msra.mxu0 %v754
        %1555 = vmatprep.subr.mxu0 0.0
        %1556 = vmatpush1.xpose.msra.mxu0 %v757
        %1557 = vmatprep.subr.mxu0 0.0
        %1558 = vmatpush1.xpose.msra.mxu0 %v760
        %1559 = vmatprep.subr.mxu0 0.0
        %1560 = vmatpush1.xpose.msra.mxu0 %v763
        %1561 = vmatprep.subr.mxu0 0.0
        %1562 = vmatpush1.xpose.msra.mxu0 %v766
        %1563 = vmatprep.subr.mxu0 0.0
        %1564 = vmatpush1.xpose.msra.mxu0 %v769
        %1565 = vmatprep.subr.mxu0 0.0
        %1566 = vmatpush1.xpose.msra.mxu0 %v772
        %1567 = vmatprep.subr.mxu0 0.0
        %1568 = vmatpush1.xpose.msra.mxu0 %v775
        %1569 = vmatprep.subr.mxu0 0.0
        %1570 = vmatpush1.xpose.msra.mxu0 %v778
        %1571 = vmatprep.subr.mxu0 0.0
        %1572 = vmatpush1.xpose.msra.mxu0 %v781
        %1573 = vmatprep.subr.mxu0 0.0
        %1574 = vmatpush1.xpose.msra.mxu0 %v784
        %1575 = vmatprep.subr.mxu0 0.0
        %1576 = vmatpush1.xpose.msra.mxu0 %v787
        %1577 = vmatprep.subr.mxu0 0.0
        %1578 = vmatpush1.xpose.msra.mxu0 %v790
        %1579 = vmatprep.subr.mxu0 0.0
        %1580 = vmatpush1.xpose.msra.mxu0 %v793
        %1581 = vmatprep.subr.mxu0 0.0
        %1582 = vmatpush1.xpose.msra.mxu0 %v796
        %1583 = vmatprep.subr.mxu0 0.0
        %1584 = vmatpush1.xpose.msra.mxu0 %v799
        %1585 = vmatprep.subr.mxu0 0.0
        %1586 = vmatpush1.xpose.msra.mxu0 %v802
        %1587 = vmatprep.subr.mxu0 0.0
        %1588 = vmatpush1.xpose.msra.mxu0 %v805
        %1589 = vmatprep.subr.mxu0 0.0
        %1590 = vmatpush1.xpose.msra.mxu0 %v808
        %1591 = vmatprep.subr.mxu0 0.0
        %1592 = vmatpush1.xpose.msra.mxu0 %v811
        %1593 = vmatprep.subr.mxu0 0.0
        %1594 = vmatpush1.xpose.msra.mxu0 %v814
        %1595 = vmatprep.subr.mxu0 0.0
        %1596 = vmatpush1.xpose.msra.mxu0 %v817
        %1597 = vmatprep.subr.mxu0 0.0
        %1598 = vmatpush1.xpose.msra.mxu0 %v820
        %1599 = vmatprep.mubr.f32.mxu0 0.0
        %1600 = vmatmul.mubr.f32.gmra.mrb[0].mxu0 %v595
        %v1601 = vpop.f32.mrb[0].mxu0
        %v1602 = vadd.f32 %v536, %v1601
        %v1603 = vpop.f32.mrb[0].mxu0
        %v1604 = vadd.f32 %v536, %v1603
        %1605 = vmatprep.mubr.f32.mxu0 0.0
        %1606 = vmatmul.mubr.f32.gmra.mrb[0].mxu0 %v598
        %v1607 = vpop.f32.mrb[0].mxu0
        %v1608 = vadd.f32 %v541, %v1607
        %v1609 = vpop.f32.mrb[0].mxu0
        %v1610 = vadd.f32 %v541, %v1609
        %1611 = vmatprep.mubr.f32.mxu0 0.0
        %1612 = vmatmul.mubr.f32.gmra.mrb[0].mxu0 %v601
        %v1613 = vpop.f32.mrb[0].mxu0
        %v1614 = vadd.f32 %v546, %v1613
        %v1615 = vpop.f32.mrb[0].mxu0
        %v1616 = vadd.f32 %v546, %v1615
        %1617 = vmatprep.mubr.f32.mxu0 0.0
        %1618 = vmatmul.mubr.f32.gmra.mrb[0].mxu0 %v604
        %v1619 = vpop.f32.mrb[0].mxu0
        %v1620 = vadd.f32 %v551, %v1619
        %v1621 = vpop.f32.mrb[0].mxu0
        %v1622 = vadd.f32 %v551, %v1621
        %1623 = vmatprep.mubr.f32.mxu0 0.0
        %1624 = vmatmul.mubr.f32.gmra.mrb[0].mxu0 %v607
        %v1625 = vpop.f32.mrb[0].mxu0
        %v1626 = vadd.f32 %v556, %v1625
        %v1627 = vpop.f32.mrb[0].mxu0
        %v1628 = vadd.f32 %v556, %v1627
        %1629 = vmatprep.mubr.f32.mxu0 0.0
        %1630 = vmatmul.mubr.f32.gmra.mrb[0].mxu0 %v610
        %v1631 = vpop.f32.mrb[0].mxu0
        %v1632 = vadd.f32 %v561, %v1631
        %v1633 = vpop.f32.mrb[0].mxu0
        %v1634 = vadd.f32 %v561, %v1633
        %1635 = vmatprep.mubr.f32.mxu0 0.0
        %1636 = vmatmul.mubr.f32.gmra.mrb[0].mxu0 %v613
        %v1637 = vpop.f32.mrb[0].mxu0
        %v1638 = vadd.f32 %v566, %v1637
        %v1639 = vpop.f32.mrb[0].mxu0
        %v1640 = vadd.f32 %v566, %v1639
        %1641 = vmatprep.mubr.f32.mxu0 0.0
        %1642 = vmatmul.mubr.f32.gmra.mrb[0].mxu0 %v616
        %v1643 = vpop.f32.mrb[0].mxu0
        %v1644 = vadd.f32 %v571, %v1643
        %v1645 = vpop.f32.mrb[0].mxu0
        %v1646 = vadd.f32 %v571, %v1645
        %1647 = vmatprep.mubr.f32.mxu0 0.0
        %1648 = vmatmul.mubr.f32.gmra.mrb[0].mxu0 %v619
        %v1649 = vpop.f32.mrb[0].mxu0
        %v1650 = vadd.f32 %v576, %v1649
        %v1651 = vpop.f32.mrb[0].mxu0
        %v1652 = vadd.f32 %v576, %v1651
        %1653 = vmatprep.mubr.f32.mxu0 0.0
        %1654 = vmatmul.mubr.f32.gmra.mrb[0].mxu0 %v622
        %v1655 = vpop.f32.mrb[0].mxu0
        %v1656 = vadd.f32 %v581, %v1655
        %v1657 = vpop.f32.mrb[0].mxu0
        %v1658 = vadd.f32 %v581, %v1657
        %1659 = vmatprep.mubr.f32.mxu0 0.0
        %1660 = vmatmul.mubr.f32.gmra.mrb[0].mxu0 %v625
        %v1661 = vpop.f32.mrb[0].mxu0
        %v1662 = vadd.f32 %v586, %v1661
        %v1663 = vpop.f32.mrb[0].mxu0
        %v1664 = vadd.f32 %v586, %v1663
        %1665 = vmatprep.mubr.f32.mxu0 0.0
        %1666 = vmatmul.mubr.f32.gmra.mrb[0].mxu0 %v628
        %v1667 = vpop.f32.mrb[0].mxu0
        %v1668 = vadd.f32 %v591, %v1667
        %v1669 = vpop.f32.mrb[0].mxu0
        %v1670 = vadd.f32 %v591, %v1669
        %1671 = vdwg.mxu0
        %1672 = vmatprep.subr.mxu0 0.0
        %1673 = vmatpush1.xpose.msra.mxu0 %v823
        %1674 = vmatprep.subr.mxu0 0.0
        %1675 = vmatpush1.xpose.msra.mxu0 %v826
        %1676 = vmatprep.subr.mxu0 0.0
        %1677 = vmatpush1.xpose.msra.mxu0 %v829
        %1678 = vmatprep.subr.mxu0 0.0
        %1679 = vmatpush1.xpose.msra.mxu0 %v832
        %1680 = vmatprep.subr.mxu0 0.0
        %1681 = vmatpush1.xpose.msra.mxu0 %v835
        %1682 = vmatprep.subr.mxu0 0.0
        %1683 = vmatpush1.xpose.msra.mxu0 %v838
        %1684 = vmatprep.subr.mxu0 0.0
        %1685 = vmatpush1.xpose.msra.mxu0 %v841
        %1686 = vmatprep.subr.mxu0 0.0
        %1687 = vmatpush1.xpose.msra.mxu0 %v844
        %1688 = vmatprep.subr.mxu0 0.0
        %1689 = vmatpush1.xpose.msra.mxu0 %v847
        %1690 = vmatprep.subr.mxu0 0.0
        %1691 = vmatpush1.xpose.msra.mxu0 %v850
        %1692 = vmatprep.subr.mxu0 0.0
        %1693 = vmatpush1.xpose.msra.mxu0 %v853
        %1694 = vmatprep.subr.mxu0 0.0
        %1695 = vmatpush1.xpose.msra.mxu0 %v856
        %1696 = vmatprep.subr.mxu0 0.0
        %1697 = vmatpush1.xpose.msra.mxu0 %v859
        %1698 = vmatprep.subr.mxu0 0.0
        %1699 = vmatpush1.xpose.msra.mxu0 %v862
        %1700 = vmatprep.subr.mxu0 0.0
        %1701 = vmatpush1.xpose.msra.mxu0 %v865
        %1702 = vmatprep.subr.mxu0 0.0
        %1703 = vmatpush1.xpose.msra.mxu0 %v868
        %1704 = vmatprep.subr.mxu0 0.0
        %1705 = vmatpush1.xpose.msra.mxu0 %v871
        %1706 = vmatprep.subr.mxu0 0.0
        %1707 = vmatpush1.xpose.msra.mxu0 %v874
        %1708 = vmatprep.subr.mxu0 0.0
        %1709 = vmatpush1.xpose.msra.mxu0 %v877
        %1710 = vmatprep.subr.mxu0 0.0
        %1711 = vmatpush1.xpose.msra.mxu0 %v880
        %1712 = vmatprep.subr.mxu0 0.0
        %1713 = vmatpush1.xpose.msra.mxu0 %v883
        %1714 = vmatprep.subr.mxu0 0.0
        %1715 = vmatpush1.xpose.msra.mxu0 %v886
        %1716 = vmatprep.subr.mxu0 0.0
        %1717 = vmatpush1.xpose.msra.mxu0 %v889
        %1718 = vmatprep.subr.mxu0 0.0
        %1719 = vmatpush1.xpose.msra.mxu0 %v892
        %1720 = vmatprep.subr.mxu0 0.0
        %1721 = vmatpush1.xpose.msra.mxu0 %v895
        %1722 = vmatprep.subr.mxu0 0.0
        %1723 = vmatpush1.xpose.msra.mxu0 %v898
        %1724 = vmatprep.subr.mxu0 0.0
        %1725 = vmatpush1.xpose.msra.mxu0 %v901
        %1726 = vmatprep.subr.mxu0 0.0
        %1727 = vmatpush1.xpose.msra.mxu0 %v904
        %1728 = vmatprep.subr.mxu0 0.0
        %1729 = vmatpush1.xpose.msra.mxu0 %v907
        %1730 = vmatprep.subr.mxu0 0.0
        %1731 = vmatpush1.xpose.msra.mxu0 %v910
        %1732 = vmatprep.subr.mxu0 0.0
        %1733 = vmatpush1.xpose.msra.mxu0 %v913
        %1734 = vmatprep.subr.mxu0 0.0
        %1735 = vmatpush1.xpose.msra.mxu0 %v916
        %1736 = vmatprep.mubr.f32.mxu0 0.0
        %1737 = vmatmul.mubr.f32.gmra.mrb[0].mxu0 %v595
        %v1738 = vpop.f32.mrb[0].mxu0
        %v1739 = vadd.f32 %v536, %v1738
        %v1740 = vpop.f32.mrb[0].mxu0
        %v1741 = vadd.f32 %v536, %v1740
        %1742 = vmatprep.mubr.f32.mxu0 0.0
        %1743 = vmatmul.mubr.f32.gmra.mrb[0].mxu0 %v598
        %v1744 = vpop.f32.mrb[0].mxu0
        %v1745 = vadd.f32 %v541, %v1744
        %v1746 = vpop.f32.mrb[0].mxu0
        %v1747 = vadd.f32 %v541, %v1746
        %1748 = vmatprep.mubr.f32.mxu0 0.0
        %1749 = vmatmul.mubr.f32.gmra.mrb[0].mxu0 %v601
        %v1750 = vpop.f32.mrb[0].mxu0
        %v1751 = vadd.f32 %v546, %v1750
        %v1752 = vpop.f32.mrb[0].mxu0
        %v1753 = vadd.f32 %v546, %v1752
        %1754 = vmatprep.mubr.f32.mxu0 0.0
        %1755 = vmatmul.mubr.f32.gmra.mrb[0].mxu0 %v604
        %v1756 = vpop.f32.mrb[0].mxu0
        %v1757 = vadd.f32 %v551, %v1756
        %v1758 = vpop.f32.mrb[0].mxu0
        %v1759 = vadd.f32 %v551, %v1758
        %1760 = vmatprep.mubr.f32.mxu0 0.0
        %1761 = vmatmul.mubr.f32.gmra.mrb[0].mxu0 %v607
        %v1762 = vpop.f32.mrb[0].mxu0
        %v1763 = vadd.f32 %v556, %v1762
        %v1764 = vpop.f32.mrb[0].mxu0
        %v1765 = vadd.f32 %v556, %v1764
        %1766 = vmatprep.mubr.f32.mxu0 0.0
        %1767 = vmatmul.mubr.f32.gmra.mrb[0].mxu0 %v610
        %v1768 = vpop.f32.mrb[0].mxu0
        %v1769 = vadd.f32 %v561, %v1768
        %v1770 = vpop.f32.mrb[0].mxu0
        %v1771 = vadd.f32 %v561, %v1770
        %1772 = vmatprep.mubr.f32.mxu0 0.0
        %1773 = vmatmul.mubr.f32.gmra.mrb[0].mxu0 %v613
        %v1774 = vpop.f32.mrb[0].mxu0
        %v1775 = vadd.f32 %v566, %v1774
        %v1776 = vpop.f32.mrb[0].mxu0
        %v1777 = vadd.f32 %v566, %v1776
        %1778 = vmatprep.mubr.f32.mxu0 0.0
        %1779 = vmatmul.mubr.f32.gmra.mrb[0].mxu0 %v616
        %v1780 = vpop.f32.mrb[0].mxu0
        %v1781 = vadd.f32 %v571, %v1780
        %v1782 = vpop.f32.mrb[0].mxu0
        %v1783 = vadd.f32 %v571, %v1782
        %1784 = vmatprep.mubr.f32.mxu0 0.0
        %1785 = vmatmul.mubr.f32.gmra.mrb[0].mxu0 %v619
        %v1786 = vpop.f32.mrb[0].mxu0
        %v1787 = vadd.f32 %v576, %v1786
        %v1788 = vpop.f32.mrb[0].mxu0
        %v1789 = vadd.f32 %v576, %v1788
        %1790 = vmatprep.mubr.f32.mxu0 0.0
        %1791 = vmatmul.mubr.f32.gmra.mrb[0].mxu0 %v622
        %v1792 = vpop.f32.mrb[0].mxu0
        %v1793 = vadd.f32 %v581, %v1792
        %v1794 = vpop.f32.mrb[0].mxu0
        %v1795 = vadd.f32 %v581, %v1794
        %1796 = vmatprep.mubr.f32.mxu0 0.0
        %1797 = vmatmul.mubr.f32.gmra.mrb[0].mxu0 %v625
        %v1798 = vpop.f32.mrb[0].mxu0
        %v1799 = vadd.f32 %v586, %v1798
        %v1800 = vpop.f32.mrb[0].mxu0
        %v1801 = vadd.f32 %v586, %v1800
        %1802 = vmatprep.mubr.f32.mxu0 0.0
        %1803 = vmatmul.mubr.f32.gmra.mrb[0].mxu0 %v628
        %v1804 = vpop.f32.mrb[0].mxu0
        %v1805 = vadd.f32 %v591, %v1804
        %v1806 = vpop.f32.mrb[0].mxu0
        %v1807 = vadd.f32 %v591, %v1806
        %1808 = vdwg.mxu0
        %1809 = vmatprep.subr.mxu0 0.0
        %1810 = vmatpush1.xpose.msra.mxu0 %v919
        %1811 = vmatprep.subr.mxu0 0.0
        %1812 = vmatpush1.xpose.msra.mxu0 %v922
        %1813 = vmatprep.subr.mxu0 0.0
        %1814 = vmatpush1.xpose.msra.mxu0 %v925
        %1815 = vmatprep.subr.mxu0 0.0
        %1816 = vmatpush1.xpose.msra.mxu0 %v928
        %1817 = vmatprep.subr.mxu0 0.0
        %1818 = vmatpush1.xpose.msra.mxu0 %v931
        %1819 = vmatprep.subr.mxu0 0.0
        %1820 = vmatpush1.xpose.msra.mxu0 %v934
        %1821 = vmatprep.subr.mxu0 0.0
        %1822 = vmatpush1.xpose.msra.mxu0 %v937
        %1823 = vmatprep.subr.mxu0 0.0
        %1824 = vmatpush1.xpose.msra.mxu0 %v940
        %1825 = vmatprep.subr.mxu0 0.0
        %1826 = vmatpush1.xpose.msra.mxu0 %v943
        %1827 = vmatprep.subr.mxu0 0.0
        %1828 = vmatpush1.xpose.msra.mxu0 %v946
        %1829 = vmatprep.subr.mxu0 0.0
        %1830 = vmatpush1.xpose.msra.mxu0 %v949
        %1831 = vmatprep.subr.mxu0 0.0
        %1832 = vmatpush1.xpose.msra.mxu0 %v952
        %1833 = vmatprep.subr.mxu0 0.0
        %1834 = vmatpush1.xpose.msra.mxu0 %v955
        %1835 = vmatprep.subr.mxu0 0.0
        %1836 = vmatpush1.xpose.msra.mxu0 %v958
        %1837 = vmatprep.subr.mxu0 0.0
        %1838 = vmatpush1.xpose.msra.mxu0 %v961
        %1839 = vmatprep.subr.mxu0 0.0
        %1840 = vmatpush1.xpose.msra.mxu0 %v964
        %1841 = vmatprep.subr.mxu0 0.0
        %1842 = vmatpush1.xpose.msra.mxu0 %v967
        %1843 = vmatprep.subr.mxu0 0.0
        %1844 = vmatpush1.xpose.msra.mxu0 %v970
        %1845 = vmatprep.subr.mxu0 0.0
        %1846 = vmatpush1.xpose.msra.mxu0 %v973
        %1847 = vmatprep.subr.mxu0 0.0
        %1848 = vmatpush1.xpose.msra.mxu0 %v976
        %1849 = vmatprep.subr.mxu0 0.0
        %1850 = vmatpush1.xpose.msra.mxu0 %v979
        %1851 = vmatprep.subr.mxu0 0.0
        %1852 = vmatpush1.xpose.msra.mxu0 %v982
        %1853 = vmatprep.subr.mxu0 0.0
        %1854 = vmatpush1.xpose.msra.mxu0 %v985
        %1855 = vmatprep.subr.mxu0 0.0
        %1856 = vmatpush1.xpose.msra.mxu0 %v988
        %1857 = vmatprep.subr.mxu0 0.0
        %1858 = vmatpush1.xpose.msra.mxu0 %v991
        %1859 = vmatprep.subr.mxu0 0.0
        %1860 = vmatpush1.xpose.msra.mxu0 %v994
        %1861 = vmatprep.subr.mxu0 0.0
        %1862 = vmatpush1.xpose.msra.mxu0 %v997
        %1863 = vmatprep.subr.mxu0 0.0
        %1864 = vmatpush1.xpose.msra.mxu0 %v1000
        %1865 = vmatprep.subr.mxu0 0.0
        %1866 = vmatpush1.xpose.msra.mxu0 %v1003
        %1867 = vmatprep.subr.mxu0 0.0
        %1868 = vmatpush1.xpose.msra.mxu0 %v1006
        %1869 = vmatprep.subr.mxu0 0.0
        %1870 = vmatpush1.xpose.msra.mxu0 %v1009
        %1871 = vmatprep.subr.mxu0 0.0
        %1872 = vmatpush1.xpose.msra.mxu0 %v1012
        %1873 = vmatprep.mubr.f32.mxu0 0.0
        %1874 = vmatmul.mubr.f32.gmra.mrb[0].mxu0 %v595
        %v1875 = vpop.f32.mrb[0].mxu0
        %v1876 = vadd.f32 %v536, %v1875
        %v1877 = vpop.f32.mrb[0].mxu0
        %v1878 = vadd.f32 %v536, %v1877
        %1879 = vmatprep.mubr.f32.mxu0 0.0
        %1880 = vmatmul.mubr.f32.gmra.mrb[0].mxu0 %v598
        %v1881 = vpop.f32.mrb[0].mxu0
        %v1882 = vadd.f32 %v541, %v1881
        %v1883 = vpop.f32.mrb[0].mxu0
        %v1884 = vadd.f32 %v541, %v1883
        %1885 = vmatprep.mubr.f32.mxu0 0.0
        %1886 = vmatmul.mubr.f32.gmra.mrb[0].mxu0 %v601
        %v1887 = vpop.f32.mrb[0].mxu0
        %v1888 = vadd.f32 %v546, %v1887
        %v1889 = vpop.f32.mrb[0].mxu0
        %v1890 = vadd.f32 %v546, %v1889
        %1891 = vmatprep.mubr.f32.mxu0 0.0
        %1892 = vmatmul.mubr.f32.gmra.mrb[0].mxu0 %v604
        %v1893 = vpop.f32.mrb[0].mxu0
        %v1894 = vadd.f32 %v551, %v1893
        %v1895 = vpop.f32.mrb[0].mxu0
        %v1896 = vadd.f32 %v551, %v1895
        %1897 = vmatprep.mubr.f32.mxu0 0.0
        %1898 = vmatmul.mubr.f32.gmra.mrb[0].mxu0 %v607
        %v1899 = vpop.f32.mrb[0].mxu0
        %v1900 = vadd.f32 %v556, %v1899
        %v1901 = vpop.f32.mrb[0].mxu0
        %v1902 = vadd.f32 %v556, %v1901
        %1903 = vmatprep.mubr.f32.mxu0 0.0
        %1904 = vmatmul.mubr.f32.gmra.mrb[0].mxu0 %v610
        %v1905 = vpop.f32.mrb[0].mxu0
        %v1906 = vadd.f32 %v561, %v1905
        %v1907 = vpop.f32.mrb[0].mxu0
        %v1908 = vadd.f32 %v561, %v1907
        %1909 = vmatprep.mubr.f32.mxu0 0.0
        %1910 = vmatmul.mubr.f32.gmra.mrb[0].mxu0 %v613
        %v1911 = vpop.f32.mrb[0].mxu0
        %v1912 = vadd.f32 %v566, %v1911
        %v1913 = vpop.f32.mrb[0].mxu0
        %v1914 = vadd.f32 %v566, %v1913
        %1915 = vmatprep.mubr.f32.mxu0 0.0
        %1916 = vmatmul.mubr.f32.gmra.mrb[0].mxu0 %v616
        %v1917 = vpop.f32.mrb[0].mxu0
        %v1918 = vadd.f32 %v571, %v1917
        %v1919 = vpop.f32.mrb[0].mxu0
        %v1920 = vadd.f32 %v571, %v1919
        %1921 = vmatprep.mubr.f32.mxu0 0.0
        %1922 = vmatmul.mubr.f32.gmra.mrb[0].mxu0 %v619
        %v1923 = vpop.f32.mrb[0].mxu0
        %v1924 = vadd.f32 %v576, %v1923
        %v1925 = vpop.f32.mrb[0].mxu0
        %v1926 = vadd.f32 %v576, %v1925
        %1927 = vmatprep.mubr.f32.mxu0 0.0
        %1928 = vmatmul.mubr.f32.gmra.mrb[0].mxu0 %v622
        %v1929 = vpop.f32.mrb[0].mxu0
        %v1930 = vadd.f32 %v581, %v1929
        %v1931 = vpop.f32.mrb[0].mxu0
        %v1932 = vadd.f32 %v581, %v1931
        %1933 = vmatprep.mubr.f32.mxu0 0.0
        %1934 = vmatmul.mubr.f32.gmra.mrb[0].mxu0 %v625
        %v1935 = vpop.f32.mrb[0].mxu0
        %v1936 = vadd.f32 %v586, %v1935
        %v1937 = vpop.f32.mrb[0].mxu0
        %v1938 = vadd.f32 %v586, %v1937
        %1939 = vmatprep.mubr.f32.mxu0 0.0
        %1940 = vmatmul.mubr.f32.gmra.mrb[0].mxu0 %v628
        %v1941 = vpop.f32.mrb[0].mxu0
        %v1942 = vadd.f32 %v591, %v1941
        %v1943 = vpop.f32.mrb[0].mxu0
        %v1944 = vadd.f32 %v591, %v1943
        %1945 = vdwg.mxu0
        %1946 = vmatprep.subr.mxu0 0.0
        %1947 = vmatpush1.xpose.msra.mxu0 %v1015
        %1948 = vmatprep.subr.mxu0 0.0
        %1949 = vmatpush1.xpose.msra.mxu0 %v1018
        %1950 = vmatprep.subr.mxu0 0.0
        %1951 = vmatpush1.xpose.msra.mxu0 %v1021
        %1952 = vmatprep.subr.mxu0 0.0
        %1953 = vmatpush1.xpose.msra.mxu0 %v1024
        %1954 = vmatprep.subr.mxu0 0.0
        %1955 = vmatpush1.xpose.msra.mxu0 %v1027
        %1956 = vmatprep.subr.mxu0 0.0
        %1957 = vmatpush1.xpose.msra.mxu0 %v1030
        %1958 = vmatprep.subr.mxu0 0.0
        %1959 = vmatpush1.xpose.msra.mxu0 %v1033
        %1960 = vmatprep.subr.mxu0 0.0
        %1961 = vmatpush1.xpose.msra.mxu0 %v1036
        %1962 = vmatprep.subr.mxu0 0.0
        %1963 = vmatpush1.xpose.msra.mxu0 %v1039
        %1964 = vmatprep.subr.mxu0 0.0
        %1965 = vmatpush1.xpose.msra.mxu0 %v1042
        %1966 = vmatprep.subr.mxu0 0.0
        %1967 = vmatpush1.xpose.msra.mxu0 %v1045
        %1968 = vmatprep.subr.mxu0 0.0
        %1969 = vmatpush1.xpose.msra.mxu0 %v1048
        %1970 = vmatprep.subr.mxu0 0.0
        %1971 = vmatpush1.xpose.msra.mxu0 %v1051
        %1972 = vmatprep.subr.mxu0 0.0
        %1973 = vmatpush1.xpose.msra.mxu0 %v1054
        %1974 = vmatprep.subr.mxu0 0.0
        %1975 = vmatpush1.xpose.msra.mxu0 %v1057
        %1976 = vmatprep.subr.mxu0 0.0
        %1977 = vmatpush1.xpose.msra.mxu0 %v1060
        %1978 = vmatprep.subr.mxu0 0.0
        %1979 = vmatpush1.xpose.msra.mxu0 %v1063
        %1980 = vmatprep.subr.mxu0 0.0
        %1981 = vmatpush1.xpose.msra.mxu0 %v1066
        %1982 = vmatprep.subr.mxu0 0.0
        %1983 = vmatpush1.xpose.msra.mxu0 %v1069
        %1984 = vmatprep.subr.mxu0 0.0
        %1985 = vmatpush1.xpose.msra.mxu0 %v1072
        %1986 = vmatprep.subr.mxu0 0.0
        %1987 = vmatpush1.xpose.msra.mxu0 %v1075
        %1988 = vmatprep.subr.mxu0 0.0
        %1989 = vmatpush1.xpose.msra.mxu0 %v1078
        %1990 = vmatprep.subr.mxu0 0.0
        %1991 = vmatpush1.xpose.msra.mxu0 %v1081
        %1992 = vmatprep.subr.mxu0 0.0
        %1993 = vmatpush1.xpose.msra.mxu0 %v1084
        %1994 = vmatprep.subr.mxu0 0.0
        %1995 = vmatpush1.xpose.msra.mxu0 %v1087
        %1996 = vmatprep.subr.mxu0 0.0
        %1997 = vmatpush1.xpose.msra.mxu0 %v1090
        %1998 = vmatprep.subr.mxu0 0.0
        %1999 = vmatpush1.xpose.msra.mxu0 %v1093
        %2000 = vmatprep.subr.mxu0 0.0
        %2001 = vmatpush1.xpose.msra.mxu0 %v1096
        %2002 = vmatprep.subr.mxu0 0.0
        %2003 = vmatpush1.xpose.msra.mxu0 %v1099
        %2004 = vmatprep.subr.mxu0 0.0
        %2005 = vmatpush1.xpose.msra.mxu0 %v1102
        %2006 = vmatprep.subr.mxu0 0.0
        %2007 = vmatpush1.xpose.msra.mxu0 %v1105
        %2008 = vmatprep.subr.mxu0 0.0
        %2009 = vmatpush1.xpose.msra.mxu0 %v1108
        %2010 = vmatprep.mubr.f32.mxu0 0.0
        %2011 = vmatmul.mubr.f32.gmra.mrb[0].mxu0 %v595
        %v2012 = vpop.f32.mrb[0].mxu0
        %v2013 = vadd.f32 %v536, %v2012
        %v2014 = vpop.f32.mrb[0].mxu0
        %v2015 = vadd.f32 %v536, %v2014
        %2016 = vmatprep.mubr.f32.mxu0 0.0
        %2017 = vmatmul.mubr.f32.gmra.mrb[0].mxu0 %v598
        %v2018 = vpop.f32.mrb[0].mxu0
        %v2019 = vadd.f32 %v541, %v2018
        %v2020 = vpop.f32.mrb[0].mxu0
        %v2021 = vadd.f32 %v541, %v2020
        %2022 = vmatprep.mubr.f32.mxu0 0.0
        %2023 = vmatmul.mubr.f32.gmra.mrb[0].mxu0 %v601
        %v2024 = vpop.f32.mrb[0].mxu0
        %v2025 = vadd.f32 %v546, %v2024
        %v2026 = vpop.f32.mrb[0].mxu0
        %v2027 = vadd.f32 %v546, %v2026
        %2028 = vmatprep.mubr.f32.mxu0 0.0
        %2029 = vmatmul.mubr.f32.gmra.mrb[0].mxu0 %v604
        %v2030 = vpop.f32.mrb[0].mxu0
        %v2031 = vadd.f32 %v551, %v2030
        %v2032 = vpop.f32.mrb[0].mxu0
        %v2033 = vadd.f32 %v551, %v2032
        %2034 = vmatprep.mubr.f32.mxu0 0.0
        %2035 = vmatmul.mubr.f32.gmra.mrb[0].mxu0 %v607
        %v2036 = vpop.f32.mrb[0].mxu0
        %v2037 = vadd.f32 %v556, %v2036
        %v2038 = vpop.f32.mrb[0].mxu0
        %v2039 = vadd.f32 %v556, %v2038
        %2040 = vmatprep.mubr.f32.mxu0 0.0
        %2041 = vmatmul.mubr.f32.gmra.mrb[0].mxu0 %v610
        %v2042 = vpop.f32.mrb[0].mxu0
        %v2043 = vadd.f32 %v561, %v2042
        %v2044 = vpop.f32.mrb[0].mxu0
        %v2045 = vadd.f32 %v561, %v2044
        %2046 = vmatprep.mubr.f32.mxu0 0.0
        %2047 = vmatmul.mubr.f32.gmra.mrb[0].mxu0 %v613
        %v2048 = vpop.f32.mrb[0].mxu0
        %v2049 = vadd.f32 %v566, %v2048
        %v2050 = vpop.f32.mrb[0].mxu0
        %v2051 = vadd.f32 %v566, %v2050
        %2052 = vmatprep.mubr.f32.mxu0 0.0
        %2053 = vmatmul.mubr.f32.gmra.mrb[0].mxu0 %v616
        %v2054 = vpop.f32.mrb[0].mxu0
        %v2055 = vadd.f32 %v571, %v2054
        %v2056 = vpop.f32.mrb[0].mxu0
        %v2057 = vadd.f32 %v571, %v2056
        %2058 = vmatprep.mubr.f32.mxu0 0.0
        %2059 = vmatmul.mubr.f32.gmra.mrb[0].mxu0 %v619
        %v2060 = vpop.f32.mrb[0].mxu0
        %v2061 = vadd.f32 %v576, %v2060
        %v2062 = vpop.f32.mrb[0].mxu0
        %v2063 = vadd.f32 %v576, %v2062
        %2064 = vmatprep.mubr.f32.mxu0 0.0
        %2065 = vmatmul.mubr.f32.gmra.mrb[0].mxu0 %v622
        %v2066 = vpop.f32.mrb[0].mxu0
        %v2067 = vadd.f32 %v581, %v2066
        %v2068 = vpop.f32.mrb[0].mxu0
        %v2069 = vadd.f32 %v581, %v2068
        %2070 = vmatprep.mubr.f32.mxu0 0.0
        %2071 = vmatmul.mubr.f32.gmra.mrb[0].mxu0 %v625
        %v2072 = vpop.f32.mrb[0].mxu0
        %v2073 = vadd.f32 %v586, %v2072
        %v2074 = vpop.f32.mrb[0].mxu0
        %v2075 = vadd.f32 %v586, %v2074
        %2076 = vmatprep.mubr.f32.mxu0 0.0
        %2077 = vmatmul.mubr.f32.gmra.mrb[0].mxu0 %v628
        %v2078 = vpop.f32.mrb[0].mxu0
        %v2079 = vadd.f32 %v591, %v2078
        %v2080 = vpop.f32.mrb[0].mxu0
        %v2081 = vadd.f32 %v591, %v2080
        %2082 = vdwg.mxu0
        %2083 = vmatprep.subr.mxu0 0.0
        %2084 = vmatpush1.xpose.msra.mxu0 %v1111
        %2085 = vmatprep.subr.mxu0 0.0
        %2086 = vmatpush1.xpose.msra.mxu0 %v1114
        %2087 = vmatprep.subr.mxu0 0.0
        %2088 = vmatpush1.xpose.msra.mxu0 %v1117
        %2089 = vmatprep.subr.mxu0 0.0
        %2090 = vmatpush1.xpose.msra.mxu0 %v1120
        %2091 = vmatprep.subr.mxu0 0.0
        %2092 = vmatpush1.xpose.msra.mxu0 %v1123
        %2093 = vmatprep.subr.mxu0 0.0
        %2094 = vmatpush1.xpose.msra.mxu0 %v1126
        %2095 = vmatprep.subr.mxu0 0.0
        %2096 = vmatpush1.xpose.msra.mxu0 %v1129
        %2097 = vmatprep.subr.mxu0 0.0
        %2098 = vmatpush1.xpose.msra.mxu0 %v1132
        %2099 = vmatprep.subr.mxu0 0.0
        %2100 = vmatpush1.xpose.msra.mxu0 %v1135
        %2101 = vmatprep.subr.mxu0 0.0
        %2102 = vmatpush1.xpose.msra.mxu0 %v1138
        %2103 = vmatprep.subr.mxu0 0.0
        %2104 = vmatpush1.xpose.msra.mxu0 %v1141
        %2105 = vmatprep.subr.mxu0 0.0
        %2106 = vmatpush1.xpose.msra.mxu0 %v1144
        %2107 = vmatprep.subr.mxu0 0.0
        %2108 = vmatpush1.xpose.msra.mxu0 %v1147
        %2109 = vmatprep.subr.mxu0 0.0
        %2110 = vmatpush1.xpose.msra.mxu0 %v1150
        %2111 = vmatprep.subr.mxu0 0.0
        %2112 = vmatpush1.xpose.msra.mxu0 %v1153
        %2113 = vmatprep.subr.mxu0 0.0
        %2114 = vmatpush1.xpose.msra.mxu0 %v1156
        %2115 = vmatprep.subr.mxu0 0.0
        %2116 = vmatpush1.xpose.msra.mxu0 %v1159
        %2117 = vmatprep.subr.mxu0 0.0
        %2118 = vmatpush1.xpose.msra.mxu0 %v1162
        %2119 = vmatprep.subr.mxu0 0.0
        %2120 = vmatpush1.xpose.msra.mxu0 %v1165
        %2121 = vmatprep.subr.mxu0 0.0
        %2122 = vmatpush1.xpose.msra.mxu0 %v1168
        %2123 = vmatprep.subr.mxu0 0.0
        %2124 = vmatpush1.xpose.msra.mxu0 %v1171
        %2125 = vmatprep.subr.mxu0 0.0
        %2126 = vmatpush1.xpose.msra.mxu0 %v1174
        %2127 = vmatprep.subr.mxu0 0.0
        %2128 = vmatpush1.xpose.msra.mxu0 %v1177
        %2129 = vmatprep.subr.mxu0 0.0
        %2130 = vmatpush1.xpose.msra.mxu0 %v1180
        %2131 = vmatprep.subr.mxu0 0.0
        %2132 = vmatpush1.xpose.msra.mxu0 %v1183
        %2133 = vmatprep.subr.mxu0 0.0
        %2134 = vmatpush1.xpose.msra.mxu0 %v1186
        %2135 = vmatprep.subr.mxu0 0.0
        %2136 = vmatpush1.xpose.msra.mxu0 %v1189
        %2137 = vmatprep.subr.mxu0 0.0
        %2138 = vmatpush1.xpose.msra.mxu0 %v1192
        %2139 = vmatprep.subr.mxu0 0.0
        %2140 = vmatpush1.xpose.msra.mxu0 %v1195
        %2141 = vmatprep.subr.mxu0 0.0
        %2142 = vmatpush1.xpose.msra.mxu0 %v1198
        %2143 = vmatprep.subr.mxu0 0.0
        %2144 = vmatpush1.xpose.msra.mxu0 %v1201
        %2145 = vmatprep.subr.mxu0 0.0
        %2146 = vmatpush1.xpose.msra.mxu0 %v1204
        %2147 = vmatprep.mubr.f32.mxu0 0.0
        %2148 = vmatmul.mubr.f32.gmra.mrb[0].mxu0 %v595
        %v2149 = vpop.f32.mrb[0].mxu0
        %v2150 = vadd.f32 %v536, %v2149
        %v2151 = vpop.f32.mrb[0].mxu0
        %v2152 = vadd.f32 %v536, %v2151
        %2153 = vmatprep.mubr.f32.mxu0 0.0
        %2154 = vmatmul.mubr.f32.gmra.mrb[0].mxu0 %v598
        %v2155 = vpop.f32.mrb[0].mxu0
        %v2156 = vadd.f32 %v541, %v2155
        %v2157 = vpop.f32.mrb[0].mxu0
        %v2158 = vadd.f32 %v541, %v2157
        %2159 = vmatprep.mubr.f32.mxu0 0.0
        %2160 = vmatmul.mubr.f32.gmra.mrb[0].mxu0 %v601
        %v2161 = vpop.f32.mrb[0].mxu0
        %v2162 = vadd.f32 %v546, %v2161
        %v2163 = vpop.f32.mrb[0].mxu0
        %v2164 = vadd.f32 %v546, %v2163
        %2165 = vmatprep.mubr.f32.mxu0 0.0
        %2166 = vmatmul.mubr.f32.gmra.mrb[0].mxu0 %v604
        %v2167 = vpop.f32.mrb[0].mxu0
        %v2168 = vadd.f32 %v551, %v2167
        %v2169 = vpop.f32.mrb[0].mxu0
        %v2170 = vadd.f32 %v551, %v2169
        %2171 = vmatprep.mubr.f32.mxu0 0.0
        %2172 = vmatmul.mubr.f32.gmra.mrb[0].mxu0 %v607
        %v2173 = vpop.f32.mrb[0].mxu0
        %v2174 = vadd.f32 %v556, %v2173
        %v2175 = vpop.f32.mrb[0].mxu0
        %v2176 = vadd.f32 %v556, %v2175
        %2177 = vmatprep.mubr.f32.mxu0 0.0
        %2178 = vmatmul.mubr.f32.gmra.mrb[0].mxu0 %v610
        %v2179 = vpop.f32.mrb[0].mxu0
        %v2180 = vadd.f32 %v561, %v2179
        %v2181 = vpop.f32.mrb[0].mxu0
        %v2182 = vadd.f32 %v561, %v2181
        %2183 = vmatprep.mubr.f32.mxu0 0.0
        %2184 = vmatmul.mubr.f32.gmra.mrb[0].mxu0 %v613
        %v2185 = vpop.f32.mrb[0].mxu0
        %v2186 = vadd.f32 %v566, %v2185
        %v2187 = vpop.f32.mrb[0].mxu0
        %v2188 = vadd.f32 %v566, %v2187
        %2189 = vmatprep.mubr.f32.mxu0 0.0
        %2190 = vmatmul.mubr.f32.gmra.mrb[0].mxu0 %v616
        %v2191 = vpop.f32.mrb[0].mxu0
        %v2192 = vadd.f32 %v571, %v2191
        %v2193 = vpop.f32.mrb[0].mxu0
        %v2194 = vadd.f32 %v571, %v2193
        %2195 = vmatprep.mubr.f32.mxu0 0.0
        %2196 = vmatmul.mubr.f32.gmra.mrb[0].mxu0 %v619
        %v2197 = vpop.f32.mrb[0].mxu0
        %v2198 = vadd.f32 %v576, %v2197
        %v2199 = vpop.f32.mrb[0].mxu0
        %v2200 = vadd.f32 %v576, %v2199
        %2201 = vmatprep.mubr.f32.mxu0 0.0
        %2202 = vmatmul.mubr.f32.gmra.mrb[0].mxu0 %v622
        %v2203 = vpop.f32.mrb[0].mxu0
        %v2204 = vadd.f32 %v581, %v2203
        %v2205 = vpop.f32.mrb[0].mxu0
        %v2206 = vadd.f32 %v581, %v2205
        %2207 = vmatprep.mubr.f32.mxu0 0.0
        %2208 = vmatmul.mubr.f32.gmra.mrb[0].mxu0 %v625
        %v2209 = vpop.f32.mrb[0].mxu0
        %v2210 = vadd.f32 %v586, %v2209
        %v2211 = vpop.f32.mrb[0].mxu0
        %v2212 = vadd.f32 %v586, %v2211
        %2213 = vmatprep.mubr.f32.mxu0 0.0
        %2214 = vmatmul.mubr.f32.gmra.mrb[0].mxu0 %v628
        %v2215 = vpop.f32.mrb[0].mxu0
        %v2216 = vadd.f32 %v591, %v2215
        %v2217 = vpop.f32.mrb[0].mxu0
        %v2218 = vadd.f32 %v591, %v2217
        %2219 = vdwg.mxu0
        %2220 = vmatprep.subr.mxu0 0.0
        %2221 = vmatpush1.xpose.msra.mxu0 %v1207
        %2222 = vmatprep.subr.mxu0 0.0
        %2223 = vmatpush1.xpose.msra.mxu0 %v1210
        %2224 = vmatprep.subr.mxu0 0.0
        %2225 = vmatpush1.xpose.msra.mxu0 %v1213
        %2226 = vmatprep.subr.mxu0 0.0
        %2227 = vmatpush1.xpose.msra.mxu0 %v1216
        %2228 = vmatprep.subr.mxu0 0.0
        %2229 = vmatpush1.xpose.msra.mxu0 %v1219
        %2230 = vmatprep.subr.mxu0 0.0
        %2231 = vmatpush1.xpose.msra.mxu0 %v1222
        %2232 = vmatprep.subr.mxu0 0.0
        %2233 = vmatpush1.xpose.msra.mxu0 %v1225
        %2234 = vmatprep.subr.mxu0 0.0
        %2235 = vmatpush1.xpose.msra.mxu0 %v1228
        %2236 = vmatprep.subr.mxu0 0.0
        %2237 = vmatpush1.xpose.msra.mxu0 %v1231
        %2238 = vmatprep.subr.mxu0 0.0
        %2239 = vmatpush1.xpose.msra.mxu0 %v1234
        %2240 = vmatprep.subr.mxu0 0.0
        %2241 = vmatpush1.xpose.msra.mxu0 %v1237
        %2242 = vmatprep.subr.mxu0 0.0
        %2243 = vmatpush1.xpose.msra.mxu0 %v1240
        %2244 = vmatprep.subr.mxu0 0.0
        %2245 = vmatpush1.xpose.msra.mxu0 %v1243
        %2246 = vmatprep.subr.mxu0 0.0
        %2247 = vmatpush1.xpose.msra.mxu0 %v1246
        %2248 = vmatprep.subr.mxu0 0.0
        %2249 = vmatpush1.xpose.msra.mxu0 %v1249
        %2250 = vmatprep.subr.mxu0 0.0
        %2251 = vmatpush1.xpose.msra.mxu0 %v1252
        %2252 = vmatprep.subr.mxu0 0.0
        %2253 = vmatpush1.xpose.msra.mxu0 %v1255
        %2254 = vmatprep.subr.mxu0 0.0
        %2255 = vmatpush1.xpose.msra.mxu0 %v1258
        %2256 = vmatprep.subr.mxu0 0.0
        %2257 = vmatpush1.xpose.msra.mxu0 %v1261
        %2258 = vmatprep.subr.mxu0 0.0
        %2259 = vmatpush1.xpose.msra.mxu0 %v1264
        %2260 = vmatprep.subr.mxu0 0.0
        %2261 = vmatpush1.xpose.msra.mxu0 %v1267
        %2262 = vmatprep.subr.mxu0 0.0
        %2263 = vmatpush1.xpose.msra.mxu0 %v1270
        %2264 = vmatprep.subr.mxu0 0.0
        %2265 = vmatpush1.xpose.msra.mxu0 %v1273
        %2266 = vmatprep.subr.mxu0 0.0
        %2267 = vmatpush1.xpose.msra.mxu0 %v1276
        %2268 = vmatprep.subr.mxu0 0.0
        %2269 = vmatpush1.xpose.msra.mxu0 %v1279
        %2270 = vmatprep.subr.mxu0 0.0
        %2271 = vmatpush1.xpose.msra.mxu0 %v1282
        %2272 = vmatprep.subr.mxu0 0.0
        %2273 = vmatpush1.xpose.msra.mxu0 %v1285
        %2274 = vmatprep.subr.mxu0 0.0
        %2275 = vmatpush1.xpose.msra.mxu0 %v1288
        %2276 = vmatprep.subr.mxu0 0.0
        %2277 = vmatpush1.xpose.msra.mxu0 %v1291
        %2278 = vmatprep.subr.mxu0 0.0
        %2279 = vmatpush1.xpose.msra.mxu0 %v1294
        %2280 = vmatprep.subr.mxu0 0.0
        %2281 = vmatpush1.xpose.msra.mxu0 %v1297
        %2282 = vmatprep.subr.mxu0 0.0
        %2283 = vmatpush1.xpose.msra.mxu0 %v1300
        %2284 = vmatprep.mubr.f32.mxu0 0.0
        %2285 = vmatmul.mubr.f32.gmra.mrb[0].mxu0 %v595
        %v2286 = vpop.f32.mrb[0].mxu0
        %v2287 = vadd.f32 %v536, %v2286
        %v2288 = vpop.f32.mrb[0].mxu0
        %v2289 = vadd.f32 %v536, %v2288
        %2290 = vmatprep.mubr.f32.mxu0 0.0
        %2291 = vmatmul.mubr.f32.gmra.mrb[0].mxu0 %v598
        %v2292 = vpop.f32.mrb[0].mxu0
        %v2293 = vadd.f32 %v541, %v2292
        %v2294 = vpop.f32.mrb[0].mxu0
        %v2295 = vadd.f32 %v541, %v2294
        %2296 = vmatprep.mubr.f32.mxu0 0.0
        %2297 = vmatmul.mubr.f32.gmra.mrb[0].mxu0 %v601
        %v2298 = vpop.f32.mrb[0].mxu0
        %v2299 = vadd.f32 %v546, %v2298
        %v2300 = vpop.f32.mrb[0].mxu0
        %v2301 = vadd.f32 %v546, %v2300
        %2302 = vmatprep.mubr.f32.mxu0 0.0
        %2303 = vmatmul.mubr.f32.gmra.mrb[0].mxu0 %v604
        %v2304 = vpop.f32.mrb[0].mxu0
        %v2305 = vadd.f32 %v551, %v2304
        %v2306 = vpop.f32.mrb[0].mxu0
        %v2307 = vadd.f32 %v551, %v2306
        %2308 = vmatprep.mubr.f32.mxu0 0.0
        %2309 = vmatmul.mubr.f32.gmra.mrb[0].mxu0 %v607
        %v2310 = vpop.f32.mrb[0].mxu0
        %v2311 = vadd.f32 %v556, %v2310
        %v2312 = vpop.f32.mrb[0].mxu0
        %v2313 = vadd.f32 %v556, %v2312
        %2314 = vmatprep.mubr.f32.mxu0 0.0
        %2315 = vmatmul.mubr.f32.gmra.mrb[0].mxu0 %v610
        %v2316 = vpop.f32.mrb[0].mxu0
        %v2317 = vadd.f32 %v561, %v2316
        %v2318 = vpop.f32.mrb[0].mxu0
        %v2319 = vadd.f32 %v561, %v2318
        %2320 = vmatprep.mubr.f32.mxu0 0.0
        %2321 = vmatmul.mubr.f32.gmra.mrb[0].mxu0 %v613
        %v2322 = vpop.f32.mrb[0].mxu0
        %v2323 = vadd.f32 %v566, %v2322
        %v2324 = vpop.f32.mrb[0].mxu0
        %v2325 = vadd.f32 %v566, %v2324
        %2326 = vmatprep.mubr.f32.mxu0 0.0
        %2327 = vmatmul.mubr.f32.gmra.mrb[0].mxu0 %v616
        %v2328 = vpop.f32.mrb[0].mxu0
        %v2329 = vadd.f32 %v571, %v2328
        %v2330 = vpop.f32.mrb[0].mxu0
        %v2331 = vadd.f32 %v571, %v2330
        %2332 = vmatprep.mubr.f32.mxu0 0.0
        %2333 = vmatmul.mubr.f32.gmra.mrb[0].mxu0 %v619
        %v2334 = vpop.f32.mrb[0].mxu0
        %v2335 = vadd.f32 %v576, %v2334
        %v2336 = vpop.f32.mrb[0].mxu0
        %v2337 = vadd.f32 %v576, %v2336
        %2338 = vmatprep.mubr.f32.mxu0 0.0
        %2339 = vmatmul.mubr.f32.gmra.mrb[0].mxu0 %v622
        %v2340 = vpop.f32.mrb[0].mxu0
        %v2341 = vadd.f32 %v581, %v2340
        %v2342 = vpop.f32.mrb[0].mxu0
        %v2343 = vadd.f32 %v581, %v2342
        %2344 = vmatprep.mubr.f32.mxu0 0.0
        %2345 = vmatmul.mubr.f32.gmra.mrb[0].mxu0 %v625
        %v2346 = vpop.f32.mrb[0].mxu0
        %v2347 = vadd.f32 %v586, %v2346
        %v2348 = vpop.f32.mrb[0].mxu0
        %v2349 = vadd.f32 %v586, %v2348
        %2350 = vmatprep.mubr.f32.mxu0 0.0
        %2351 = vmatmul.mubr.f32.gmra.mrb[0].mxu0 %v628
        %v2352 = vpop.f32.mrb[0].mxu0
        %v2353 = vadd.f32 %v591, %v2352
        %v2354 = vpop.f32.mrb[0].mxu0
        %v2355 = vadd.f32 %v591, %v2354
        %2356 = vdwg.mxu0
        %2357 = vmatprep.subr.mxu0 0.0
        %2358 = vmatpush1.xpose.msra.mxu0 %v1303
        %2359 = vmatprep.subr.mxu0 0.0
        %2360 = vmatpush1.xpose.msra.mxu0 %v1306
        %2361 = vmatprep.subr.mxu0 0.0
        %2362 = vmatpush1.xpose.msra.mxu0 %v1309
        %2363 = vmatprep.subr.mxu0 0.0
        %2364 = vmatpush1.xpose.msra.mxu0 %v1312
        %2365 = vmatprep.subr.mxu0 0.0
        %2366 = vmatpush1.xpose.msra.mxu0 %v1315
        %2367 = vmatprep.subr.mxu0 0.0
        %2368 = vmatpush1.xpose.msra.mxu0 %v1318
        %2369 = vmatprep.subr.mxu0 0.0
        %2370 = vmatpush1.xpose.msra.mxu0 %v1321
        %2371 = vmatprep.subr.mxu0 0.0
        %2372 = vmatpush1.xpose.msra.mxu0 %v1324
        %2373 = vmatprep.subr.mxu0 0.0
        %2374 = vmatpush1.xpose.msra.mxu0 %v1327
        %2375 = vmatprep.subr.mxu0 0.0
        %2376 = vmatpush1.xpose.msra.mxu0 %v1330
        %2377 = vmatprep.subr.mxu0 0.0
        %2378 = vmatpush1.xpose.msra.mxu0 %v1333
        %2379 = vmatprep.subr.mxu0 0.0
        %2380 = vmatpush1.xpose.msra.mxu0 %v1336
        %2381 = vmatprep.subr.mxu0 0.0
        %2382 = vmatpush1.xpose.msra.mxu0 %v1339
        %2383 = vmatprep.subr.mxu0 0.0
        %2384 = vmatpush1.xpose.msra.mxu0 %v1342
        %2385 = vmatprep.subr.mxu0 0.0
        %2386 = vmatpush1.xpose.msra.mxu0 %v1345
        %2387 = vmatprep.subr.mxu0 0.0
        %2388 = vmatpush1.xpose.msra.mxu0 %v1348
        %2389 = vmatprep.subr.mxu0 0.0
        %2390 = vmatpush1.xpose.msra.mxu0 %v1351
        %2391 = vmatprep.subr.mxu0 0.0
        %2392 = vmatpush1.xpose.msra.mxu0 %v1354
        %2393 = vmatprep.subr.mxu0 0.0
        %2394 = vmatpush1.xpose.msra.mxu0 %v1357
        %2395 = vmatprep.subr.mxu0 0.0
        %2396 = vmatpush1.xpose.msra.mxu0 %v1360
        %2397 = vmatprep.subr.mxu0 0.0
        %2398 = vmatpush1.xpose.msra.mxu0 %v1363
        %2399 = vmatprep.subr.mxu0 0.0
        %2400 = vmatpush1.xpose.msra.mxu0 %v1366
        %2401 = vmatprep.subr.mxu0 0.0
        %2402 = vmatpush1.xpose.msra.mxu0 %v1369
        %2403 = vmatprep.subr.mxu0 0.0
        %2404 = vmatpush1.xpose.msra.mxu0 %v1372
        %2405 = vmatprep.subr.mxu0 0.0
        %2406 = vmatpush1.xpose.msra.mxu0 %v1375
        %2407 = vmatprep.subr.mxu0 0.0
        %2408 = vmatpush1.xpose.msra.mxu0 %v1378
        %2409 = vmatprep.subr.mxu0 0.0
        %2410 = vmatpush1.xpose.msra.mxu0 %v1381
        %2411 = vmatprep.subr.mxu0 0.0
        %2412 = vmatpush1.xpose.msra.mxu0 %v1384
        %2413 = vmatprep.subr.mxu0 0.0
        %2414 = vmatpush1.xpose.msra.mxu0 %v1387
        %2415 = vmatprep.subr.mxu0 0.0
        %2416 = vmatpush1.xpose.msra.mxu0 %v1390
        %2417 = vmatprep.subr.mxu0 0.0
        %2418 = vmatpush1.xpose.msra.mxu0 %v1393
        %2419 = vmatprep.subr.mxu0 0.0
        %2420 = vmatpush1.xpose.msra.mxu0 %v1396
        %2421 = vmatprep.mubr.f32.mxu0 0.0
        %2422 = vmatmul.mubr.f32.gmra.mrb[0].mxu0 %v595
        %v2423 = vpop.f32.mrb[0].mxu0
        %v2424 = vadd.f32 %v536, %v2423
        %v2425 = vpop.f32.mrb[0].mxu0
        %v2426 = vadd.f32 %v536, %v2425
        %2427 = vmatprep.mubr.f32.mxu0 0.0
        %2428 = vmatmul.mubr.f32.gmra.mrb[0].mxu0 %v598
        %v2429 = vpop.f32.mrb[0].mxu0
        %v2430 = vadd.f32 %v541, %v2429
        %v2431 = vpop.f32.mrb[0].mxu0
        %v2432 = vadd.f32 %v541, %v2431
        %2433 = vmatprep.mubr.f32.mxu0 0.0
        %2434 = vmatmul.mubr.f32.gmra.mrb[0].mxu0 %v601
        %v2435 = vpop.f32.mrb[0].mxu0
        %v2436 = vadd.f32 %v546, %v2435
        %v2437 = vpop.f32.mrb[0].mxu0
        %v2438 = vadd.f32 %v546, %v2437
        %2439 = vmatprep.mubr.f32.mxu0 0.0
        %2440 = vmatmul.mubr.f32.gmra.mrb[0].mxu0 %v604
        %v2441 = vpop.f32.mrb[0].mxu0
        %v2442 = vadd.f32 %v551, %v2441
        %v2443 = vpop.f32.mrb[0].mxu0
        %v2444 = vadd.f32 %v551, %v2443
        %2445 = vmatprep.mubr.f32.mxu0 0.0
        %2446 = vmatmul.mubr.f32.gmra.mrb[0].mxu0 %v607
        %v2447 = vpop.f32.mrb[0].mxu0
        %v2448 = vadd.f32 %v556, %v2447
        %v2449 = vpop.f32.mrb[0].mxu0
        %v2450 = vadd.f32 %v556, %v2449
        %2451 = vmatprep.mubr.f32.mxu0 0.0
        %2452 = vmatmul.mubr.f32.gmra.mrb[0].mxu0 %v610
        %v2453 = vpop.f32.mrb[0].mxu0
        %v2454 = vadd.f32 %v561, %v2453
        %v2455 = vpop.f32.mrb[0].mxu0
        %v2456 = vadd.f32 %v561, %v2455
        %2457 = vmatprep.mubr.f32.mxu0 0.0
        %2458 = vmatmul.mubr.f32.gmra.mrb[0].mxu0 %v613
        %v2459 = vpop.f32.mrb[0].mxu0
        %v2460 = vadd.f32 %v566, %v2459
        %v2461 = vpop.f32.mrb[0].mxu0
        %v2462 = vadd.f32 %v566, %v2461
        %2463 = vmatprep.mubr.f32.mxu0 0.0
        %2464 = vmatmul.mubr.f32.gmra.mrb[0].mxu0 %v616
        %v2465 = vpop.f32.mrb[0].mxu0
        %v2466 = vadd.f32 %v571, %v2465
        %v2467 = vpop.f32.mrb[0].mxu0
        %v2468 = vadd.f32 %v571, %v2467
        %2469 = vmatprep.mubr.f32.mxu0 0.0
        %2470 = vmatmul.mubr.f32.gmra.mrb[0].mxu0 %v619
        %v2471 = vpop.f32.mrb[0].mxu0
        %v2472 = vadd.f32 %v576, %v2471
        %v2473 = vpop.f32.mrb[0].mxu0
        %v2474 = vadd.f32 %v576, %v2473
        %2475 = vmatprep.mubr.f32.mxu0 0.0
        %2476 = vmatmul.mubr.f32.gmra.mrb[0].mxu0 %v622
        %v2477 = vpop.f32.mrb[0].mxu0
        %v2478 = vadd.f32 %v581, %v2477
        %v2479 = vpop.f32.mrb[0].mxu0
        %v2480 = vadd.f32 %v581, %v2479
        %2481 = vmatprep.mubr.f32.mxu0 0.0
        %2482 = vmatmul.mubr.f32.gmra.mrb[0].mxu0 %v625
        %v2483 = vpop.f32.mrb[0].mxu0
        %v2484 = vadd.f32 %v586, %v2483
        %v2485 = vpop.f32.mrb[0].mxu0
        %v2486 = vadd.f32 %v586, %v2485
        %2487 = vmatprep.mubr.f32.mxu0 0.0
        %2488 = vmatmul.mubr.f32.gmra.mrb[0].mxu0 %v628
        %v2489 = vpop.f32.mrb[0].mxu0
        %v2490 = vadd.f32 %v591, %v2489
        %v2491 = vpop.f32.mrb[0].mxu0
        %v2492 = vadd.f32 %v591, %v2491
        %2493 = vdwg.mxu0
        %v2494 = vtanh.pop %v1465
        %v2495 = vtanh.pop %v1467
        %v2496 = vtanh.pop %v1602
        %v2497 = vtanh.pop %v1604
        %v2498 = vtanh.pop %v1739
        %v2499 = vtanh.pop %v1741
        %v2500 = vtanh.pop %v1876
        %v2501 = vtanh.pop %v1878
        %v2502 = vtanh.pop %v2013
        %v2503 = vtanh.pop %v2015
        %v2504 = vtanh.pop %v2150
        %v2505 = vtanh.pop %v2152
        %v2506 = vtanh.pop %v2287
        %v2507 = vtanh.pop %v2289
        %v2508 = vtanh.pop %v2424
        %v2509 = vtanh.pop %v2426
        %v2510 = vtanh.pop %v1471
        %v2511 = vtanh.pop %v1473
        %v2512 = vtanh.pop %v1608
        %v2513 = vtanh.pop %v1610
        %v2514 = vtanh.pop %v1745
        %v2515 = vtanh.pop %v1747
        %v2516 = vtanh.pop %v1882
        %v2517 = vtanh.pop %v1884
        %v2518 = vtanh.pop %v2019
        %v2519 = vtanh.pop %v2021
        %v2520 = vtanh.pop %v2156
        %v2521 = vtanh.pop %v2158
        %v2522 = vtanh.pop %v2293
        %v2523 = vtanh.pop %v2295
        %v2524 = vtanh.pop %v2430
        %v2525 = vtanh.pop %v2432
        %v2526 = vtanh.pop %v1477
        %v2527 = vtanh.pop %v1479
        %v2528 = vtanh.pop %v1614
        %v2529 = vtanh.pop %v1616
        %v2530 = vtanh.pop %v1751
        %v2531 = vtanh.pop %v1753
        %v2532 = vtanh.pop %v1888
        %v2533 = vtanh.pop %v1890
        %v2534 = vtanh.pop %v2025
        %v2535 = vtanh.pop %v2027
        %v2536 = vtanh.pop %v2162
        %v2537 = vtanh.pop %v2164
        %v2538 = vtanh.pop %v2299
        %v2539 = vtanh.pop %v2301
        %v2540 = vtanh.pop %v2436
        %v2541 = vtanh.pop %v2438
        %v2542 = vtanh.pop %v1483
        %v2543 = vtanh.pop %v1485
        %v2544 = vtanh.pop %v1620
        %v2545 = vtanh.pop %v1622
        %v2546 = vtanh.pop %v1757
        %v2547 = vtanh.pop %v1759
        %v2548 = vtanh.pop %v1894
        %v2549 = vtanh.pop %v1896
        %v2550 = vtanh.pop %v2031
        %v2551 = vtanh.pop %v2033
        %v2552 = vtanh.pop %v2168
        %v2553 = vtanh.pop %v2170
        %v2554 = vtanh.pop %v2305
        %v2555 = vtanh.pop %v2307
        %v2556 = vtanh.pop %v2442
        %v2557 = vtanh.pop %v2444
        %v2558 = vtanh.pop %v1489
        %v2559 = vtanh.pop %v1491
        %v2560 = vtanh.pop %v1626
        %v2561 = vtanh.pop %v1628
        %v2562 = vtanh.pop %v1763
        %v2563 = vtanh.pop %v1765
        %v2564 = vtanh.pop %v1900
        %v2565 = vtanh.pop %v1902
        %v2566 = vtanh.pop %v2037
        %v2567 = vtanh.pop %v2039
        %v2568 = vtanh.pop %v2174
        %v2569 = vtanh.pop %v2176
        %v2570 = vtanh.pop %v2311
        %v2571 = vtanh.pop %v2313
        %v2572 = vtanh.pop %v2448
        %v2573 = vtanh.pop %v2450
        %v2574 = vtanh.pop %v1495
        %v2575 = vtanh.pop %v1497
        %v2576 = vtanh.pop %v1632
        %v2577 = vtanh.pop %v1634
        %v2578 = vtanh.pop %v1769
        %v2579 = vtanh.pop %v1771
        %v2580 = vtanh.pop %v1906
        %v2581 = vtanh.pop %v1908
        %v2582 = vtanh.pop %v2043
        %v2583 = vtanh.pop %v2045
        %v2584 = vtanh.pop %v2180
        %v2585 = vtanh.pop %v2182
        %v2586 = vtanh.pop %v2317
        %v2587 = vtanh.pop %v2319
        %v2588 = vtanh.pop %v2454
        %v2589 = vtanh.pop %v2456
        %v2590 = vtanh.pop %v1501
        %v2591 = vtanh.pop %v1503
        %v2592 = vtanh.pop %v1638
        %v2593 = vtanh.pop %v1640
        %v2594 = vtanh.pop %v1775
        %v2595 = vtanh.pop %v1777
        %v2596 = vtanh.pop %v1912
        %v2597 = vtanh.pop %v1914
        %v2598 = vtanh.pop %v2049
        %v2599 = vtanh.pop %v2051
        %v2600 = vtanh.pop %v2186
        %v2601 = vtanh.pop %v2188
        %v2602 = vtanh.pop %v2323
        %v2603 = vtanh.pop %v2325
        %v2604 = vtanh.pop %v2460
        %v2605 = vtanh.pop %v2462
        %v2606 = vtanh.pop %v1507
        %v2607 = vtanh.pop %v1509
        %v2608 = vtanh.pop %v1644
        %v2609 = vtanh.pop %v1646
        %v2610 = vtanh.pop %v1781
        %v2611 = vtanh.pop %v1783
        %v2612 = vtanh.pop %v1918
        %v2613 = vtanh.pop %v1920
        %v2614 = vtanh.pop %v2055
        %v2615 = vtanh.pop %v2057
        %v2616 = vtanh.pop %v2192
        %v2617 = vtanh.pop %v2194
        %v2618 = vtanh.pop %v2329
        %v2619 = vtanh.pop %v2331
        %v2620 = vtanh.pop %v2466
        %v2621 = vtanh.pop %v2468
        %v2622 = vtanh.pop %v1513
        %v2623 = vtanh.pop %v1515
        %v2624 = vtanh.pop %v1650
        %v2625 = vtanh.pop %v1652
        %v2626 = vtanh.pop %v1787
        %v2627 = vtanh.pop %v1789
        %v2628 = vtanh.pop %v1924
        %v2629 = vtanh.pop %v1926
        %v2630 = vtanh.pop %v2061
        %v2631 = vtanh.pop %v2063
        %v2632 = vtanh.pop %v2198
        %v2633 = vtanh.pop %v2200
        %v2634 = vtanh.pop %v2335
        %v2635 = vtanh.pop %v2337
        %v2636 = vtanh.pop %v2472
        %v2637 = vtanh.pop %v2474
        %v2638 = vtanh.pop %v1519
        %v2639 = vtanh.pop %v1521
        %v2640 = vtanh.pop %v1656
        %v2641 = vtanh.pop %v1658
        %v2642 = vtanh.pop %v1793
        %v2643 = vtanh.pop %v1795
        %v2644 = vtanh.pop %v1930
        %v2645 = vtanh.pop %v1932
        %v2646 = vtanh.pop %v2067
        %v2647 = vtanh.pop %v2069
        %v2648 = vtanh.pop %v2204
        %v2649 = vtanh.pop %v2206
        %v2650 = vtanh.pop %v2341
        %v2651 = vtanh.pop %v2343
        %v2652 = vtanh.pop %v2478
        %v2653 = vtanh.pop %v2480
        %v2654 = vtanh.pop %v1525
        %v2655 = vtanh.pop %v1527
        %v2656 = vtanh.pop %v1662
        %v2657 = vtanh.pop %v1664
        %v2658 = vtanh.pop %v1799
        %v2659 = vtanh.pop %v1801
        %v2660 = vtanh.pop %v1936
        %v2661 = vtanh.pop %v1938
        %v2662 = vtanh.pop %v2073
        %v2663 = vtanh.pop %v2075
        %v2664 = vtanh.pop %v2210
        %v2665 = vtanh.pop %v2212
        %v2666 = vtanh.pop %v2347
        %v2667 = vtanh.pop %v2349
        %v2668 = vtanh.pop %v2484
        %v2669 = vtanh.pop %v2486
        %v2670 = vtanh.pop %v1531
        %v2671 = vtanh.pop %v1533
        %v2672 = vtanh.pop %v1668
        %v2673 = vtanh.pop %v1670
        %v2674 = vtanh.pop %v1805
        %v2675 = vtanh.pop %v1807
        %v2676 = vtanh.pop %v1942
        %v2677 = vtanh.pop %v1944
        %v2678 = vtanh.pop %v2079
        %v2679 = vtanh.pop %v2081
        %v2680 = vtanh.pop %v2216
        %v2681 = vtanh.pop %v2218
        %v2682 = vtanh.pop %v2353
        %v2683 = vtanh.pop %v2355
        %v2684 = vtanh.pop %v2490
        %v2685 = vtanh.pop %v2492
        %v2686 = vsub.f32 %v2558, %v2494
        %v2687 = vsub.f32 %v2559, %v2495
        %v2688 = vsub.f32 %v2560, %v2496
        %v2689 = vsub.f32 %v2561, %v2497
        %v2690 = vsub.f32 %v2562, %v2498
        %v2691 = vsub.f32 %v2563, %v2499
        %v2692 = vsub.f32 %v2564, %v2500
        %v2693 = vsub.f32 %v2565, %v2501
        %v2694 = vsub.f32 %v2566, %v2502
        %v2695 = vsub.f32 %v2567, %v2503
        %v2696 = vsub.f32 %v2568, %v2504
        %v2697 = vsub.f32 %v2569, %v2505
        %v2698 = vsub.f32 %v2570, %v2506
        %v2699 = vsub.f32 %v2571, %v2507
        %v2700 = vsub.f32 %v2572, %v2508
        %v2701 = vsub.f32 %v2573, %v2509
        %v2702 = vsub.f32 %v2574, %v2510
        %v2703 = vsub.f32 %v2575, %v2511
        %v2704 = vsub.f32 %v2576, %v2512
        %v2705 = vsub.f32 %v2577, %v2513
        %v2706 = vsub.f32 %v2578, %v2514
        %v2707 = vsub.f32 %v2579, %v2515
        %v2708 = vsub.f32 %v2580, %v2516
        %v2709 = vsub.f32 %v2581, %v2517
        %v2710 = vsub.f32 %v2582, %v2518
        %v2711 = vsub.f32 %v2583, %v2519
        %v2712 = vsub.f32 %v2584, %v2520
        %v2713 = vsub.f32 %v2585, %v2521
        %v2714 = vsub.f32 %v2586, %v2522
        %v2715 = vsub.f32 %v2587, %v2523
        %v2716 = vsub.f32 %v2588, %v2524
        %v2717 = vsub.f32 %v2589, %v2525
        %v2718 = vsub.f32 %v2590, %v2526
        %v2719 = vsub.f32 %v2591, %v2527
        %v2720 = vsub.f32 %v2592, %v2528
        %v2721 = vsub.f32 %v2593, %v2529
        %v2722 = vsub.f32 %v2594, %v2530
        %v2723 = vsub.f32 %v2595, %v2531
        %v2724 = vsub.f32 %v2596, %v2532
        %v2725 = vsub.f32 %v2597, %v2533
        %v2726 = vsub.f32 %v2598, %v2534
        %v2727 = vsub.f32 %v2599, %v2535
        %v2728 = vsub.f32 %v2600, %v2536
        %v2729 = vsub.f32 %v2601, %v2537
        %v2730 = vsub.f32 %v2602, %v2538
        %v2731 = vsub.f32 %v2603, %v2539
        %v2732 = vsub.f32 %v2604, %v2540
        %v2733 = vsub.f32 %v2605, %v2541
        %v2734 = vsub.f32 %v2606, %v2542
        %v2735 = vsub.f32 %v2607, %v2543
        %v2736 = vsub.f32 %v2608, %v2544
        %v2737 = vsub.f32 %v2609, %v2545
        %v2738 = vsub.f32 %v2610, %v2546
        %v2739 = vsub.f32 %v2611, %v2547
        %v2740 = vsub.f32 %v2612, %v2548
        %v2741 = vsub.f32 %v2613, %v2549
        %v2742 = vsub.f32 %v2614, %v2550
        %v2743 = vsub.f32 %v2615, %v2551
        %v2744 = vsub.f32 %v2616, %v2552
        %v2745 = vsub.f32 %v2617, %v2553
        %v2746 = vsub.f32 %v2618, %v2554
        %v2747 = vsub.f32 %v2619, %v2555
        %v2748 = vsub.f32 %v2620, %v2556
        %v2749 = vsub.f32 %v2621, %v2557
        %v2750 = vmul.f32 %v2686, 0.5
        %v2751 = vmul.f32 %v2687, 0.5
        %v2752 = vmul.f32 %v2688, 0.5
        %v2753 = vmul.f32 %v2689, 0.5
        %v2754 = vmul.f32 %v2690, 0.5
        %v2755 = vmul.f32 %v2691, 0.5
        %v2756 = vmul.f32 %v2692, 0.5
        %v2757 = vmul.f32 %v2693, 0.5
        %v2758 = vmul.f32 %v2694, 0.5
        %v2759 = vmul.f32 %v2695, 0.5
        %v2760 = vmul.f32 %v2696, 0.5
        %v2761 = vmul.f32 %v2697, 0.5
        %v2762 = vmul.f32 %v2698, 0.5
        %v2763 = vmul.f32 %v2699, 0.5
        %v2764 = vmul.f32 %v2700, 0.5
        %v2765 = vmul.f32 %v2701, 0.5
        %v2766 = vmul.f32 %v2702, 0.5
        %v2767 = vmul.f32 %v2703, 0.5
        %v2768 = vmul.f32 %v2704, 0.5
        %v2769 = vmul.f32 %v2705, 0.5
        %v2770 = vmul.f32 %v2706, 0.5
        %v2771 = vmul.f32 %v2707, 0.5
        %v2772 = vmul.f32 %v2708, 0.5
        %v2773 = vmul.f32 %v2709, 0.5
        %v2774 = vmul.f32 %v2710, 0.5
        %v2775 = vmul.f32 %v2711, 0.5
        %v2776 = vmul.f32 %v2712, 0.5
        %v2777 = vmul.f32 %v2713, 0.5
        %v2778 = vmul.f32 %v2714, 0.5
        %v2779 = vmul.f32 %v2715, 0.5
        %v2780 = vmul.f32 %v2716, 0.5
        %v2781 = vmul.f32 %v2717, 0.5
        %v2782 = vmul.f32 %v2718, 0.5
        %v2783 = vmul.f32 %v2719, 0.5
        %v2784 = vmul.f32 %v2720, 0.5
        %v2785 = vmul.f32 %v2721, 0.5
        %v2786 = vmul.f32 %v2722, 0.5
        %v2787 = vmul.f32 %v2723, 0.5
        %v2788 = vmul.f32 %v2724, 0.5
        %v2789 = vmul.f32 %v2725, 0.5
        %v2790 = vmul.f32 %v2726, 0.5
        %v2791 = vmul.f32 %v2727, 0.5
        %v2792 = vmul.f32 %v2728, 0.5
        %v2793 = vmul.f32 %v2729, 0.5
        %v2794 = vmul.f32 %v2730, 0.5
        %v2795 = vmul.f32 %v2731, 0.5
        %v2796 = vmul.f32 %v2732, 0.5
        %v2797 = vmul.f32 %v2733, 0.5
        %v2798 = vmul.f32 %v2734, 0.5
        %v2799 = vmul.f32 %v2735, 0.5
        %v2800 = vmul.f32 %v2736, 0.5
        %v2801 = vmul.f32 %v2737, 0.5
        %v2802 = vmul.f32 %v2738, 0.5
        %v2803 = vmul.f32 %v2739, 0.5
        %v2804 = vmul.f32 %v2740, 0.5
        %v2805 = vmul.f32 %v2741, 0.5
        %v2806 = vmul.f32 %v2742, 0.5
        %v2807 = vmul.f32 %v2743, 0.5
        %v2808 = vmul.f32 %v2744, 0.5
        %v2809 = vmul.f32 %v2745, 0.5
        %v2810 = vmul.f32 %v2746, 0.5
        %v2811 = vmul.f32 %v2747, 0.5
        %v2812 = vmul.f32 %v2748, 0.5
        %v2813 = vmul.f32 %v2749, 0.5
        %v2814 = vmul.f32 %v2622, %v2750
        %v2815 = vmul.f32 %v2623, %v2751
        %v2816 = vmul.f32 %v2624, %v2752
        %v2817 = vmul.f32 %v2625, %v2753
        %v2818 = vmul.f32 %v2626, %v2754
        %v2819 = vmul.f32 %v2627, %v2755
        %v2820 = vmul.f32 %v2628, %v2756
        %v2821 = vmul.f32 %v2629, %v2757
        %v2822 = vmul.f32 %v2630, %v2758
        %v2823 = vmul.f32 %v2631, %v2759
        %v2824 = vmul.f32 %v2632, %v2760
        %v2825 = vmul.f32 %v2633, %v2761
        %v2826 = vmul.f32 %v2634, %v2762
        %v2827 = vmul.f32 %v2635, %v2763
        %v2828 = vmul.f32 %v2636, %v2764
        %v2829 = vmul.f32 %v2637, %v2765
        %v2830 = vmul.f32 %v2638, %v2766
        %v2831 = vmul.f32 %v2639, %v2767
        %v2832 = vmul.f32 %v2640, %v2768
        %v2833 = vmul.f32 %v2641, %v2769
        %v2834 = vmul.f32 %v2642, %v2770
        %v2835 = vmul.f32 %v2643, %v2771
        %v2836 = vmul.f32 %v2644, %v2772
        %v2837 = vmul.f32 %v2645, %v2773
        %v2838 = vmul.f32 %v2646, %v2774
        %v2839 = vmul.f32 %v2647, %v2775
        %v2840 = vmul.f32 %v2648, %v2776
        %v2841 = vmul.f32 %v2649, %v2777
        %v2842 = vmul.f32 %v2650, %v2778
        %v2843 = vmul.f32 %v2651, %v2779
        %v2844 = vmul.f32 %v2652, %v2780
        %v2845 = vmul.f32 %v2653, %v2781
        %v2846 = vmul.f32 %v2654, %v2782
        %v2847 = vmul.f32 %v2655, %v2783
        %v2848 = vmul.f32 %v2656, %v2784
        %v2849 = vmul.f32 %v2657, %v2785
        %v2850 = vmul.f32 %v2658, %v2786
        %v2851 = vmul.f32 %v2659, %v2787
        %v2852 = vmul.f32 %v2660, %v2788
        %v2853 = vmul.f32 %v2661, %v2789
        %v2854 = vmul.f32 %v2662, %v2790
        %v2855 = vmul.f32 %v2663, %v2791
        %v2856 = vmul.f32 %v2664, %v2792
        %v2857 = vmul.f32 %v2665, %v2793
        %v2858 = vmul.f32 %v2666, %v2794
        %v2859 = vmul.f32 %v2667, %v2795
        %v2860 = vmul.f32 %v2668, %v2796
        %v2861 = vmul.f32 %v2669, %v2797
        %v2862 = vmul.f32 %v2670, %v2798
        %v2863 = vmul.f32 %v2671, %v2799
        %v2864 = vmul.f32 %v2672, %v2800
        %v2865 = vmul.f32 %v2673, %v2801
        %v2866 = vmul.f32 %v2674, %v2802
        %v2867 = vmul.f32 %v2675, %v2803
        %v2868 = vmul.f32 %v2676, %v2804
        %v2869 = vmul.f32 %v2677, %v2805
        %v2870 = vmul.f32 %v2678, %v2806
        %v2871 = vmul.f32 %v2679, %v2807
        %v2872 = vmul.f32 %v2680, %v2808
        %v2873 = vmul.f32 %v2681, %v2809
        %v2874 = vmul.f32 %v2682, %v2810
        %v2875 = vmul.f32 %v2683, %v2811
        %v2876 = vmul.f32 %v2684, %v2812
        %v2877 = vmul.f32 %v2685, %v2813
        %v2878 = vadd.f32 %v2494, %v2814
        %v2879 = vadd.f32 %v2495, %v2815
        %v2880 = vadd.f32 %v2496, %v2816
        %v2881 = vadd.f32 %v2497, %v2817
        %v2882 = vadd.f32 %v2498, %v2818
        %v2883 = vadd.f32 %v2499, %v2819
        %v2884 = vadd.f32 %v2500, %v2820
        %v2885 = vadd.f32 %v2501, %v2821
        %v2886 = vadd.f32 %v2502, %v2822
        %v2887 = vadd.f32 %v2503, %v2823
        %v2888 = vadd.f32 %v2504, %v2824
        %v2889 = vadd.f32 %v2505, %v2825
        %v2890 = vadd.f32 %v2506, %v2826
        %v2891 = vadd.f32 %v2507, %v2827
        %v2892 = vadd.f32 %v2508, %v2828
        %v2893 = vadd.f32 %v2509, %v2829
        %v2894 = vadd.f32 %v2510, %v2830
        %v2895 = vadd.f32 %v2511, %v2831
        %v2896 = vadd.f32 %v2512, %v2832
        %v2897 = vadd.f32 %v2513, %v2833
        %v2898 = vadd.f32 %v2514, %v2834
        %v2899 = vadd.f32 %v2515, %v2835
        %v2900 = vadd.f32 %v2516, %v2836
        %v2901 = vadd.f32 %v2517, %v2837
        %v2902 = vadd.f32 %v2518, %v2838
        %v2903 = vadd.f32 %v2519, %v2839
        %v2904 = vadd.f32 %v2520, %v2840
        %v2905 = vadd.f32 %v2521, %v2841
        %v2906 = vadd.f32 %v2522, %v2842
        %v2907 = vadd.f32 %v2523, %v2843
        %v2908 = vadd.f32 %v2524, %v2844
        %v2909 = vadd.f32 %v2525, %v2845
        %v2910 = vadd.f32 %v2526, %v2846
        %v2911 = vadd.f32 %v2527, %v2847
        %v2912 = vadd.f32 %v2528, %v2848
        %v2913 = vadd.f32 %v2529, %v2849
        %v2914 = vadd.f32 %v2530, %v2850
        %v2915 = vadd.f32 %v2531, %v2851
        %v2916 = vadd.f32 %v2532, %v2852
        %v2917 = vadd.f32 %v2533, %v2853
        %v2918 = vadd.f32 %v2534, %v2854
        %v2919 = vadd.f32 %v2535, %v2855
        %v2920 = vadd.f32 %v2536, %v2856
        %v2921 = vadd.f32 %v2537, %v2857
        %v2922 = vadd.f32 %v2538, %v2858
        %v2923 = vadd.f32 %v2539, %v2859
        %v2924 = vadd.f32 %v2540, %v2860
        %v2925 = vadd.f32 %v2541, %v2861
        %v2926 = vadd.f32 %v2542, %v2862
        %v2927 = vadd.f32 %v2543, %v2863
        %v2928 = vadd.f32 %v2544, %v2864
        %v2929 = vadd.f32 %v2545, %v2865
        %v2930 = vadd.f32 %v2546, %v2866
        %v2931 = vadd.f32 %v2547, %v2867
        %v2932 = vadd.f32 %v2548, %v2868
        %v2933 = vadd.f32 %v2549, %v2869
        %v2934 = vadd.f32 %v2550, %v2870
        %v2935 = vadd.f32 %v2551, %v2871
        %v2936 = vadd.f32 %v2552, %v2872
        %v2937 = vadd.f32 %v2553, %v2873
        %v2938 = vadd.f32 %v2554, %v2874
        %v2939 = vadd.f32 %v2555, %v2875
        %v2940 = vadd.f32 %v2556, %v2876
        %v2941 = vadd.f32 %v2557, %v2877
        %v2942 = vld [vmem:[%s3] sm:$0xff]
        %v2943 = vld [vmem:[%s3 + $0x8] sm:$0xff]
        %v2944 = vld [vmem:[%s3 + $0x10] sm:$0xff]
        %v2945 = vld [vmem:[%s3 + $0x18] sm:$0xff]
        %v2946 = vld [vmem:[%s4] sm:$0xff]
        %v2947 = vld [vmem:[%s4 + $0x8] sm:$0xff]
        %v2948 = vld [vmem:[%s4 + $0x10] sm:$0xff]
        %v2949 = vld [vmem:[%s4 + $0x18] sm:$0xff]
        %2951 = vset.pattern.permute.xlu0 0
        %2952 = vperm.xlu0 %2951, %v2946
        %v2953 = vpop.permute.xlu0 %2952
        %2956 = vset.pattern.permute.xlu0 0
        %2957 = vperm.xlu0 %2956, %v2947
        %v2958 = vpop.permute.xlu0 %2957
        %2961 = vset.pattern.permute.xlu0 0
        %2962 = vperm.xlu0 %2961, %v2948
        %v2963 = vpop.permute.xlu0 %2962
        %2966 = vset.pattern.permute.xlu0 0
        %2967 = vperm.xlu0 %2966, %v2949
        %v2968 = vpop.permute.xlu0 %2967
        %vm2970 = vcmask 261120
        %v2972 = vsel %vm2970, %v2942, 0
        %v2975 = vsel %vm2970, %v2943, 0
        %v2978 = vsel %vm2970, %v2944, 0
        %v2981 = vsel %vm2970, %v2945, 0
        %2983 = vmatprep.subr.mxu0 %v2879
        %2984 = vmatpush1.msra.mxu0 %v2878
        %2985 = vmatprep.subr.mxu0 %v2895
        %2986 = vmatpush1.msra.mxu0 %v2894
        %2987 = vmatprep.subr.mxu0 %v2911
        %2988 = vmatpush1.msra.mxu0 %v2910
        %2989 = vmatprep.subr.mxu0 %v2927
        %2990 = vmatpush1.msra.mxu0 %v2926
        %2991 = vmatprep.subr.mxu0 0.0
        %2992 = vmatpush1.msra.mxu0 0.0
        %2993 = vmatprep.subr.mxu0 0.0
        %2994 = vmatpush1.msra.mxu0 0.0
        %2995 = vmatprep.subr.mxu0 0.0
        %2996 = vmatpush1.msra.mxu0 0.0
        %2997 = vmatprep.subr.mxu0 0.0
        %2998 = vmatpush1.msra.mxu0 0.0
        %2999 = vmatprep.subr.mxu0 0.0
        %3000 = vmatpush1.msra.mxu0 0.0
        %3001 = vmatprep.subr.mxu0 0.0
        %3002 = vmatpush1.msra.mxu0 0.0
        %3003 = vmatprep.subr.mxu0 0.0
        %3004 = vmatpush1.msra.mxu0 0.0
        %3005 = vmatprep.subr.mxu0 0.0
        %3006 = vmatpush1.msra.mxu0 0.0
        %3007 = vmatprep.subr.mxu0 0.0
        %3008 = vmatpush1.msra.mxu0 0.0
        %3009 = vmatprep.subr.mxu0 0.0
        %3010 = vmatpush1.msra.mxu0 0.0
        %3011 = vmatprep.subr.mxu0 0.0
        %3012 = vmatpush1.msra.mxu0 0.0
        %3013 = vmatprep.subr.mxu0 0.0
        %3014 = vmatpush1.msra.mxu0 0.0
        %3015 = vmatprep.subr.mxu0 0.0
        %3016 = vmatpush1.msra.mxu0 0.0
        %3017 = vmatprep.subr.mxu0 0.0
        %3018 = vmatpush1.msra.mxu0 0.0
        %3019 = vmatprep.subr.mxu0 0.0
        %3020 = vmatpush1.msra.mxu0 0.0
        %3021 = vmatprep.subr.mxu0 0.0
        %3022 = vmatpush1.msra.mxu0 0.0
        %3023 = vmatprep.subr.mxu0 0.0
        %3024 = vmatpush1.msra.mxu0 0.0
        %3025 = vmatprep.subr.mxu0 0.0
        %3026 = vmatpush1.msra.mxu0 0.0
        %3027 = vmatprep.subr.mxu0 0.0
        %3028 = vmatpush1.msra.mxu0 0.0
        %3029 = vmatprep.subr.mxu0 0.0
        %3030 = vmatpush1.msra.mxu0 0.0
        %3031 = vmatprep.subr.mxu0 0.0
        %3032 = vmatpush1.msra.mxu0 0.0
        %3033 = vmatprep.subr.mxu0 0.0
        %3034 = vmatpush1.msra.mxu0 0.0
        %3035 = vmatprep.subr.mxu0 0.0
        %3036 = vmatpush1.msra.mxu0 0.0
        %3037 = vmatprep.subr.mxu0 0.0
        %3038 = vmatpush1.msra.mxu0 0.0
        %3039 = vmatprep.subr.mxu0 0.0
        %3040 = vmatpush1.msra.mxu0 0.0
        %3041 = vmatprep.subr.mxu0 0.0
        %3042 = vmatpush1.msra.mxu0 0.0
        %3043 = vmatprep.subr.mxu0 0.0
        %3044 = vmatpush1.msra.mxu0 0.0
        %3045 = vmatprep.subr.mxu0 0.0
        %3046 = vmatpush1.msra.mxu0 0.0
        %3047 = vmatprep.mubr.f32.mxu0 0.0
        %3048 = vmatmul.mubr.f32.gmra.mrb[0].mxu0 %v2972
        %v3049 = vpop.f32.mrb[0].mxu0
        %v3050 = vadd.f32 %v2953, %v3049
        %v3051 = vpop.f32.mrb[0].mxu0
        %v3052 = vadd.f32 %v2953, %v3051
        %3053 = vmatprep.mubr.f32.mxu0 0.0
        %3054 = vmatmul.mubr.f32.gmra.mrb[0].mxu0 %v2975
        %v3055 = vpop.f32.mrb[0].mxu0
        %v3056 = vadd.f32 %v2958, %v3055
        %v3057 = vpop.f32.mrb[0].mxu0
        %v3058 = vadd.f32 %v2958, %v3057
        %3059 = vmatprep.mubr.f32.mxu0 0.0
        %3060 = vmatmul.mubr.f32.gmra.mrb[0].mxu0 %v2978
        %v3061 = vpop.f32.mrb[0].mxu0
        %v3062 = vadd.f32 %v2963, %v3061
        %v3063 = vpop.f32.mrb[0].mxu0
        %v3064 = vadd.f32 %v2963, %v3063
        %3065 = vmatprep.mubr.f32.mxu0 0.0
        %3066 = vmatmul.mubr.f32.gmra.mrb[0].mxu0 %v2981
        %v3067 = vpop.f32.mrb[0].mxu0
        %v3068 = vadd.f32 %v2968, %v3067
        %v3069 = vpop.f32.mrb[0].mxu0
        %v3070 = vadd.f32 %v2968, %v3069
        %3071 = vdwg.mxu0
        %3072 = vmatprep.subr.mxu0 %v2881
        %3073 = vmatpush1.msra.mxu0 %v2880
        %3074 = vmatprep.subr.mxu0 %v2897
        %3075 = vmatpush1.msra.mxu0 %v2896
        %3076 = vmatprep.subr.mxu0 %v2913
        %3077 = vmatpush1.msra.mxu0 %v2912
        %3078 = vmatprep.subr.mxu0 %v2929
        %3079 = vmatpush1.msra.mxu0 %v2928
        %3080 = vmatprep.subr.mxu0 0.0
        %3081 = vmatpush1.msra.mxu0 0.0
        %3082 = vmatprep.subr.mxu0 0.0
        %3083 = vmatpush1.msra.mxu0 0.0
        %3084 = vmatprep.subr.mxu0 0.0
        %3085 = vmatpush1.msra.mxu0 0.0
        %3086 = vmatprep.subr.mxu0 0.0
        %3087 = vmatpush1.msra.mxu0 0.0
        %3088 = vmatprep.subr.mxu0 0.0
        %3089 = vmatpush1.msra.mxu0 0.0
        %3090 = vmatprep.subr.mxu0 0.0
        %3091 = vmatpush1.msra.mxu0 0.0
        %3092 = vmatprep.subr.mxu0 0.0
        %3093 = vmatpush1.msra.mxu0 0.0
        %3094 = vmatprep.subr.mxu0 0.0
        %3095 = vmatpush1.msra.mxu0 0.0
        %3096 = vmatprep.subr.mxu0 0.0
        %3097 = vmatpush1.msra.mxu0 0.0
        %3098 = vmatprep.subr.mxu0 0.0
        %3099 = vmatpush1.msra.mxu0 0.0
        %3100 = vmatprep.subr.mxu0 0.0
        %3101 = vmatpush1.msra.mxu0 0.0
        %3102 = vmatprep.subr.mxu0 0.0
        %3103 = vmatpush1.msra.mxu0 0.0
        %3104 = vmatprep.subr.mxu0 0.0
        %3105 = vmatpush1.msra.mxu0 0.0
        %3106 = vmatprep.subr.mxu0 0.0
        %3107 = vmatpush1.msra.mxu0 0.0
        %3108 = vmatprep.subr.mxu0 0.0
        %3109 = vmatpush1.msra.mxu0 0.0
        %3110 = vmatprep.subr.mxu0 0.0
        %3111 = vmatpush1.msra.mxu0 0.0
        %3112 = vmatprep.subr.mxu0 0.0
        %3113 = vmatpush1.msra.mxu0 0.0
        %3114 = vmatprep.subr.mxu0 0.0
        %3115 = vmatpush1.msra.mxu0 0.0
        %3116 = vmatprep.subr.mxu0 0.0
        %3117 = vmatpush1.msra.mxu0 0.0
        %3118 = vmatprep.subr.mxu0 0.0
        %3119 = vmatpush1.msra.mxu0 0.0
        %3120 = vmatprep.subr.mxu0 0.0
        %3121 = vmatpush1.msra.mxu0 0.0
        %3122 = vmatprep.subr.mxu0 0.0
        %3123 = vmatpush1.msra.mxu0 0.0
        %3124 = vmatprep.subr.mxu0 0.0
        %3125 = vmatpush1.msra.mxu0 0.0
        %3126 = vmatprep.subr.mxu0 0.0
        %3127 = vmatpush1.msra.mxu0 0.0
        %3128 = vmatprep.subr.mxu0 0.0
        %3129 = vmatpush1.msra.mxu0 0.0
        %3130 = vmatprep.subr.mxu0 0.0
        %3131 = vmatpush1.msra.mxu0 0.0
        %3132 = vmatprep.subr.mxu0 0.0
        %3133 = vmatpush1.msra.mxu0 0.0
        %3134 = vmatprep.subr.mxu0 0.0
        %3135 = vmatpush1.msra.mxu0 0.0
        %3136 = vmatprep.mubr.f32.mxu0 0.0
        %3137 = vmatmul.mubr.f32.gmra.mrb[0].mxu0 %v2972
        %v3138 = vpop.f32.mrb[0].mxu0
        %v3139 = vadd.f32 %v2953, %v3138
        %v3140 = vpop.f32.mrb[0].mxu0
        %v3141 = vadd.f32 %v2953, %v3140
        %3142 = vmatprep.mubr.f32.mxu0 0.0
        %3143 = vmatmul.mubr.f32.gmra.mrb[0].mxu0 %v2975
        %v3144 = vpop.f32.mrb[0].mxu0
        %v3145 = vadd.f32 %v2958, %v3144
        %v3146 = vpop.f32.mrb[0].mxu0
        %v3147 = vadd.f32 %v2958, %v3146
        %3148 = vmatprep.mubr.f32.mxu0 0.0
        %3149 = vmatmul.mubr.f32.gmra.mrb[0].mxu0 %v2978
        %v3150 = vpop.f32.mrb[0].mxu0
        %v3151 = vadd.f32 %v2963, %v3150
        %v3152 = vpop.f32.mrb[0].mxu0
        %v3153 = vadd.f32 %v2963, %v3152
        %3154 = vmatprep.mubr.f32.mxu0 0.0
        %3155 = vmatmul.mubr.f32.gmra.mrb[0].mxu0 %v2981
        %v3156 = vpop.f32.mrb[0].mxu0
        %v3157 = vadd.f32 %v2968, %v3156
        %v3158 = vpop.f32.mrb[0].mxu0
        %v3159 = vadd.f32 %v2968, %v3158
        %3160 = vdwg.mxu0
        %3161 = vmatprep.subr.mxu0 %v2883
        %3162 = vmatpush1.msra.mxu0 %v2882
        %3163 = vmatprep.subr.mxu0 %v2899
        %3164 = vmatpush1.msra.mxu0 %v2898
        %3165 = vmatprep.subr.mxu0 %v2915
        %3166 = vmatpush1.msra.mxu0 %v2914
        %3167 = vmatprep.subr.mxu0 %v2931
        %3168 = vmatpush1.msra.mxu0 %v2930
        %3169 = vmatprep.subr.mxu0 0.0
        %3170 = vmatpush1.msra.mxu0 0.0
        %3171 = vmatprep.subr.mxu0 0.0
        %3172 = vmatpush1.msra.mxu0 0.0
        %3173 = vmatprep.subr.mxu0 0.0
        %3174 = vmatpush1.msra.mxu0 0.0
        %3175 = vmatprep.subr.mxu0 0.0
        %3176 = vmatpush1.msra.mxu0 0.0
        %3177 = vmatprep.subr.mxu0 0.0
        %3178 = vmatpush1.msra.mxu0 0.0
        %3179 = vmatprep.subr.mxu0 0.0
        %3180 = vmatpush1.msra.mxu0 0.0
        %3181 = vmatprep.subr.mxu0 0.0
        %3182 = vmatpush1.msra.mxu0 0.0
        %3183 = vmatprep.subr.mxu0 0.0
        %3184 = vmatpush1.msra.mxu0 0.0
        %3185 = vmatprep.subr.mxu0 0.0
        %3186 = vmatpush1.msra.mxu0 0.0
        %3187 = vmatprep.subr.mxu0 0.0
        %3188 = vmatpush1.msra.mxu0 0.0
        %3189 = vmatprep.subr.mxu0 0.0
        %3190 = vmatpush1.msra.mxu0 0.0
        %3191 = vmatprep.subr.mxu0 0.0
        %3192 = vmatpush1.msra.mxu0 0.0
        %3193 = vmatprep.subr.mxu0 0.0
        %3194 = vmatpush1.msra.mxu0 0.0
        %3195 = vmatprep.subr.mxu0 0.0
        %3196 = vmatpush1.msra.mxu0 0.0
        %3197 = vmatprep.subr.mxu0 0.0
        %3198 = vmatpush1.msra.mxu0 0.0
        %3199 = vmatprep.subr.mxu0 0.0
        %3200 = vmatpush1.msra.mxu0 0.0
        %3201 = vmatprep.subr.mxu0 0.0
        %3202 = vmatpush1.msra.mxu0 0.0
        %3203 = vmatprep.subr.mxu0 0.0
        %3204 = vmatpush1.msra.mxu0 0.0
        %3205 = vmatprep.subr.mxu0 0.0
        %3206 = vmatpush1.msra.mxu0 0.0
        %3207 = vmatprep.subr.mxu0 0.0
        %3208 = vmatpush1.msra.mxu0 0.0
        %3209 = vmatprep.subr.mxu0 0.0
        %3210 = vmatpush1.msra.mxu0 0.0
        %3211 = vmatprep.subr.mxu0 0.0
        %3212 = vmatpush1.msra.mxu0 0.0
        %3213 = vmatprep.subr.mxu0 0.0
        %3214 = vmatpush1.msra.mxu0 0.0
        %3215 = vmatprep.subr.mxu0 0.0
        %3216 = vmatpush1.msra.mxu0 0.0
        %3217 = vmatprep.subr.mxu0 0.0
        %3218 = vmatpush1.msra.mxu0 0.0
        %3219 = vmatprep.subr.mxu0 0.0
        %3220 = vmatpush1.msra.mxu0 0.0
        %3221 = vmatprep.subr.mxu0 0.0
        %3222 = vmatpush1.msra.mxu0 0.0
        %3223 = vmatprep.subr.mxu0 0.0
        %3224 = vmatpush1.msra.mxu0 0.0
        %3225 = vmatprep.mubr.f32.mxu0 0.0
        %3226 = vmatmul.mubr.f32.gmra.mrb[0].mxu0 %v2972
        %v3227 = vpop.f32.mrb[0].mxu0
        %v3228 = vadd.f32 %v2953, %v3227
        %v3229 = vpop.f32.mrb[0].mxu0
        %v3230 = vadd.f32 %v2953, %v3229
        %3231 = vmatprep.mubr.f32.mxu0 0.0
        %3232 = vmatmul.mubr.f32.gmra.mrb[0].mxu0 %v2975
        %v3233 = vpop.f32.mrb[0].mxu0
        %v3234 = vadd.f32 %v2958, %v3233
        %v3235 = vpop.f32.mrb[0].mxu0
        %v3236 = vadd.f32 %v2958, %v3235
        %3237 = vmatprep.mubr.f32.mxu0 0.0
        %3238 = vmatmul.mubr.f32.gmra.mrb[0].mxu0 %v2978
        %v3239 = vpop.f32.mrb[0].mxu0
        %v3240 = vadd.f32 %v2963, %v3239
        %v3241 = vpop.f32.mrb[0].mxu0
        %v3242 = vadd.f32 %v2963, %v3241
        %3243 = vmatprep.mubr.f32.mxu0 0.0
        %3244 = vmatmul.mubr.f32.gmra.mrb[0].mxu0 %v2981
        %v3245 = vpop.f32.mrb[0].mxu0
        %v3246 = vadd.f32 %v2968, %v3245
        %v3247 = vpop.f32.mrb[0].mxu0
        %v3248 = vadd.f32 %v2968, %v3247
        %3249 = vdwg.mxu0
        %3250 = vmatprep.subr.mxu0 %v2885
        %3251 = vmatpush1.msra.mxu0 %v2884
        %3252 = vmatprep.subr.mxu0 %v2901
        %3253 = vmatpush1.msra.mxu0 %v2900
        %3254 = vmatprep.subr.mxu0 %v2917
        %3255 = vmatpush1.msra.mxu0 %v2916
        %3256 = vmatprep.subr.mxu0 %v2933
        %3257 = vmatpush1.msra.mxu0 %v2932
        %3258 = vmatprep.subr.mxu0 0.0
        %3259 = vmatpush1.msra.mxu0 0.0
        %3260 = vmatprep.subr.mxu0 0.0
        %3261 = vmatpush1.msra.mxu0 0.0
        %3262 = vmatprep.subr.mxu0 0.0
        %3263 = vmatpush1.msra.mxu0 0.0
        %3264 = vmatprep.subr.mxu0 0.0
        %3265 = vmatpush1.msra.mxu0 0.0
        %3266 = vmatprep.subr.mxu0 0.0
        %3267 = vmatpush1.msra.mxu0 0.0
        %3268 = vmatprep.subr.mxu0 0.0
        %3269 = vmatpush1.msra.mxu0 0.0
        %3270 = vmatprep.subr.mxu0 0.0
        %3271 = vmatpush1.msra.mxu0 0.0
        %3272 = vmatprep.subr.mxu0 0.0
        %3273 = vmatpush1.msra.mxu0 0.0
        %3274 = vmatprep.subr.mxu0 0.0
        %3275 = vmatpush1.msra.mxu0 0.0
        %3276 = vmatprep.subr.mxu0 0.0
        %3277 = vmatpush1.msra.mxu0 0.0
        %3278 = vmatprep.subr.mxu0 0.0
        %3279 = vmatpush1.msra.mxu0 0.0
        %3280 = vmatprep.subr.mxu0 0.0
        %3281 = vmatpush1.msra.mxu0 0.0
        %3282 = vmatprep.subr.mxu0 0.0
        %3283 = vmatpush1.msra.mxu0 0.0
        %3284 = vmatprep.subr.mxu0 0.0
        %3285 = vmatpush1.msra.mxu0 0.0
        %3286 = vmatprep.subr.mxu0 0.0
        %3287 = vmatpush1.msra.mxu0 0.0
        %3288 = vmatprep.subr.mxu0 0.0
        %3289 = vmatpush1.msra.mxu0 0.0
        %3290 = vmatprep.subr.mxu0 0.0
        %3291 = vmatpush1.msra.mxu0 0.0
        %3292 = vmatprep.subr.mxu0 0.0
        %3293 = vmatpush1.msra.mxu0 0.0
        %3294 = vmatprep.subr.mxu0 0.0
        %3295 = vmatpush1.msra.mxu0 0.0
        %3296 = vmatprep.subr.mxu0 0.0
        %3297 = vmatpush1.msra.mxu0 0.0
        %3298 = vmatprep.subr.mxu0 0.0
        %3299 = vmatpush1.msra.mxu0 0.0
        %3300 = vmatprep.subr.mxu0 0.0
        %3301 = vmatpush1.msra.mxu0 0.0
        %3302 = vmatprep.subr.mxu0 0.0
        %3303 = vmatpush1.msra.mxu0 0.0
        %3304 = vmatprep.subr.mxu0 0.0
        %3305 = vmatpush1.msra.mxu0 0.0
        %3306 = vmatprep.subr.mxu0 0.0
        %3307 = vmatpush1.msra.mxu0 0.0
        %3308 = vmatprep.subr.mxu0 0.0
        %3309 = vmatpush1.msra.mxu0 0.0
        %3310 = vmatprep.subr.mxu0 0.0
        %3311 = vmatpush1.msra.mxu0 0.0
        %3312 = vmatprep.subr.mxu0 0.0
        %3313 = vmatpush1.msra.mxu0 0.0
        %3314 = vmatprep.mubr.f32.mxu0 0.0
        %3315 = vmatmul.mubr.f32.gmra.mrb[0].mxu0 %v2972
        %v3316 = vpop.f32.mrb[0].mxu0
        %v3317 = vadd.f32 %v2953, %v3316
        %v3318 = vpop.f32.mrb[0].mxu0
        %v3319 = vadd.f32 %v2953, %v3318
        %3320 = vmatprep.mubr.f32.mxu0 0.0
        %3321 = vmatmul.mubr.f32.gmra.mrb[0].mxu0 %v2975
        %v3322 = vpop.f32.mrb[0].mxu0
        %v3323 = vadd.f32 %v2958, %v3322
        %v3324 = vpop.f32.mrb[0].mxu0
        %v3325 = vadd.f32 %v2958, %v3324
        %3326 = vmatprep.mubr.f32.mxu0 0.0
        %3327 = vmatmul.mubr.f32.gmra.mrb[0].mxu0 %v2978
        %v3328 = vpop.f32.mrb[0].mxu0
        %v3329 = vadd.f32 %v2963, %v3328
        %v3330 = vpop.f32.mrb[0].mxu0
        %v3331 = vadd.f32 %v2963, %v3330
        %3332 = vmatprep.mubr.f32.mxu0 0.0
        %3333 = vmatmul.mubr.f32.gmra.mrb[0].mxu0 %v2981
        %v3334 = vpop.f32.mrb[0].mxu0
        %v3335 = vadd.f32 %v2968, %v3334
        %v3336 = vpop.f32.mrb[0].mxu0
        %v3337 = vadd.f32 %v2968, %v3336
        %3338 = vdwg.mxu0
        %3339 = vmatprep.subr.mxu0 %v2887
        %3340 = vmatpush1.msra.mxu0 %v2886
        %3341 = vmatprep.subr.mxu0 %v2903
        %3342 = vmatpush1.msra.mxu0 %v2902
        %3343 = vmatprep.subr.mxu0 %v2919
        %3344 = vmatpush1.msra.mxu0 %v2918
        %3345 = vmatprep.subr.mxu0 %v2935
        %3346 = vmatpush1.msra.mxu0 %v2934
        %3347 = vmatprep.subr.mxu0 0.0
        %3348 = vmatpush1.msra.mxu0 0.0
        %3349 = vmatprep.subr.mxu0 0.0
        %3350 = vmatpush1.msra.mxu0 0.0
        %3351 = vmatprep.subr.mxu0 0.0
        %3352 = vmatpush1.msra.mxu0 0.0
        %3353 = vmatprep.subr.mxu0 0.0
        %3354 = vmatpush1.msra.mxu0 0.0
        %3355 = vmatprep.subr.mxu0 0.0
        %3356 = vmatpush1.msra.mxu0 0.0
        %3357 = vmatprep.subr.mxu0 0.0
        %3358 = vmatpush1.msra.mxu0 0.0
        %3359 = vmatprep.subr.mxu0 0.0
        %3360 = vmatpush1.msra.mxu0 0.0
        %3361 = vmatprep.subr.mxu0 0.0
        %3362 = vmatpush1.msra.mxu0 0.0
        %3363 = vmatprep.subr.mxu0 0.0
        %3364 = vmatpush1.msra.mxu0 0.0
        %3365 = vmatprep.subr.mxu0 0.0
        %3366 = vmatpush1.msra.mxu0 0.0
        %3367 = vmatprep.subr.mxu0 0.0
        %3368 = vmatpush1.msra.mxu0 0.0
        %3369 = vmatprep.subr.mxu0 0.0
        %3370 = vmatpush1.msra.mxu0 0.0
        %3371 = vmatprep.subr.mxu0 0.0
        %3372 = vmatpush1.msra.mxu0 0.0
        %3373 = vmatprep.subr.mxu0 0.0
        %3374 = vmatpush1.msra.mxu0 0.0
        %3375 = vmatprep.subr.mxu0 0.0
        %3376 = vmatpush1.msra.mxu0 0.0
        %3377 = vmatprep.subr.mxu0 0.0
        %3378 = vmatpush1.msra.mxu0 0.0
        %3379 = vmatprep.subr.mxu0 0.0
        %3380 = vmatpush1.msra.mxu0 0.0
        %3381 = vmatprep.subr.mxu0 0.0
        %3382 = vmatpush1.msra.mxu0 0.0
        %3383 = vmatprep.subr.mxu0 0.0
        %3384 = vmatpush1.msra.mxu0 0.0
        %3385 = vmatprep.subr.mxu0 0.0
        %3386 = vmatpush1.msra.mxu0 0.0
        %3387 = vmatprep.subr.mxu0 0.0
        %3388 = vmatpush1.msra.mxu0 0.0
        %3389 = vmatprep.subr.mxu0 0.0
        %3390 = vmatpush1.msra.mxu0 0.0
        %3391 = vmatprep.subr.mxu0 0.0
        %3392 = vmatpush1.msra.mxu0 0.0
        %3393 = vmatprep.subr.mxu0 0.0
        %3394 = vmatpush1.msra.mxu0 0.0
        %3395 = vmatprep.subr.mxu0 0.0
        %3396 = vmatpush1.msra.mxu0 0.0
        %3397 = vmatprep.subr.mxu0 0.0
        %3398 = vmatpush1.msra.mxu0 0.0
        %3399 = vmatprep.subr.mxu0 0.0
        %3400 = vmatpush1.msra.mxu0 0.0
        %3401 = vmatprep.subr.mxu0 0.0
        %3402 = vmatpush1.msra.mxu0 0.0
        %3403 = vmatprep.mubr.f32.mxu0 0.0
        %3404 = vmatmul.mubr.f32.gmra.mrb[0].mxu0 %v2972
        %v3405 = vpop.f32.mrb[0].mxu0
        %v3406 = vadd.f32 %v2953, %v3405
        %v3407 = vpop.f32.mrb[0].mxu0
        %v3408 = vadd.f32 %v2953, %v3407
        %3409 = vmatprep.mubr.f32.mxu0 0.0
        %3410 = vmatmul.mubr.f32.gmra.mrb[0].mxu0 %v2975
        %v3411 = vpop.f32.mrb[0].mxu0
        %v3412 = vadd.f32 %v2958, %v3411
        %v3413 = vpop.f32.mrb[0].mxu0
        %v3414 = vadd.f32 %v2958, %v3413
        %3415 = vmatprep.mubr.f32.mxu0 0.0
        %3416 = vmatmul.mubr.f32.gmra.mrb[0].mxu0 %v2978
        %v3417 = vpop.f32.mrb[0].mxu0
        %v3418 = vadd.f32 %v2963, %v3417
        %v3419 = vpop.f32.mrb[0].mxu0
        %v3420 = vadd.f32 %v2963, %v3419
        %3421 = vmatprep.mubr.f32.mxu0 0.0
        %3422 = vmatmul.mubr.f32.gmra.mrb[0].mxu0 %v2981
        %v3423 = vpop.f32.mrb[0].mxu0
        %v3424 = vadd.f32 %v2968, %v3423
        %v3425 = vpop.f32.mrb[0].mxu0
        %v3426 = vadd.f32 %v2968, %v3425
        %3427 = vdwg.mxu0
        %3428 = vmatprep.subr.mxu0 %v2889
        %3429 = vmatpush1.msra.mxu0 %v2888
        %3430 = vmatprep.subr.mxu0 %v2905
        %3431 = vmatpush1.msra.mxu0 %v2904
        %3432 = vmatprep.subr.mxu0 %v2921
        %3433 = vmatpush1.msra.mxu0 %v2920
        %3434 = vmatprep.subr.mxu0 %v2937
        %3435 = vmatpush1.msra.mxu0 %v2936
        %3436 = vmatprep.subr.mxu0 0.0
        %3437 = vmatpush1.msra.mxu0 0.0
        %3438 = vmatprep.subr.mxu0 0.0
        %3439 = vmatpush1.msra.mxu0 0.0
        %3440 = vmatprep.subr.mxu0 0.0
        %3441 = vmatpush1.msra.mxu0 0.0
        %3442 = vmatprep.subr.mxu0 0.0
        %3443 = vmatpush1.msra.mxu0 0.0
        %3444 = vmatprep.subr.mxu0 0.0
        %3445 = vmatpush1.msra.mxu0 0.0
        %3446 = vmatprep.subr.mxu0 0.0
        %3447 = vmatpush1.msra.mxu0 0.0
        %3448 = vmatprep.subr.mxu0 0.0
        %3449 = vmatpush1.msra.mxu0 0.0
        %3450 = vmatprep.subr.mxu0 0.0
        %3451 = vmatpush1.msra.mxu0 0.0
        %3452 = vmatprep.subr.mxu0 0.0
        %3453 = vmatpush1.msra.mxu0 0.0
        %3454 = vmatprep.subr.mxu0 0.0
        %3455 = vmatpush1.msra.mxu0 0.0
        %3456 = vmatprep.subr.mxu0 0.0
        %3457 = vmatpush1.msra.mxu0 0.0
        %3458 = vmatprep.subr.mxu0 0.0
        %3459 = vmatpush1.msra.mxu0 0.0
        %3460 = vmatprep.subr.mxu0 0.0
        %3461 = vmatpush1.msra.mxu0 0.0
        %3462 = vmatprep.subr.mxu0 0.0
        %3463 = vmatpush1.msra.mxu0 0.0
        %3464 = vmatprep.subr.mxu0 0.0
        %3465 = vmatpush1.msra.mxu0 0.0
        %3466 = vmatprep.subr.mxu0 0.0
        %3467 = vmatpush1.msra.mxu0 0.0
        %3468 = vmatprep.subr.mxu0 0.0
        %3469 = vmatpush1.msra.mxu0 0.0
        %3470 = vmatprep.subr.mxu0 0.0
        %3471 = vmatpush1.msra.mxu0 0.0
        %3472 = vmatprep.subr.mxu0 0.0
        %3473 = vmatpush1.msra.mxu0 0.0
        %3474 = vmatprep.subr.mxu0 0.0
        %3475 = vmatpush1.msra.mxu0 0.0
        %3476 = vmatprep.subr.mxu0 0.0
        %3477 = vmatpush1.msra.mxu0 0.0
        %3478 = vmatprep.subr.mxu0 0.0
        %3479 = vmatpush1.msra.mxu0 0.0
        %3480 = vmatprep.subr.mxu0 0.0
        %3481 = vmatpush1.msra.mxu0 0.0
        %3482 = vmatprep.subr.mxu0 0.0
        %3483 = vmatpush1.msra.mxu0 0.0
        %3484 = vmatprep.subr.mxu0 0.0
        %3485 = vmatpush1.msra.mxu0 0.0
        %3486 = vmatprep.subr.mxu0 0.0
        %3487 = vmatpush1.msra.mxu0 0.0
        %3488 = vmatprep.subr.mxu0 0.0
        %3489 = vmatpush1.msra.mxu0 0.0
        %3490 = vmatprep.subr.mxu0 0.0
        %3491 = vmatpush1.msra.mxu0 0.0
        %3492 = vmatprep.mubr.f32.mxu0 0.0
        %3493 = vmatmul.mubr.f32.gmra.mrb[0].mxu0 %v2972
        %v3494 = vpop.f32.mrb[0].mxu0
        %v3495 = vadd.f32 %v2953, %v3494
        %v3496 = vpop.f32.mrb[0].mxu0
        %v3497 = vadd.f32 %v2953, %v3496
        %3498 = vmatprep.mubr.f32.mxu0 0.0
        %3499 = vmatmul.mubr.f32.gmra.mrb[0].mxu0 %v2975
        %v3500 = vpop.f32.mrb[0].mxu0
        %v3501 = vadd.f32 %v2958, %v3500
        %v3502 = vpop.f32.mrb[0].mxu0
        %v3503 = vadd.f32 %v2958, %v3502
        %3504 = vmatprep.mubr.f32.mxu0 0.0
        %3505 = vmatmul.mubr.f32.gmra.mrb[0].mxu0 %v2978
        %v3506 = vpop.f32.mrb[0].mxu0
        %v3507 = vadd.f32 %v2963, %v3506
        %v3508 = vpop.f32.mrb[0].mxu0
        %v3509 = vadd.f32 %v2963, %v3508
        %3510 = vmatprep.mubr.f32.mxu0 0.0
        %3511 = vmatmul.mubr.f32.gmra.mrb[0].mxu0 %v2981
        %v3512 = vpop.f32.mrb[0].mxu0
        %v3513 = vadd.f32 %v2968, %v3512
        %v3514 = vpop.f32.mrb[0].mxu0
        %v3515 = vadd.f32 %v2968, %v3514
        %3516 = vdwg.mxu0
        %3517 = vmatprep.subr.mxu0 %v2891
        %3518 = vmatpush1.msra.mxu0 %v2890
        %3519 = vmatprep.subr.mxu0 %v2907
        %3520 = vmatpush1.msra.mxu0 %v2906
        %3521 = vmatprep.subr.mxu0 %v2923
        %3522 = vmatpush1.msra.mxu0 %v2922
        %3523 = vmatprep.subr.mxu0 %v2939
        %3524 = vmatpush1.msra.mxu0 %v2938
        %3525 = vmatprep.subr.mxu0 0.0
        %3526 = vmatpush1.msra.mxu0 0.0
        %3527 = vmatprep.subr.mxu0 0.0
        %3528 = vmatpush1.msra.mxu0 0.0
        %3529 = vmatprep.subr.mxu0 0.0
        %3530 = vmatpush1.msra.mxu0 0.0
        %3531 = vmatprep.subr.mxu0 0.0
        %3532 = vmatpush1.msra.mxu0 0.0
        %3533 = vmatprep.subr.mxu0 0.0
        %3534 = vmatpush1.msra.mxu0 0.0
        %3535 = vmatprep.subr.mxu0 0.0
        %3536 = vmatpush1.msra.mxu0 0.0
        %3537 = vmatprep.subr.mxu0 0.0
        %3538 = vmatpush1.msra.mxu0 0.0
        %3539 = vmatprep.subr.mxu0 0.0
        %3540 = vmatpush1.msra.mxu0 0.0
        %3541 = vmatprep.subr.mxu0 0.0
        %3542 = vmatpush1.msra.mxu0 0.0
        %3543 = vmatprep.subr.mxu0 0.0
        %3544 = vmatpush1.msra.mxu0 0.0
        %3545 = vmatprep.subr.mxu0 0.0
        %3546 = vmatpush1.msra.mxu0 0.0
        %3547 = vmatprep.subr.mxu0 0.0
        %3548 = vmatpush1.msra.mxu0 0.0
        %3549 = vmatprep.subr.mxu0 0.0
        %3550 = vmatpush1.msra.mxu0 0.0
        %3551 = vmatprep.subr.mxu0 0.0
        %3552 = vmatpush1.msra.mxu0 0.0
        %3553 = vmatprep.subr.mxu0 0.0
        %3554 = vmatpush1.msra.mxu0 0.0
        %3555 = vmatprep.subr.mxu0 0.0
        %3556 = vmatpush1.msra.mxu0 0.0
        %3557 = vmatprep.subr.mxu0 0.0
        %3558 = vmatpush1.msra.mxu0 0.0
        %3559 = vmatprep.subr.mxu0 0.0
        %3560 = vmatpush1.msra.mxu0 0.0
        %3561 = vmatprep.subr.mxu0 0.0
        %3562 = vmatpush1.msra.mxu0 0.0
        %3563 = vmatprep.subr.mxu0 0.0
        %3564 = vmatpush1.msra.mxu0 0.0
        %3565 = vmatprep.subr.mxu0 0.0
        %3566 = vmatpush1.msra.mxu0 0.0
        %3567 = vmatprep.subr.mxu0 0.0
        %3568 = vmatpush1.msra.mxu0 0.0
        %3569 = vmatprep.subr.mxu0 0.0
        %3570 = vmatpush1.msra.mxu0 0.0
        %3571 = vmatprep.subr.mxu0 0.0
        %3572 = vmatpush1.msra.mxu0 0.0
        %3573 = vmatprep.subr.mxu0 0.0
        %3574 = vmatpush1.msra.mxu0 0.0
        %3575 = vmatprep.subr.mxu0 0.0
        %3576 = vmatpush1.msra.mxu0 0.0
        %3577 = vmatprep.subr.mxu0 0.0
        %3578 = vmatpush1.msra.mxu0 0.0
        %3579 = vmatprep.subr.mxu0 0.0
        %3580 = vmatpush1.msra.mxu0 0.0
        %3581 = vmatprep.mubr.f32.mxu0 0.0
        %3582 = vmatmul.mubr.f32.gmra.mrb[0].mxu0 %v2972
        %v3583 = vpop.f32.mrb[0].mxu0
        %v3584 = vadd.f32 %v2953, %v3583
        %v3585 = vpop.f32.mrb[0].mxu0
        %v3586 = vadd.f32 %v2953, %v3585
        %3587 = vmatprep.mubr.f32.mxu0 0.0
        %3588 = vmatmul.mubr.f32.gmra.mrb[0].mxu0 %v2975
        %v3589 = vpop.f32.mrb[0].mxu0
        %v3590 = vadd.f32 %v2958, %v3589
        %v3591 = vpop.f32.mrb[0].mxu0
        %v3592 = vadd.f32 %v2958, %v3591
        %3593 = vmatprep.mubr.f32.mxu0 0.0
        %3594 = vmatmul.mubr.f32.gmra.mrb[0].mxu0 %v2978
        %v3595 = vpop.f32.mrb[0].mxu0
        %v3596 = vadd.f32 %v2963, %v3595
        %v3597 = vpop.f32.mrb[0].mxu0
        %v3598 = vadd.f32 %v2963, %v3597
        %3599 = vmatprep.mubr.f32.mxu0 0.0
        %3600 = vmatmul.mubr.f32.gmra.mrb[0].mxu0 %v2981
        %v3601 = vpop.f32.mrb[0].mxu0
        %v3602 = vadd.f32 %v2968, %v3601
        %v3603 = vpop.f32.mrb[0].mxu0
        %v3604 = vadd.f32 %v2968, %v3603
        %3605 = vdwg.mxu0
        %3606 = vmatprep.subr.mxu0 %v2893
        %3607 = vmatpush1.msra.mxu0 %v2892
        %3608 = vmatprep.subr.mxu0 %v2909
        %3609 = vmatpush1.msra.mxu0 %v2908
        %3610 = vmatprep.subr.mxu0 %v2925
        %3611 = vmatpush1.msra.mxu0 %v2924
        %3612 = vmatprep.subr.mxu0 %v2941
        %3613 = vmatpush1.msra.mxu0 %v2940
        %3614 = vmatprep.subr.mxu0 0.0
        %3615 = vmatpush1.msra.mxu0 0.0
        %3616 = vmatprep.subr.mxu0 0.0
        %3617 = vmatpush1.msra.mxu0 0.0
        %3618 = vmatprep.subr.mxu0 0.0
        %3619 = vmatpush1.msra.mxu0 0.0
        %3620 = vmatprep.subr.mxu0 0.0
        %3621 = vmatpush1.msra.mxu0 0.0
        %3622 = vmatprep.subr.mxu0 0.0
        %3623 = vmatpush1.msra.mxu0 0.0
        %3624 = vmatprep.subr.mxu0 0.0
        %3625 = vmatpush1.msra.mxu0 0.0
        %3626 = vmatprep.subr.mxu0 0.0
        %3627 = vmatpush1.msra.mxu0 0.0
        %3628 = vmatprep.subr.mxu0 0.0
        %3629 = vmatpush1.msra.mxu0 0.0
        %3630 = vmatprep.subr.mxu0 0.0
        %3631 = vmatpush1.msra.mxu0 0.0
        %3632 = vmatprep.subr.mxu0 0.0
        %3633 = vmatpush1.msra.mxu0 0.0
        %3634 = vmatprep.subr.mxu0 0.0
        %3635 = vmatpush1.msra.mxu0 0.0
        %3636 = vmatprep.subr.mxu0 0.0
        %3637 = vmatpush1.msra.mxu0 0.0
        %3638 = vmatprep.subr.mxu0 0.0
        %3639 = vmatpush1.msra.mxu0 0.0
        %3640 = vmatprep.subr.mxu0 0.0
        %3641 = vmatpush1.msra.mxu0 0.0
        %3642 = vmatprep.subr.mxu0 0.0
        %3643 = vmatpush1.msra.mxu0 0.0
        %3644 = vmatprep.subr.mxu0 0.0
        %3645 = vmatpush1.msra.mxu0 0.0
        %3646 = vmatprep.subr.mxu0 0.0
        %3647 = vmatpush1.msra.mxu0 0.0
        %3648 = vmatprep.subr.mxu0 0.0
        %3649 = vmatpush1.msra.mxu0 0.0
        %3650 = vmatprep.subr.mxu0 0.0
        %3651 = vmatpush1.msra.mxu0 0.0
        %3652 = vmatprep.subr.mxu0 0.0
        %3653 = vmatpush1.msra.mxu0 0.0
        %3654 = vmatprep.subr.mxu0 0.0
        %3655 = vmatpush1.msra.mxu0 0.0
        %3656 = vmatprep.subr.mxu0 0.0
        %3657 = vmatpush1.msra.mxu0 0.0
        %3658 = vmatprep.subr.mxu0 0.0
        %3659 = vmatpush1.msra.mxu0 0.0
        %3660 = vmatprep.subr.mxu0 0.0
        %3661 = vmatpush1.msra.mxu0 0.0
        %3662 = vmatprep.subr.mxu0 0.0
        %3663 = vmatpush1.msra.mxu0 0.0
        %3664 = vmatprep.subr.mxu0 0.0
        %3665 = vmatpush1.msra.mxu0 0.0
        %3666 = vmatprep.subr.mxu0 0.0
        %3667 = vmatpush1.msra.mxu0 0.0
        %3668 = vmatprep.subr.mxu0 0.0
        %3669 = vmatpush1.msra.mxu0 0.0
        %3670 = vmatprep.mubr.f32.mxu0 0.0
        %3671 = vmatmul.mubr.f32.gmra.mrb[0].mxu0 %v2972
        %v3672 = vpop.f32.mrb[0].mxu0
        %v3673 = vadd.f32 %v2953, %v3672
        %v3674 = vpop.f32.mrb[0].mxu0
        %v3675 = vadd.f32 %v2953, %v3674
        %3676 = vmatprep.mubr.f32.mxu0 0.0
        %3677 = vmatmul.mubr.f32.gmra.mrb[0].mxu0 %v2975
        %v3678 = vpop.f32.mrb[0].mxu0
        %v3679 = vadd.f32 %v2958, %v3678
        %v3680 = vpop.f32.mrb[0].mxu0
        %v3681 = vadd.f32 %v2958, %v3680
        %3682 = vmatprep.mubr.f32.mxu0 0.0
        %3683 = vmatmul.mubr.f32.gmra.mrb[0].mxu0 %v2978
        %v3684 = vpop.f32.mrb[0].mxu0
        %v3685 = vadd.f32 %v2963, %v3684
        %v3686 = vpop.f32.mrb[0].mxu0
        %v3687 = vadd.f32 %v2963, %v3686
        %3688 = vmatprep.mubr.f32.mxu0 0.0
        %3689 = vmatmul.mubr.f32.gmra.mrb[0].mxu0 %v2981
        %v3690 = vpop.f32.mrb[0].mxu0
        %v3691 = vadd.f32 %v2968, %v3690
        %v3692 = vpop.f32.mrb[0].mxu0
        %v3693 = vadd.f32 %v2968, %v3692
        %3694 = vdwg.mxu0
        %v3695 = vtanh.pop %v3050
        %v3696 = vtanh.pop %v3052
        %v3697 = vtanh.pop %v3139
        %v3698 = vtanh.pop %v3141
        %v3699 = vtanh.pop %v3228
        %v3700 = vtanh.pop %v3230
        %v3701 = vtanh.pop %v3317
        %v3702 = vtanh.pop %v3319
        %v3703 = vtanh.pop %v3406
        %v3704 = vtanh.pop %v3408
        %v3705 = vtanh.pop %v3495
        %v3706 = vtanh.pop %v3497
        %v3707 = vtanh.pop %v3584
        %v3708 = vtanh.pop %v3586
        %v3709 = vtanh.pop %v3673
        %v3710 = vtanh.pop %v3675
        %v3711 = vtanh.pop %v3056
        %v3712 = vtanh.pop %v3058
        %v3713 = vtanh.pop %v3145
        %v3714 = vtanh.pop %v3147
        %v3715 = vtanh.pop %v3234
        %v3716 = vtanh.pop %v3236
        %v3717 = vtanh.pop %v3323
        %v3718 = vtanh.pop %v3325
        %v3719 = vtanh.pop %v3412
        %v3720 = vtanh.pop %v3414
        %v3721 = vtanh.pop %v3501
        %v3722 = vtanh.pop %v3503
        %v3723 = vtanh.pop %v3590
        %v3724 = vtanh.pop %v3592
        %v3725 = vtanh.pop %v3679
        %v3726 = vtanh.pop %v3681
        %v3727 = vtanh.pop %v3062
        %v3728 = vtanh.pop %v3064
        %v3729 = vtanh.pop %v3151
        %v3730 = vtanh.pop %v3153
        %v3731 = vtanh.pop %v3240
        %v3732 = vtanh.pop %v3242
        %v3733 = vtanh.pop %v3329
        %v3734 = vtanh.pop %v3331
        %v3735 = vtanh.pop %v3418
        %v3736 = vtanh.pop %v3420
        %v3737 = vtanh.pop %v3507
        %v3738 = vtanh.pop %v3509
        %v3739 = vtanh.pop %v3596
        %v3740 = vtanh.pop %v3598
        %v3741 = vtanh.pop %v3685
        %v3742 = vtanh.pop %v3687
        %v3743 = vtanh.pop %v3068
        %v3744 = vtanh.pop %v3070
        %v3745 = vtanh.pop %v3157
        %v3746 = vtanh.pop %v3159
        %v3747 = vtanh.pop %v3246
        %v3748 = vtanh.pop %v3248
        %v3749 = vtanh.pop %v3335
        %v3750 = vtanh.pop %v3337
        %v3751 = vtanh.pop %v3424
        %v3752 = vtanh.pop %v3426
        %v3753 = vtanh.pop %v3513
        %v3754 = vtanh.pop %v3515
        %v3755 = vtanh.pop %v3602
        %v3756 = vtanh.pop %v3604
        %v3757 = vtanh.pop %v3691
        %v3758 = vtanh.pop %v3693
        %v3759 = vmul.f32 %v3695, %v2750
        %v3760 = vmul.f32 %v3696, %v2751
        %v3761 = vmul.f32 %v3697, %v2752
        %v3762 = vmul.f32 %v3698, %v2753
        %v3763 = vmul.f32 %v3699, %v2754
        %v3764 = vmul.f32 %v3700, %v2755
        %v3765 = vmul.f32 %v3701, %v2756
        %v3766 = vmul.f32 %v3702, %v2757
        %v3767 = vmul.f32 %v3703, %v2758
        %v3768 = vmul.f32 %v3704, %v2759
        %v3769 = vmul.f32 %v3705, %v2760
        %v3770 = vmul.f32 %v3706, %v2761
        %v3771 = vmul.f32 %v3707, %v2762
        %v3772 = vmul.f32 %v3708, %v2763
        %v3773 = vmul.f32 %v3709, %v2764
        %v3774 = vmul.f32 %v3710, %v2765
        %v3775 = vmul.f32 %v3711, %v2766
        %v3776 = vmul.f32 %v3712, %v2767
        %v3777 = vmul.f32 %v3713, %v2768
        %v3778 = vmul.f32 %v3714, %v2769
        %v3779 = vmul.f32 %v3715, %v2770
        %v3780 = vmul.f32 %v3716, %v2771
        %v3781 = vmul.f32 %v3717, %v2772
        %v3782 = vmul.f32 %v3718, %v2773
        %v3783 = vmul.f32 %v3719, %v2774
        %v3784 = vmul.f32 %v3720, %v2775
        %v3785 = vmul.f32 %v3721, %v2776
        %v3786 = vmul.f32 %v3722, %v2777
        %v3787 = vmul.f32 %v3723, %v2778
        %v3788 = vmul.f32 %v3724, %v2779
        %v3789 = vmul.f32 %v3725, %v2780
        %v3790 = vmul.f32 %v3726, %v2781
        %v3791 = vmul.f32 %v3727, %v2782
        %v3792 = vmul.f32 %v3728, %v2783
        %v3793 = vmul.f32 %v3729, %v2784
        %v3794 = vmul.f32 %v3730, %v2785
        %v3795 = vmul.f32 %v3731, %v2786
        %v3796 = vmul.f32 %v3732, %v2787
        %v3797 = vmul.f32 %v3733, %v2788
        %v3798 = vmul.f32 %v3734, %v2789
        %v3799 = vmul.f32 %v3735, %v2790
        %v3800 = vmul.f32 %v3736, %v2791
        %v3801 = vmul.f32 %v3737, %v2792
        %v3802 = vmul.f32 %v3738, %v2793
        %v3803 = vmul.f32 %v3739, %v2794
        %v3804 = vmul.f32 %v3740, %v2795
        %v3805 = vmul.f32 %v3741, %v2796
        %v3806 = vmul.f32 %v3742, %v2797
        %v3807 = vmul.f32 %v3743, %v2798
        %v3808 = vmul.f32 %v3744, %v2799
        %v3809 = vmul.f32 %v3745, %v2800
        %v3810 = vmul.f32 %v3746, %v2801
        %v3811 = vmul.f32 %v3747, %v2802
        %v3812 = vmul.f32 %v3748, %v2803
        %v3813 = vmul.f32 %v3749, %v2804
        %v3814 = vmul.f32 %v3750, %v2805
        %v3815 = vmul.f32 %v3751, %v2806
        %v3816 = vmul.f32 %v3752, %v2807
        %v3817 = vmul.f32 %v3753, %v2808
        %v3818 = vmul.f32 %v3754, %v2809
        %v3819 = vmul.f32 %v3755, %v2810
        %v3820 = vmul.f32 %v3756, %v2811
        %v3821 = vmul.f32 %v3757, %v2812
        %v3822 = vmul.f32 %v3758, %v2813
        %v3823 = vadd.f32 %v2494, %v3759
        %v3824 = vadd.f32 %v2495, %v3760
        %v3825 = vadd.f32 %v2496, %v3761
        %v3826 = vadd.f32 %v2497, %v3762
        %v3827 = vadd.f32 %v2498, %v3763
        %v3828 = vadd.f32 %v2499, %v3764
        %v3829 = vadd.f32 %v2500, %v3765
        %v3830 = vadd.f32 %v2501, %v3766
        %v3831 = vadd.f32 %v2502, %v3767
        %v3832 = vadd.f32 %v2503, %v3768
        %v3833 = vadd.f32 %v2504, %v3769
        %v3834 = vadd.f32 %v2505, %v3770
        %v3835 = vadd.f32 %v2506, %v3771
        %v3836 = vadd.f32 %v2507, %v3772
        %v3837 = vadd.f32 %v2508, %v3773
        %v3838 = vadd.f32 %v2509, %v3774
        %v3839 = vadd.f32 %v2510, %v3775
        %v3840 = vadd.f32 %v2511, %v3776
        %v3841 = vadd.f32 %v2512, %v3777
        %v3842 = vadd.f32 %v2513, %v3778
        %v3843 = vadd.f32 %v2514, %v3779
        %v3844 = vadd.f32 %v2515, %v3780
        %v3845 = vadd.f32 %v2516, %v3781
        %v3846 = vadd.f32 %v2517, %v3782
        %v3847 = vadd.f32 %v2518, %v3783
        %v3848 = vadd.f32 %v2519, %v3784
        %v3849 = vadd.f32 %v2520, %v3785
        %v3850 = vadd.f32 %v2521, %v3786
        %v3851 = vadd.f32 %v2522, %v3787
        %v3852 = vadd.f32 %v2523, %v3788
        %v3853 = vadd.f32 %v2524, %v3789
        %v3854 = vadd.f32 %v2525, %v3790
        %v3855 = vadd.f32 %v2526, %v3791
        %v3856 = vadd.f32 %v2527, %v3792
        %v3857 = vadd.f32 %v2528, %v3793
        %v3858 = vadd.f32 %v2529, %v3794
        %v3859 = vadd.f32 %v2530, %v3795
        %v3860 = vadd.f32 %v2531, %v3796
        %v3861 = vadd.f32 %v2532, %v3797
        %v3862 = vadd.f32 %v2533, %v3798
        %v3863 = vadd.f32 %v2534, %v3799
        %v3864 = vadd.f32 %v2535, %v3800
        %v3865 = vadd.f32 %v2536, %v3801
        %v3866 = vadd.f32 %v2537, %v3802
        %v3867 = vadd.f32 %v2538, %v3803
        %v3868 = vadd.f32 %v2539, %v3804
        %v3869 = vadd.f32 %v2540, %v3805
        %v3870 = vadd.f32 %v2541, %v3806
        %v3871 = vadd.f32 %v2542, %v3807
        %v3872 = vadd.f32 %v2543, %v3808
        %v3873 = vadd.f32 %v2544, %v3809
        %v3874 = vadd.f32 %v2545, %v3810
        %v3875 = vadd.f32 %v2546, %v3811
        %v3876 = vadd.f32 %v2547, %v3812
        %v3877 = vadd.f32 %v2548, %v3813
        %v3878 = vadd.f32 %v2549, %v3814
        %v3879 = vadd.f32 %v2550, %v3815
        %v3880 = vadd.f32 %v2551, %v3816
        %v3881 = vadd.f32 %v2552, %v3817
        %v3882 = vadd.f32 %v2553, %v3818
        %v3883 = vadd.f32 %v2554, %v3819
        %v3884 = vadd.f32 %v2555, %v3820
        %v3885 = vadd.f32 %v2556, %v3821
        %v3886 = vadd.f32 %v2557, %v3822
        %s3887 = scalar_lea.vmem %s3, 32
        %v3888 = vld [vmem:[%s3887] sm:$0xff]
        %v3889 = vld [vmem:[%s3887 + $0x8] sm:$0xff]
        %v3890 = vld [vmem:[%s3887 + $0x10] sm:$0xff]
        %v3891 = vld [vmem:[%s3887 + $0x18] sm:$0xff]
        %s3892 = scalar_lea.vmem %s4, 32
        %v3893 = vld [vmem:[%s3892] sm:$0xff]
        %v3894 = vld [vmem:[%s3892 + $0x8] sm:$0xff]
        %v3895 = vld [vmem:[%s3892 + $0x10] sm:$0xff]
        %v3896 = vld [vmem:[%s3892 + $0x18] sm:$0xff]
        %3898 = vset.pattern.permute.xlu0 0
        %3899 = vperm.xlu0 %3898, %v3893
        %v3900 = vpop.permute.xlu0 %3899
        %3903 = vset.pattern.permute.xlu0 0
        %3904 = vperm.xlu0 %3903, %v3894
        %v3905 = vpop.permute.xlu0 %3904
        %3908 = vset.pattern.permute.xlu0 0
        %3909 = vperm.xlu0 %3908, %v3895
        %v3910 = vpop.permute.xlu0 %3909
        %3913 = vset.pattern.permute.xlu0 0
        %3914 = vperm.xlu0 %3913, %v3896
        %v3915 = vpop.permute.xlu0 %3914
        %v3918 = vsel %vm2970, %v3888, 0
        %v3921 = vsel %vm2970, %v3889, 0
        %v3924 = vsel %vm2970, %v3890, 0
        %v3927 = vsel %vm2970, %v3891, 0
        %3929 = vmatprep.subr.mxu0 %v3824
        %3930 = vmatpush1.msra.mxu0 %v3823
        %3931 = vmatprep.subr.mxu0 %v3840
        %3932 = vmatpush1.msra.mxu0 %v3839
        %3933 = vmatprep.subr.mxu0 %v3856
        %3934 = vmatpush1.msra.mxu0 %v3855
        %3935 = vmatprep.subr.mxu0 %v3872
        %3936 = vmatpush1.msra.mxu0 %v3871
        %3937 = vmatprep.subr.mxu0 0.0
        %3938 = vmatpush1.msra.mxu0 0.0
        %3939 = vmatprep.subr.mxu0 0.0
        %3940 = vmatpush1.msra.mxu0 0.0
        %3941 = vmatprep.subr.mxu0 0.0
        %3942 = vmatpush1.msra.mxu0 0.0
        %3943 = vmatprep.subr.mxu0 0.0
        %3944 = vmatpush1.msra.mxu0 0.0
        %3945 = vmatprep.subr.mxu0 0.0
        %3946 = vmatpush1.msra.mxu0 0.0
        %3947 = vmatprep.subr.mxu0 0.0
        %3948 = vmatpush1.msra.mxu0 0.0
        %3949 = vmatprep.subr.mxu0 0.0
        %3950 = vmatpush1.msra.mxu0 0.0
        %3951 = vmatprep.subr.mxu0 0.0
        %3952 = vmatpush1.msra.mxu0 0.0
        %3953 = vmatprep.subr.mxu0 0.0
        %3954 = vmatpush1.msra.mxu0 0.0
        %3955 = vmatprep.subr.mxu0 0.0
        %3956 = vmatpush1.msra.mxu0 0.0
        %3957 = vmatprep.subr.mxu0 0.0
        %3958 = vmatpush1.msra.mxu0 0.0
        %3959 = vmatprep.subr.mxu0 0.0
        %3960 = vmatpush1.msra.mxu0 0.0
        %3961 = vmatprep.subr.mxu0 0.0
        %3962 = vmatpush1.msra.mxu0 0.0
        %3963 = vmatprep.subr.mxu0 0.0
        %3964 = vmatpush1.msra.mxu0 0.0
        %3965 = vmatprep.subr.mxu0 0.0
        %3966 = vmatpush1.msra.mxu0 0.0
        %3967 = vmatprep.subr.mxu0 0.0
        %3968 = vmatpush1.msra.mxu0 0.0
        %3969 = vmatprep.subr.mxu0 0.0
        %3970 = vmatpush1.msra.mxu0 0.0
        %3971 = vmatprep.subr.mxu0 0.0
        %3972 = vmatpush1.msra.mxu0 0.0
        %3973 = vmatprep.subr.mxu0 0.0
        %3974 = vmatpush1.msra.mxu0 0.0
        %3975 = vmatprep.subr.mxu0 0.0
        %3976 = vmatpush1.msra.mxu0 0.0
        %3977 = vmatprep.subr.mxu0 0.0
        %3978 = vmatpush1.msra.mxu0 0.0
        %3979 = vmatprep.subr.mxu0 0.0
        %3980 = vmatpush1.msra.mxu0 0.0
        %3981 = vmatprep.subr.mxu0 0.0
        %3982 = vmatpush1.msra.mxu0 0.0
        %3983 = vmatprep.subr.mxu0 0.0
        %3984 = vmatpush1.msra.mxu0 0.0
        %3985 = vmatprep.subr.mxu0 0.0
        %3986 = vmatpush1.msra.mxu0 0.0
        %3987 = vmatprep.subr.mxu0 0.0
        %3988 = vmatpush1.msra.mxu0 0.0
        %3989 = vmatprep.subr.mxu0 0.0
        %3990 = vmatpush1.msra.mxu0 0.0
        %3991 = vmatprep.subr.mxu0 0.0
        %3992 = vmatpush1.msra.mxu0 0.0
        %3993 = vmatprep.mubr.f32.mxu0 0.0
        %3994 = vmatmul.mubr.f32.gmra.mrb[0].mxu0 %v3918
        %v3995 = vpop.f32.mrb[0].mxu0
        %v3996 = vadd.f32 %v3900, %v3995
        %v3997 = vpop.f32.mrb[0].mxu0
        %v3998 = vadd.f32 %v3900, %v3997
        %3999 = vmatprep.mubr.f32.mxu0 0.0
        %4000 = vmatmul.mubr.f32.gmra.mrb[0].mxu0 %v3921
        %v4001 = vpop.f32.mrb[0].mxu0
        %v4002 = vadd.f32 %v3905, %v4001
        %v4003 = vpop.f32.mrb[0].mxu0
        %v4004 = vadd.f32 %v3905, %v4003
        %4005 = vmatprep.mubr.f32.mxu0 0.0
        %4006 = vmatmul.mubr.f32.gmra.mrb[0].mxu0 %v3924
        %v4007 = vpop.f32.mrb[0].mxu0
        %v4008 = vadd.f32 %v3910, %v4007
        %v4009 = vpop.f32.mrb[0].mxu0
        %v4010 = vadd.f32 %v3910, %v4009
        %4011 = vmatprep.mubr.f32.mxu0 0.0
        %4012 = vmatmul.mubr.f32.gmra.mrb[0].mxu0 %v3927
        %v4013 = vpop.f32.mrb[0].mxu0
        %v4014 = vadd.f32 %v3915, %v4013
        %v4015 = vpop.f32.mrb[0].mxu0
        %v4016 = vadd.f32 %v3915, %v4015
        %4017 = vdwg.mxu0
        %4018 = vmatprep.subr.mxu0 %v3826
        %4019 = vmatpush1.msra.mxu0 %v3825
        %4020 = vmatprep.subr.mxu0 %v3842
        %4021 = vmatpush1.msra.mxu0 %v3841
        %4022 = vmatprep.subr.mxu0 %v3858
        %4023 = vmatpush1.msra.mxu0 %v3857
        %4024 = vmatprep.subr.mxu0 %v3874
        %4025 = vmatpush1.msra.mxu0 %v3873
        %4026 = vmatprep.subr.mxu0 0.0
        %4027 = vmatpush1.msra.mxu0 0.0
        %4028 = vmatprep.subr.mxu0 0.0
        %4029 = vmatpush1.msra.mxu0 0.0
        %4030 = vmatprep.subr.mxu0 0.0
        %4031 = vmatpush1.msra.mxu0 0.0
        %4032 = vmatprep.subr.mxu0 0.0
        %4033 = vmatpush1.msra.mxu0 0.0
        %4034 = vmatprep.subr.mxu0 0.0
        %4035 = vmatpush1.msra.mxu0 0.0
        %4036 = vmatprep.subr.mxu0 0.0
        %4037 = vmatpush1.msra.mxu0 0.0
        %4038 = vmatprep.subr.mxu0 0.0
        %4039 = vmatpush1.msra.mxu0 0.0
        %4040 = vmatprep.subr.mxu0 0.0
        %4041 = vmatpush1.msra.mxu0 0.0
        %4042 = vmatprep.subr.mxu0 0.0
        %4043 = vmatpush1.msra.mxu0 0.0
        %4044 = vmatprep.subr.mxu0 0.0
        %4045 = vmatpush1.msra.mxu0 0.0
        %4046 = vmatprep.subr.mxu0 0.0
        %4047 = vmatpush1.msra.mxu0 0.0
        %4048 = vmatprep.subr.mxu0 0.0
        %4049 = vmatpush1.msra.mxu0 0.0
        %4050 = vmatprep.subr.mxu0 0.0
        %4051 = vmatpush1.msra.mxu0 0.0
        %4052 = vmatprep.subr.mxu0 0.0
        %4053 = vmatpush1.msra.mxu0 0.0
        %4054 = vmatprep.subr.mxu0 0.0
        %4055 = vmatpush1.msra.mxu0 0.0
        %4056 = vmatprep.subr.mxu0 0.0
        %4057 = vmatpush1.msra.mxu0 0.0
        %4058 = vmatprep.subr.mxu0 0.0
        %4059 = vmatpush1.msra.mxu0 0.0
        %4060 = vmatprep.subr.mxu0 0.0
        %4061 = vmatpush1.msra.mxu0 0.0
        %4062 = vmatprep.subr.mxu0 0.0
        %4063 = vmatpush1.msra.mxu0 0.0
        %4064 = vmatprep.subr.mxu0 0.0
        %4065 = vmatpush1.msra.mxu0 0.0
        %4066 = vmatprep.subr.mxu0 0.0
        %4067 = vmatpush1.msra.mxu0 0.0
        %4068 = vmatprep.subr.mxu0 0.0
        %4069 = vmatpush1.msra.mxu0 0.0
        %4070 = vmatprep.subr.mxu0 0.0
        %4071 = vmatpush1.msra.mxu0 0.0
        %4072 = vmatprep.subr.mxu0 0.0
        %4073 = vmatpush1.msra.mxu0 0.0
        %4074 = vmatprep.subr.mxu0 0.0
        %4075 = vmatpush1.msra.mxu0 0.0
        %4076 = vmatprep.subr.mxu0 0.0
        %4077 = vmatpush1.msra.mxu0 0.0
        %4078 = vmatprep.subr.mxu0 0.0
        %4079 = vmatpush1.msra.mxu0 0.0
        %4080 = vmatprep.subr.mxu0 0.0
        %4081 = vmatpush1.msra.mxu0 0.0
        %4082 = vmatprep.mubr.f32.mxu0 0.0
        %4083 = vmatmul.mubr.f32.gmra.mrb[0].mxu0 %v3918
        %v4084 = vpop.f32.mrb[0].mxu0
        %v4085 = vadd.f32 %v3900, %v4084
        %v4086 = vpop.f32.mrb[0].mxu0
        %v4087 = vadd.f32 %v3900, %v4086
        %4088 = vmatprep.mubr.f32.mxu0 0.0
        %4089 = vmatmul.mubr.f32.gmra.mrb[0].mxu0 %v3921
        %v4090 = vpop.f32.mrb[0].mxu0
        %v4091 = vadd.f32 %v3905, %v4090
        %v4092 = vpop.f32.mrb[0].mxu0
        %v4093 = vadd.f32 %v3905, %v4092
        %4094 = vmatprep.mubr.f32.mxu0 0.0
        %4095 = vmatmul.mubr.f32.gmra.mrb[0].mxu0 %v3924
        %v4096 = vpop.f32.mrb[0].mxu0
        %v4097 = vadd.f32 %v3910, %v4096
        %v4098 = vpop.f32.mrb[0].mxu0
        %v4099 = vadd.f32 %v3910, %v4098
        %4100 = vmatprep.mubr.f32.mxu0 0.0
        %4101 = vmatmul.mubr.f32.gmra.mrb[0].mxu0 %v3927
        %v4102 = vpop.f32.mrb[0].mxu0
        %v4103 = vadd.f32 %v3915, %v4102
        %v4104 = vpop.f32.mrb[0].mxu0
        %v4105 = vadd.f32 %v3915, %v4104
        %4106 = vdwg.mxu0
        %4107 = vmatprep.subr.mxu0 %v3828
        %4108 = vmatpush1.msra.mxu0 %v3827
        %4109 = vmatprep.subr.mxu0 %v3844
        %4110 = vmatpush1.msra.mxu0 %v3843
        %4111 = vmatprep.subr.mxu0 %v3860
        %4112 = vmatpush1.msra.mxu0 %v3859
        %4113 = vmatprep.subr.mxu0 %v3876
        %4114 = vmatpush1.msra.mxu0 %v3875
        %4115 = vmatprep.subr.mxu0 0.0
        %4116 = vmatpush1.msra.mxu0 0.0
        %4117 = vmatprep.subr.mxu0 0.0
        %4118 = vmatpush1.msra.mxu0 0.0
        %4119 = vmatprep.subr.mxu0 0.0
        %4120 = vmatpush1.msra.mxu0 0.0
        %4121 = vmatprep.subr.mxu0 0.0
        %4122 = vmatpush1.msra.mxu0 0.0
        %4123 = vmatprep.subr.mxu0 0.0
        %4124 = vmatpush1.msra.mxu0 0.0
        %4125 = vmatprep.subr.mxu0 0.0
        %4126 = vmatpush1.msra.mxu0 0.0
        %4127 = vmatprep.subr.mxu0 0.0
        %4128 = vmatpush1.msra.mxu0 0.0
        %4129 = vmatprep.subr.mxu0 0.0
        %4130 = vmatpush1.msra.mxu0 0.0
        %4131 = vmatprep.subr.mxu0 0.0
        %4132 = vmatpush1.msra.mxu0 0.0
        %4133 = vmatprep.subr.mxu0 0.0
        %4134 = vmatpush1.msra.mxu0 0.0
        %4135 = vmatprep.subr.mxu0 0.0
        %4136 = vmatpush1.msra.mxu0 0.0
        %4137 = vmatprep.subr.mxu0 0.0
        %4138 = vmatpush1.msra.mxu0 0.0
        %4139 = vmatprep.subr.mxu0 0.0
        %4140 = vmatpush1.msra.mxu0 0.0
        %4141 = vmatprep.subr.mxu0 0.0
        %4142 = vmatpush1.msra.mxu0 0.0
        %4143 = vmatprep.subr.mxu0 0.0
        %4144 = vmatpush1.msra.mxu0 0.0
        %4145 = vmatprep.subr.mxu0 0.0
        %4146 = vmatpush1.msra.mxu0 0.0
        %4147 = vmatprep.subr.mxu0 0.0
        %4148 = vmatpush1.msra.mxu0 0.0
        %4149 = vmatprep.subr.mxu0 0.0
        %4150 = vmatpush1.msra.mxu0 0.0
        %4151 = vmatprep.subr.mxu0 0.0
        %4152 = vmatpush1.msra.mxu0 0.0
        %4153 = vmatprep.subr.mxu0 0.0
        %4154 = vmatpush1.msra.mxu0 0.0
        %4155 = vmatprep.subr.mxu0 0.0
        %4156 = vmatpush1.msra.mxu0 0.0
        %4157 = vmatprep.subr.mxu0 0.0
        %4158 = vmatpush1.msra.mxu0 0.0
        %4159 = vmatprep.subr.mxu0 0.0
        %4160 = vmatpush1.msra.mxu0 0.0
        %4161 = vmatprep.subr.mxu0 0.0
        %4162 = vmatpush1.msra.mxu0 0.0
        %4163 = vmatprep.subr.mxu0 0.0
        %4164 = vmatpush1.msra.mxu0 0.0
        %4165 = vmatprep.subr.mxu0 0.0
        %4166 = vmatpush1.msra.mxu0 0.0
        %4167 = vmatprep.subr.mxu0 0.0
        %4168 = vmatpush1.msra.mxu0 0.0
        %4169 = vmatprep.subr.mxu0 0.0
        %4170 = vmatpush1.msra.mxu0 0.0
        %4171 = vmatprep.mubr.f32.mxu0 0.0
        %4172 = vmatmul.mubr.f32.gmra.mrb[0].mxu0 %v3918
        %v4173 = vpop.f32.mrb[0].mxu0
        %v4174 = vadd.f32 %v3900, %v4173
        %v4175 = vpop.f32.mrb[0].mxu0
        %v4176 = vadd.f32 %v3900, %v4175
        %4177 = vmatprep.mubr.f32.mxu0 0.0
        %4178 = vmatmul.mubr.f32.gmra.mrb[0].mxu0 %v3921
        %v4179 = vpop.f32.mrb[0].mxu0
        %v4180 = vadd.f32 %v3905, %v4179
        %v4181 = vpop.f32.mrb[0].mxu0
        %v4182 = vadd.f32 %v3905, %v4181
        %4183 = vmatprep.mubr.f32.mxu0 0.0
        %4184 = vmatmul.mubr.f32.gmra.mrb[0].mxu0 %v3924
        %v4185 = vpop.f32.mrb[0].mxu0
        %v4186 = vadd.f32 %v3910, %v4185
        %v4187 = vpop.f32.mrb[0].mxu0
        %v4188 = vadd.f32 %v3910, %v4187
        %4189 = vmatprep.mubr.f32.mxu0 0.0
        %4190 = vmatmul.mubr.f32.gmra.mrb[0].mxu0 %v3927
        %v4191 = vpop.f32.mrb[0].mxu0
        %v4192 = vadd.f32 %v3915, %v4191
        %v4193 = vpop.f32.mrb[0].mxu0
        %v4194 = vadd.f32 %v3915, %v4193
        %4195 = vdwg.mxu0
        %4196 = vmatprep.subr.mxu0 %v3830
        %4197 = vmatpush1.msra.mxu0 %v3829
        %4198 = vmatprep.subr.mxu0 %v3846
        %4199 = vmatpush1.msra.mxu0 %v3845
        %4200 = vmatprep.subr.mxu0 %v3862
        %4201 = vmatpush1.msra.mxu0 %v3861
        %4202 = vmatprep.subr.mxu0 %v3878
        %4203 = vmatpush1.msra.mxu0 %v3877
        %4204 = vmatprep.subr.mxu0 0.0
        %4205 = vmatpush1.msra.mxu0 0.0
        %4206 = vmatprep.subr.mxu0 0.0
        %4207 = vmatpush1.msra.mxu0 0.0
        %4208 = vmatprep.subr.mxu0 0.0
        %4209 = vmatpush1.msra.mxu0 0.0
        %4210 = vmatprep.subr.mxu0 0.0
        %4211 = vmatpush1.msra.mxu0 0.0
        %4212 = vmatprep.subr.mxu0 0.0
        %4213 = vmatpush1.msra.mxu0 0.0
        %4214 = vmatprep.subr.mxu0 0.0
        %4215 = vmatpush1.msra.mxu0 0.0
        %4216 = vmatprep.subr.mxu0 0.0
        %4217 = vmatpush1.msra.mxu0 0.0
        %4218 = vmatprep.subr.mxu0 0.0
        %4219 = vmatpush1.msra.mxu0 0.0
        %4220 = vmatprep.subr.mxu0 0.0
        %4221 = vmatpush1.msra.mxu0 0.0
        %4222 = vmatprep.subr.mxu0 0.0
        %4223 = vmatpush1.msra.mxu0 0.0
        %4224 = vmatprep.subr.mxu0 0.0
        %4225 = vmatpush1.msra.mxu0 0.0
        %4226 = vmatprep.subr.mxu0 0.0
        %4227 = vmatpush1.msra.mxu0 0.0
        %4228 = vmatprep.subr.mxu0 0.0
        %4229 = vmatpush1.msra.mxu0 0.0
        %4230 = vmatprep.subr.mxu0 0.0
        %4231 = vmatpush1.msra.mxu0 0.0
        %4232 = vmatprep.subr.mxu0 0.0
        %4233 = vmatpush1.msra.mxu0 0.0
        %4234 = vmatprep.subr.mxu0 0.0
        %4235 = vmatpush1.msra.mxu0 0.0
        %4236 = vmatprep.subr.mxu0 0.0
        %4237 = vmatpush1.msra.mxu0 0.0
        %4238 = vmatprep.subr.mxu0 0.0
        %4239 = vmatpush1.msra.mxu0 0.0
        %4240 = vmatprep.subr.mxu0 0.0
        %4241 = vmatpush1.msra.mxu0 0.0
        %4242 = vmatprep.subr.mxu0 0.0
        %4243 = vmatpush1.msra.mxu0 0.0
        %4244 = vmatprep.subr.mxu0 0.0
        %4245 = vmatpush1.msra.mxu0 0.0
        %4246 = vmatprep.subr.mxu0 0.0
        %4247 = vmatpush1.msra.mxu0 0.0
        %4248 = vmatprep.subr.mxu0 0.0
        %4249 = vmatpush1.msra.mxu0 0.0
        %4250 = vmatprep.subr.mxu0 0.0
        %4251 = vmatpush1.msra.mxu0 0.0
        %4252 = vmatprep.subr.mxu0 0.0
        %4253 = vmatpush1.msra.mxu0 0.0
        %4254 = vmatprep.subr.mxu0 0.0
        %4255 = vmatpush1.msra.mxu0 0.0
        %4256 = vmatprep.subr.mxu0 0.0
        %4257 = vmatpush1.msra.mxu0 0.0
        %4258 = vmatprep.subr.mxu0 0.0
        %4259 = vmatpush1.msra.mxu0 0.0
        %4260 = vmatprep.mubr.f32.mxu0 0.0
        %4261 = vmatmul.mubr.f32.gmra.mrb[0].mxu0 %v3918
        %v4262 = vpop.f32.mrb[0].mxu0
        %v4263 = vadd.f32 %v3900, %v4262
        %v4264 = vpop.f32.mrb[0].mxu0
        %v4265 = vadd.f32 %v3900, %v4264
        %4266 = vmatprep.mubr.f32.mxu0 0.0
        %4267 = vmatmul.mubr.f32.gmra.mrb[0].mxu0 %v3921
        %v4268 = vpop.f32.mrb[0].mxu0
        %v4269 = vadd.f32 %v3905, %v4268
        %v4270 = vpop.f32.mrb[0].mxu0
        %v4271 = vadd.f32 %v3905, %v4270
        %4272 = vmatprep.mubr.f32.mxu0 0.0
        %4273 = vmatmul.mubr.f32.gmra.mrb[0].mxu0 %v3924
        %v4274 = vpop.f32.mrb[0].mxu0
        %v4275 = vadd.f32 %v3910, %v4274
        %v4276 = vpop.f32.mrb[0].mxu0
        %v4277 = vadd.f32 %v3910, %v4276
        %4278 = vmatprep.mubr.f32.mxu0 0.0
        %4279 = vmatmul.mubr.f32.gmra.mrb[0].mxu0 %v3927
        %v4280 = vpop.f32.mrb[0].mxu0
        %v4281 = vadd.f32 %v3915, %v4280
        %v4282 = vpop.f32.mrb[0].mxu0
        %v4283 = vadd.f32 %v3915, %v4282
        %4284 = vdwg.mxu0
        %4285 = vmatprep.subr.mxu0 %v3832
        %4286 = vmatpush1.msra.mxu0 %v3831
        %4287 = vmatprep.subr.mxu0 %v3848
        %4288 = vmatpush1.msra.mxu0 %v3847
        %4289 = vmatprep.subr.mxu0 %v3864
        %4290 = vmatpush1.msra.mxu0 %v3863
        %4291 = vmatprep.subr.mxu0 %v3880
        %4292 = vmatpush1.msra.mxu0 %v3879
        %4293 = vmatprep.subr.mxu0 0.0
        %4294 = vmatpush1.msra.mxu0 0.0
        %4295 = vmatprep.subr.mxu0 0.0
        %4296 = vmatpush1.msra.mxu0 0.0
        %4297 = vmatprep.subr.mxu0 0.0
        %4298 = vmatpush1.msra.mxu0 0.0
        %4299 = vmatprep.subr.mxu0 0.0
        %4300 = vmatpush1.msra.mxu0 0.0
        %4301 = vmatprep.subr.mxu0 0.0
        %4302 = vmatpush1.msra.mxu0 0.0
        %4303 = vmatprep.subr.mxu0 0.0
        %4304 = vmatpush1.msra.mxu0 0.0
        %4305 = vmatprep.subr.mxu0 0.0
        %4306 = vmatpush1.msra.mxu0 0.0
        %4307 = vmatprep.subr.mxu0 0.0
        %4308 = vmatpush1.msra.mxu0 0.0
        %4309 = vmatprep.subr.mxu0 0.0
        %4310 = vmatpush1.msra.mxu0 0.0
        %4311 = vmatprep.subr.mxu0 0.0
        %4312 = vmatpush1.msra.mxu0 0.0
        %4313 = vmatprep.subr.mxu0 0.0
        %4314 = vmatpush1.msra.mxu0 0.0
        %4315 = vmatprep.subr.mxu0 0.0
        %4316 = vmatpush1.msra.mxu0 0.0
        %4317 = vmatprep.subr.mxu0 0.0
        %4318 = vmatpush1.msra.mxu0 0.0
        %4319 = vmatprep.subr.mxu0 0.0
        %4320 = vmatpush1.msra.mxu0 0.0
        %4321 = vmatprep.subr.mxu0 0.0
        %4322 = vmatpush1.msra.mxu0 0.0
        %4323 = vmatprep.subr.mxu0 0.0
        %4324 = vmatpush1.msra.mxu0 0.0
        %4325 = vmatprep.subr.mxu0 0.0
        %4326 = vmatpush1.msra.mxu0 0.0
        %4327 = vmatprep.subr.mxu0 0.0
        %4328 = vmatpush1.msra.mxu0 0.0
        %4329 = vmatprep.subr.mxu0 0.0
        %4330 = vmatpush1.msra.mxu0 0.0
        %4331 = vmatprep.subr.mxu0 0.0
        %4332 = vmatpush1.msra.mxu0 0.0
        %4333 = vmatprep.subr.mxu0 0.0
        %4334 = vmatpush1.msra.mxu0 0.0
        %4335 = vmatprep.subr.mxu0 0.0
        %4336 = vmatpush1.msra.mxu0 0.0
        %4337 = vmatprep.subr.mxu0 0.0
        %4338 = vmatpush1.msra.mxu0 0.0
        %4339 = vmatprep.subr.mxu0 0.0
        %4340 = vmatpush1.msra.mxu0 0.0
        %4341 = vmatprep.subr.mxu0 0.0
        %4342 = vmatpush1.msra.mxu0 0.0
        %4343 = vmatprep.subr.mxu0 0.0
        %4344 = vmatpush1.msra.mxu0 0.0
        %4345 = vmatprep.subr.mxu0 0.0
        %4346 = vmatpush1.msra.mxu0 0.0
        %4347 = vmatprep.subr.mxu0 0.0
        %4348 = vmatpush1.msra.mxu0 0.0
        %4349 = vmatprep.mubr.f32.mxu0 0.0
        %4350 = vmatmul.mubr.f32.gmra.mrb[0].mxu0 %v3918
        %v4351 = vpop.f32.mrb[0].mxu0
        %v4352 = vadd.f32 %v3900, %v4351
        %v4353 = vpop.f32.mrb[0].mxu0
        %v4354 = vadd.f32 %v3900, %v4353
        %4355 = vmatprep.mubr.f32.mxu0 0.0
        %4356 = vmatmul.mubr.f32.gmra.mrb[0].mxu0 %v3921
        %v4357 = vpop.f32.mrb[0].mxu0
        %v4358 = vadd.f32 %v3905, %v4357
        %v4359 = vpop.f32.mrb[0].mxu0
        %v4360 = vadd.f32 %v3905, %v4359
        %4361 = vmatprep.mubr.f32.mxu0 0.0
        %4362 = vmatmul.mubr.f32.gmra.mrb[0].mxu0 %v3924
        %v4363 = vpop.f32.mrb[0].mxu0
        %v4364 = vadd.f32 %v3910, %v4363
        %v4365 = vpop.f32.mrb[0].mxu0
        %v4366 = vadd.f32 %v3910, %v4365
        %4367 = vmatprep.mubr.f32.mxu0 0.0
        %4368 = vmatmul.mubr.f32.gmra.mrb[0].mxu0 %v3927
        %v4369 = vpop.f32.mrb[0].mxu0
        %v4370 = vadd.f32 %v3915, %v4369
        %v4371 = vpop.f32.mrb[0].mxu0
        %v4372 = vadd.f32 %v3915, %v4371
        %4373 = vdwg.mxu0
        %4374 = vmatprep.subr.mxu0 %v3834
        %4375 = vmatpush1.msra.mxu0 %v3833
        %4376 = vmatprep.subr.mxu0 %v3850
        %4377 = vmatpush1.msra.mxu0 %v3849
        %4378 = vmatprep.subr.mxu0 %v3866
        %4379 = vmatpush1.msra.mxu0 %v3865
        %4380 = vmatprep.subr.mxu0 %v3882
        %4381 = vmatpush1.msra.mxu0 %v3881
        %4382 = vmatprep.subr.mxu0 0.0
        %4383 = vmatpush1.msra.mxu0 0.0
        %4384 = vmatprep.subr.mxu0 0.0
        %4385 = vmatpush1.msra.mxu0 0.0
        %4386 = vmatprep.subr.mxu0 0.0
        %4387 = vmatpush1.msra.mxu0 0.0
        %4388 = vmatprep.subr.mxu0 0.0
        %4389 = vmatpush1.msra.mxu0 0.0
        %4390 = vmatprep.subr.mxu0 0.0
        %4391 = vmatpush1.msra.mxu0 0.0
        %4392 = vmatprep.subr.mxu0 0.0
        %4393 = vmatpush1.msra.mxu0 0.0
        %4394 = vmatprep.subr.mxu0 0.0
        %4395 = vmatpush1.msra.mxu0 0.0
        %4396 = vmatprep.subr.mxu0 0.0
        %4397 = vmatpush1.msra.mxu0 0.0
        %4398 = vmatprep.subr.mxu0 0.0
        %4399 = vmatpush1.msra.mxu0 0.0
        %4400 = vmatprep.subr.mxu0 0.0
        %4401 = vmatpush1.msra.mxu0 0.0
        %4402 = vmatprep.subr.mxu0 0.0
        %4403 = vmatpush1.msra.mxu0 0.0
        %4404 = vmatprep.subr.mxu0 0.0
        %4405 = vmatpush1.msra.mxu0 0.0
        %4406 = vmatprep.subr.mxu0 0.0
        %4407 = vmatpush1.msra.mxu0 0.0
        %4408 = vmatprep.subr.mxu0 0.0
        %4409 = vmatpush1.msra.mxu0 0.0
        %4410 = vmatprep.subr.mxu0 0.0
        %4411 = vmatpush1.msra.mxu0 0.0
        %4412 = vmatprep.subr.mxu0 0.0
        %4413 = vmatpush1.msra.mxu0 0.0
        %4414 = vmatprep.subr.mxu0 0.0
        %4415 = vmatpush1.msra.mxu0 0.0
        %4416 = vmatprep.subr.mxu0 0.0
        %4417 = vmatpush1.msra.mxu0 0.0
        %4418 = vmatprep.subr.mxu0 0.0
        %4419 = vmatpush1.msra.mxu0 0.0
        %4420 = vmatprep.subr.mxu0 0.0
        %4421 = vmatpush1.msra.mxu0 0.0
        %4422 = vmatprep.subr.mxu0 0.0
        %4423 = vmatpush1.msra.mxu0 0.0
        %4424 = vmatprep.subr.mxu0 0.0
        %4425 = vmatpush1.msra.mxu0 0.0
        %4426 = vmatprep.subr.mxu0 0.0
        %4427 = vmatpush1.msra.mxu0 0.0
        %4428 = vmatprep.subr.mxu0 0.0
        %4429 = vmatpush1.msra.mxu0 0.0
        %4430 = vmatprep.subr.mxu0 0.0
        %4431 = vmatpush1.msra.mxu0 0.0
        %4432 = vmatprep.subr.mxu0 0.0
        %4433 = vmatpush1.msra.mxu0 0.0
        %4434 = vmatprep.subr.mxu0 0.0
        %4435 = vmatpush1.msra.mxu0 0.0
        %4436 = vmatprep.subr.mxu0 0.0
        %4437 = vmatpush1.msra.mxu0 0.0
        %4438 = vmatprep.mubr.f32.mxu0 0.0
        %4439 = vmatmul.mubr.f32.gmra.mrb[0].mxu0 %v3918
        %v4440 = vpop.f32.mrb[0].mxu0
        %v4441 = vadd.f32 %v3900, %v4440
        %v4442 = vpop.f32.mrb[0].mxu0
        %v4443 = vadd.f32 %v3900, %v4442
        %4444 = vmatprep.mubr.f32.mxu0 0.0
        %4445 = vmatmul.mubr.f32.gmra.mrb[0].mxu0 %v3921
        %v4446 = vpop.f32.mrb[0].mxu0
        %v4447 = vadd.f32 %v3905, %v4446
        %v4448 = vpop.f32.mrb[0].mxu0
        %v4449 = vadd.f32 %v3905, %v4448
        %4450 = vmatprep.mubr.f32.mxu0 0.0
        %4451 = vmatmul.mubr.f32.gmra.mrb[0].mxu0 %v3924
        %v4452 = vpop.f32.mrb[0].mxu0
        %v4453 = vadd.f32 %v3910, %v4452
        %v4454 = vpop.f32.mrb[0].mxu0
        %v4455 = vadd.f32 %v3910, %v4454
        %4456 = vmatprep.mubr.f32.mxu0 0.0
        %4457 = vmatmul.mubr.f32.gmra.mrb[0].mxu0 %v3927
        %v4458 = vpop.f32.mrb[0].mxu0
        %v4459 = vadd.f32 %v3915, %v4458
        %v4460 = vpop.f32.mrb[0].mxu0
        %v4461 = vadd.f32 %v3915, %v4460
        %4462 = vdwg.mxu0
        %4463 = vmatprep.subr.mxu0 %v3836
        %4464 = vmatpush1.msra.mxu0 %v3835
        %4465 = vmatprep.subr.mxu0 %v3852
        %4466 = vmatpush1.msra.mxu0 %v3851
        %4467 = vmatprep.subr.mxu0 %v3868
        %4468 = vmatpush1.msra.mxu0 %v3867
        %4469 = vmatprep.subr.mxu0 %v3884
        %4470 = vmatpush1.msra.mxu0 %v3883
        %4471 = vmatprep.subr.mxu0 0.0
        %4472 = vmatpush1.msra.mxu0 0.0
        %4473 = vmatprep.subr.mxu0 0.0
        %4474 = vmatpush1.msra.mxu0 0.0
        %4475 = vmatprep.subr.mxu0 0.0
        %4476 = vmatpush1.msra.mxu0 0.0
        %4477 = vmatprep.subr.mxu0 0.0
        %4478 = vmatpush1.msra.mxu0 0.0
        %4479 = vmatprep.subr.mxu0 0.0
        %4480 = vmatpush1.msra.mxu0 0.0
        %4481 = vmatprep.subr.mxu0 0.0
        %4482 = vmatpush1.msra.mxu0 0.0
        %4483 = vmatprep.subr.mxu0 0.0
        %4484 = vmatpush1.msra.mxu0 0.0
        %4485 = vmatprep.subr.mxu0 0.0
        %4486 = vmatpush1.msra.mxu0 0.0
        %4487 = vmatprep.subr.mxu0 0.0
        %4488 = vmatpush1.msra.mxu0 0.0
        %4489 = vmatprep.subr.mxu0 0.0
        %4490 = vmatpush1.msra.mxu0 0.0
        %4491 = vmatprep.subr.mxu0 0.0
        %4492 = vmatpush1.msra.mxu0 0.0
        %4493 = vmatprep.subr.mxu0 0.0
        %4494 = vmatpush1.msra.mxu0 0.0
        %4495 = vmatprep.subr.mxu0 0.0
        %4496 = vmatpush1.msra.mxu0 0.0
        %4497 = vmatprep.subr.mxu0 0.0
        %4498 = vmatpush1.msra.mxu0 0.0
        %4499 = vmatprep.subr.mxu0 0.0
        %4500 = vmatpush1.msra.mxu0 0.0
        %4501 = vmatprep.subr.mxu0 0.0
        %4502 = vmatpush1.msra.mxu0 0.0
        %4503 = vmatprep.subr.mxu0 0.0
        %4504 = vmatpush1.msra.mxu0 0.0
        %4505 = vmatprep.subr.mxu0 0.0
        %4506 = vmatpush1.msra.mxu0 0.0
        %4507 = vmatprep.subr.mxu0 0.0
        %4508 = vmatpush1.msra.mxu0 0.0
        %4509 = vmatprep.subr.mxu0 0.0
        %4510 = vmatpush1.msra.mxu0 0.0
        %4511 = vmatprep.subr.mxu0 0.0
        %4512 = vmatpush1.msra.mxu0 0.0
        %4513 = vmatprep.subr.mxu0 0.0
        %4514 = vmatpush1.msra.mxu0 0.0
        %4515 = vmatprep.subr.mxu0 0.0
        %4516 = vmatpush1.msra.mxu0 0.0
        %4517 = vmatprep.subr.mxu0 0.0
        %4518 = vmatpush1.msra.mxu0 0.0
        %4519 = vmatprep.subr.mxu0 0.0
        %4520 = vmatpush1.msra.mxu0 0.0
        %4521 = vmatprep.subr.mxu0 0.0
        %4522 = vmatpush1.msra.mxu0 0.0
        %4523 = vmatprep.subr.mxu0 0.0
        %4524 = vmatpush1.msra.mxu0 0.0
        %4525 = vmatprep.subr.mxu0 0.0
        %4526 = vmatpush1.msra.mxu0 0.0
        %4527 = vmatprep.mubr.f32.mxu0 0.0
        %4528 = vmatmul.mubr.f32.gmra.mrb[0].mxu0 %v3918
        %v4529 = vpop.f32.mrb[0].mxu0
        %v4530 = vadd.f32 %v3900, %v4529
        %v4531 = vpop.f32.mrb[0].mxu0
        %v4532 = vadd.f32 %v3900, %v4531
        %4533 = vmatprep.mubr.f32.mxu0 0.0
        %4534 = vmatmul.mubr.f32.gmra.mrb[0].mxu0 %v3921
        %v4535 = vpop.f32.mrb[0].mxu0
        %v4536 = vadd.f32 %v3905, %v4535
        %v4537 = vpop.f32.mrb[0].mxu0
        %v4538 = vadd.f32 %v3905, %v4537
        %4539 = vmatprep.mubr.f32.mxu0 0.0
        %4540 = vmatmul.mubr.f32.gmra.mrb[0].mxu0 %v3924
        %v4541 = vpop.f32.mrb[0].mxu0
        %v4542 = vadd.f32 %v3910, %v4541
        %v4543 = vpop.f32.mrb[0].mxu0
        %v4544 = vadd.f32 %v3910, %v4543
        %4545 = vmatprep.mubr.f32.mxu0 0.0
        %4546 = vmatmul.mubr.f32.gmra.mrb[0].mxu0 %v3927
        %v4547 = vpop.f32.mrb[0].mxu0
        %v4548 = vadd.f32 %v3915, %v4547
        %v4549 = vpop.f32.mrb[0].mxu0
        %v4550 = vadd.f32 %v3915, %v4549
        %4551 = vdwg.mxu0
        %4552 = vmatprep.subr.mxu0 %v3838
        %4553 = vmatpush1.msra.mxu0 %v3837
        %4554 = vmatprep.subr.mxu0 %v3854
        %4555 = vmatpush1.msra.mxu0 %v3853
        %4556 = vmatprep.subr.mxu0 %v3870
        %4557 = vmatpush1.msra.mxu0 %v3869
        %4558 = vmatprep.subr.mxu0 %v3886
        %4559 = vmatpush1.msra.mxu0 %v3885
        %4560 = vmatprep.subr.mxu0 0.0
        %4561 = vmatpush1.msra.mxu0 0.0
        %4562 = vmatprep.subr.mxu0 0.0
        %4563 = vmatpush1.msra.mxu0 0.0
        %4564 = vmatprep.subr.mxu0 0.0
        %4565 = vmatpush1.msra.mxu0 0.0
        %4566 = vmatprep.subr.mxu0 0.0
        %4567 = vmatpush1.msra.mxu0 0.0
        %4568 = vmatprep.subr.mxu0 0.0
        %4569 = vmatpush1.msra.mxu0 0.0
        %4570 = vmatprep.subr.mxu0 0.0
        %4571 = vmatpush1.msra.mxu0 0.0
        %4572 = vmatprep.subr.mxu0 0.0
        %4573 = vmatpush1.msra.mxu0 0.0
        %4574 = vmatprep.subr.mxu0 0.0
        %4575 = vmatpush1.msra.mxu0 0.0
        %4576 = vmatprep.subr.mxu0 0.0
        %4577 = vmatpush1.msra.mxu0 0.0
        %4578 = vmatprep.subr.mxu0 0.0
        %4579 = vmatpush1.msra.mxu0 0.0
        %4580 = vmatprep.subr.mxu0 0.0
        %4581 = vmatpush1.msra.mxu0 0.0
        %4582 = vmatprep.subr.mxu0 0.0
        %4583 = vmatpush1.msra.mxu0 0.0
        %4584 = vmatprep.subr.mxu0 0.0
        %4585 = vmatpush1.msra.mxu0 0.0
        %4586 = vmatprep.subr.mxu0 0.0
        %4587 = vmatpush1.msra.mxu0 0.0
        %4588 = vmatprep.subr.mxu0 0.0
        %4589 = vmatpush1.msra.mxu0 0.0
        %4590 = vmatprep.subr.mxu0 0.0
        %4591 = vmatpush1.msra.mxu0 0.0
        %4592 = vmatprep.subr.mxu0 0.0
        %4593 = vmatpush1.msra.mxu0 0.0
        %4594 = vmatprep.subr.mxu0 0.0
        %4595 = vmatpush1.msra.mxu0 0.0
        %4596 = vmatprep.subr.mxu0 0.0
        %4597 = vmatpush1.msra.mxu0 0.0
        %4598 = vmatprep.subr.mxu0 0.0
        %4599 = vmatpush1.msra.mxu0 0.0
        %4600 = vmatprep.subr.mxu0 0.0
        %4601 = vmatpush1.msra.mxu0 0.0
        %4602 = vmatprep.subr.mxu0 0.0
        %4603 = vmatpush1.msra.mxu0 0.0
        %4604 = vmatprep.subr.mxu0 0.0
        %4605 = vmatpush1.msra.mxu0 0.0
        %4606 = vmatprep.subr.mxu0 0.0
        %4607 = vmatpush1.msra.mxu0 0.0
        %4608 = vmatprep.subr.mxu0 0.0
        %4609 = vmatpush1.msra.mxu0 0.0
        %4610 = vmatprep.subr.mxu0 0.0
        %4611 = vmatpush1.msra.mxu0 0.0
        %4612 = vmatprep.subr.mxu0 0.0
        %4613 = vmatpush1.msra.mxu0 0.0
        %4614 = vmatprep.subr.mxu0 0.0
        %4615 = vmatpush1.msra.mxu0 0.0
        %4616 = vmatprep.mubr.f32.mxu0 0.0
        %4617 = vmatmul.mubr.f32.gmra.mrb[0].mxu0 %v3918
        %v4618 = vpop.f32.mrb[0].mxu0
        %v4619 = vadd.f32 %v3900, %v4618
        %v4620 = vpop.f32.mrb[0].mxu0
        %v4621 = vadd.f32 %v3900, %v4620
        %4622 = vmatprep.mubr.f32.mxu0 0.0
        %4623 = vmatmul.mubr.f32.gmra.mrb[0].mxu0 %v3921
        %v4624 = vpop.f32.mrb[0].mxu0
        %v4625 = vadd.f32 %v3905, %v4624
        %v4626 = vpop.f32.mrb[0].mxu0
        %v4627 = vadd.f32 %v3905, %v4626
        %4628 = vmatprep.mubr.f32.mxu0 0.0
        %4629 = vmatmul.mubr.f32.gmra.mrb[0].mxu0 %v3924
        %v4630 = vpop.f32.mrb[0].mxu0
        %v4631 = vadd.f32 %v3910, %v4630
        %v4632 = vpop.f32.mrb[0].mxu0
        %v4633 = vadd.f32 %v3910, %v4632
        %4634 = vmatprep.mubr.f32.mxu0 0.0
        %4635 = vmatmul.mubr.f32.gmra.mrb[0].mxu0 %v3927
        %v4636 = vpop.f32.mrb[0].mxu0
        %v4637 = vadd.f32 %v3915, %v4636
        %v4638 = vpop.f32.mrb[0].mxu0
        %v4639 = vadd.f32 %v3915, %v4638
        %4640 = vdwg.mxu0
        %v4641 = vtanh.pop %v3996
        %v4642 = vtanh.pop %v3998
        %v4643 = vtanh.pop %v4085
        %v4644 = vtanh.pop %v4087
        %v4645 = vtanh.pop %v4174
        %v4646 = vtanh.pop %v4176
        %v4647 = vtanh.pop %v4263
        %v4648 = vtanh.pop %v4265
        %v4649 = vtanh.pop %v4352
        %v4650 = vtanh.pop %v4354
        %v4651 = vtanh.pop %v4441
        %v4652 = vtanh.pop %v4443
        %v4653 = vtanh.pop %v4530
        %v4654 = vtanh.pop %v4532
        %v4655 = vtanh.pop %v4619
        %v4656 = vtanh.pop %v4621
        %v4657 = vtanh.pop %v4002
        %v4658 = vtanh.pop %v4004
        %v4659 = vtanh.pop %v4091
        %v4660 = vtanh.pop %v4093
        %v4661 = vtanh.pop %v4180
        %v4662 = vtanh.pop %v4182
        %v4663 = vtanh.pop %v4269
        %v4664 = vtanh.pop %v4271
        %v4665 = vtanh.pop %v4358
        %v4666 = vtanh.pop %v4360
        %v4667 = vtanh.pop %v4447
        %v4668 = vtanh.pop %v4449
        %v4669 = vtanh.pop %v4536
        %v4670 = vtanh.pop %v4538
        %v4671 = vtanh.pop %v4625
        %v4672 = vtanh.pop %v4627
        %v4673 = vtanh.pop %v4008
        %v4674 = vtanh.pop %v4010
        %v4675 = vtanh.pop %v4097
        %v4676 = vtanh.pop %v4099
        %v4677 = vtanh.pop %v4186
        %v4678 = vtanh.pop %v4188
        %v4679 = vtanh.pop %v4275
        %v4680 = vtanh.pop %v4277
        %v4681 = vtanh.pop %v4364
        %v4682 = vtanh.pop %v4366
        %v4683 = vtanh.pop %v4453
        %v4684 = vtanh.pop %v4455
        %v4685 = vtanh.pop %v4542
        %v4686 = vtanh.pop %v4544
        %v4687 = vtanh.pop %v4631
        %v4688 = vtanh.pop %v4633
        %v4689 = vtanh.pop %v4014
        %v4690 = vtanh.pop %v4016
        %v4691 = vtanh.pop %v4103
        %v4692 = vtanh.pop %v4105
        %v4693 = vtanh.pop %v4192
        %v4694 = vtanh.pop %v4194
        %v4695 = vtanh.pop %v4281
        %v4696 = vtanh.pop %v4283
        %v4697 = vtanh.pop %v4370
        %v4698 = vtanh.pop %v4372
        %v4699 = vtanh.pop %v4459
        %v4700 = vtanh.pop %v4461
        %v4701 = vtanh.pop %v4548
        %v4702 = vtanh.pop %v4550
        %v4703 = vtanh.pop %v4637
        %v4704 = vtanh.pop %v4639
        %v4705 = vmul.f32 %v4641, %v2750
        %v4706 = vmul.f32 %v4642, %v2751
        %v4707 = vmul.f32 %v4643, %v2752
        %v4708 = vmul.f32 %v4644, %v2753
        %v4709 = vmul.f32 %v4645, %v2754
        %v4710 = vmul.f32 %v4646, %v2755
        %v4711 = vmul.f32 %v4647, %v2756
        %v4712 = vmul.f32 %v4648, %v2757
        %v4713 = vmul.f32 %v4649, %v2758
        %v4714 = vmul.f32 %v4650, %v2759
        %v4715 = vmul.f32 %v4651, %v2760
        %v4716 = vmul.f32 %v4652, %v2761
        %v4717 = vmul.f32 %v4653, %v2762
        %v4718 = vmul.f32 %v4654, %v2763
        %v4719 = vmul.f32 %v4655, %v2764
        %v4720 = vmul.f32 %v4656, %v2765
        %v4721 = vmul.f32 %v4657, %v2766
        %v4722 = vmul.f32 %v4658, %v2767
        %v4723 = vmul.f32 %v4659, %v2768
        %v4724 = vmul.f32 %v4660, %v2769
        %v4725 = vmul.f32 %v4661, %v2770
        %v4726 = vmul.f32 %v4662, %v2771
        %v4727 = vmul.f32 %v4663, %v2772
        %v4728 = vmul.f32 %v4664, %v2773
        %v4729 = vmul.f32 %v4665, %v2774
        %v4730 = vmul.f32 %v4666, %v2775
        %v4731 = vmul.f32 %v4667, %v2776
        %v4732 = vmul.f32 %v4668, %v2777
        %v4733 = vmul.f32 %v4669, %v2778
        %v4734 = vmul.f32 %v4670, %v2779
        %v4735 = vmul.f32 %v4671, %v2780
        %v4736 = vmul.f32 %v4672, %v2781
        %v4737 = vmul.f32 %v4673, %v2782
        %v4738 = vmul.f32 %v4674, %v2783
        %v4739 = vmul.f32 %v4675, %v2784
        %v4740 = vmul.f32 %v4676, %v2785
        %v4741 = vmul.f32 %v4677, %v2786
        %v4742 = vmul.f32 %v4678, %v2787
        %v4743 = vmul.f32 %v4679, %v2788
        %v4744 = vmul.f32 %v4680, %v2789
        %v4745 = vmul.f32 %v4681, %v2790
        %v4746 = vmul.f32 %v4682, %v2791
        %v4747 = vmul.f32 %v4683, %v2792
        %v4748 = vmul.f32 %v4684, %v2793
        %v4749 = vmul.f32 %v4685, %v2794
        %v4750 = vmul.f32 %v4686, %v2795
        %v4751 = vmul.f32 %v4687, %v2796
        %v4752 = vmul.f32 %v4688, %v2797
        %v4753 = vmul.f32 %v4689, %v2798
        %v4754 = vmul.f32 %v4690, %v2799
        %v4755 = vmul.f32 %v4691, %v2800
        %v4756 = vmul.f32 %v4692, %v2801
        %v4757 = vmul.f32 %v4693, %v2802
        %v4758 = vmul.f32 %v4694, %v2803
        %v4759 = vmul.f32 %v4695, %v2804
        %v4760 = vmul.f32 %v4696, %v2805
        %v4761 = vmul.f32 %v4697, %v2806
        %v4762 = vmul.f32 %v4698, %v2807
        %v4763 = vmul.f32 %v4699, %v2808
        %v4764 = vmul.f32 %v4700, %v2809
        %v4765 = vmul.f32 %v4701, %v2810
        %v4766 = vmul.f32 %v4702, %v2811
        %v4767 = vmul.f32 %v4703, %v2812
        %v4768 = vmul.f32 %v4704, %v2813
        %v4769 = vadd.f32 %v2494, %v4705
        %v4770 = vadd.f32 %v2495, %v4706
        %v4771 = vadd.f32 %v2496, %v4707
        %v4772 = vadd.f32 %v2497, %v4708
        %v4773 = vadd.f32 %v2498, %v4709
        %v4774 = vadd.f32 %v2499, %v4710
        %v4775 = vadd.f32 %v2500, %v4711
        %v4776 = vadd.f32 %v2501, %v4712
        %v4777 = vadd.f32 %v2502, %v4713
        %v4778 = vadd.f32 %v2503, %v4714
        %v4779 = vadd.f32 %v2504, %v4715
        %v4780 = vadd.f32 %v2505, %v4716
        %v4781 = vadd.f32 %v2506, %v4717
        %v4782 = vadd.f32 %v2507, %v4718
        %v4783 = vadd.f32 %v2508, %v4719
        %v4784 = vadd.f32 %v2509, %v4720
        %v4785 = vadd.f32 %v2510, %v4721
        %v4786 = vadd.f32 %v2511, %v4722
        %v4787 = vadd.f32 %v2512, %v4723
        %v4788 = vadd.f32 %v2513, %v4724
        %v4789 = vadd.f32 %v2514, %v4725
        %v4790 = vadd.f32 %v2515, %v4726
        %v4791 = vadd.f32 %v2516, %v4727
        %v4792 = vadd.f32 %v2517, %v4728
        %v4793 = vadd.f32 %v2518, %v4729
        %v4794 = vadd.f32 %v2519, %v4730
        %v4795 = vadd.f32 %v2520, %v4731
        %v4796 = vadd.f32 %v2521, %v4732
        %v4797 = vadd.f32 %v2522, %v4733
        %v4798 = vadd.f32 %v2523, %v4734
        %v4799 = vadd.f32 %v2524, %v4735
        %v4800 = vadd.f32 %v2525, %v4736
        %v4801 = vadd.f32 %v2526, %v4737
        %v4802 = vadd.f32 %v2527, %v4738
        %v4803 = vadd.f32 %v2528, %v4739
        %v4804 = vadd.f32 %v2529, %v4740
        %v4805 = vadd.f32 %v2530, %v4741
        %v4806 = vadd.f32 %v2531, %v4742
        %v4807 = vadd.f32 %v2532, %v4743
        %v4808 = vadd.f32 %v2533, %v4744
        %v4809 = vadd.f32 %v2534, %v4745
        %v4810 = vadd.f32 %v2535, %v4746
        %v4811 = vadd.f32 %v2536, %v4747
        %v4812 = vadd.f32 %v2537, %v4748
        %v4813 = vadd.f32 %v2538, %v4749
        %v4814 = vadd.f32 %v2539, %v4750
        %v4815 = vadd.f32 %v2540, %v4751
        %v4816 = vadd.f32 %v2541, %v4752
        %v4817 = vadd.f32 %v2542, %v4753
        %v4818 = vadd.f32 %v2543, %v4754
        %v4819 = vadd.f32 %v2544, %v4755
        %v4820 = vadd.f32 %v2545, %v4756
        %v4821 = vadd.f32 %v2546, %v4757
        %v4822 = vadd.f32 %v2547, %v4758
        %v4823 = vadd.f32 %v2548, %v4759
        %v4824 = vadd.f32 %v2549, %v4760
        %v4825 = vadd.f32 %v2550, %v4761
        %v4826 = vadd.f32 %v2551, %v4762
        %v4827 = vadd.f32 %v2552, %v4763
        %v4828 = vadd.f32 %v2553, %v4764
        %v4829 = vadd.f32 %v2554, %v4765
        %v4830 = vadd.f32 %v2555, %v4766
        %v4831 = vadd.f32 %v2556, %v4767
        %v4832 = vadd.f32 %v2557, %v4768
        %v4833 = vld [vmem:[%s5] sm:$0x1]
        %v4835 = vsel %vm2970, %v4833, 0
        %4837 = vmatprep.subr.mxu0 %v4770
        %4838 = vmatpush1.msra.mxu0 %v4769
        %4839 = vmatprep.subr.mxu0 %v4786
        %4840 = vmatpush1.msra.mxu0 %v4785
        %4841 = vmatprep.subr.mxu0 %v4802
        %4842 = vmatpush1.msra.mxu0 %v4801
        %4843 = vmatprep.subr.mxu0 %v4818
        %4844 = vmatpush1.msra.mxu0 %v4817
        %4845 = vmatprep.subr.mxu0 0.0
        %4846 = vmatpush1.msra.mxu0 0.0
        %4847 = vmatprep.subr.mxu0 0.0
        %4848 = vmatpush1.msra.mxu0 0.0
        %4849 = vmatprep.subr.mxu0 0.0
        %4850 = vmatpush1.msra.mxu0 0.0
        %4851 = vmatprep.subr.mxu0 0.0
        %4852 = vmatpush1.msra.mxu0 0.0
        %4853 = vmatprep.subr.mxu0 0.0
        %4854 = vmatpush1.msra.mxu0 0.0
        %4855 = vmatprep.subr.mxu0 0.0
        %4856 = vmatpush1.msra.mxu0 0.0
        %4857 = vmatprep.subr.mxu0 0.0
        %4858 = vmatpush1.msra.mxu0 0.0
        %4859 = vmatprep.subr.mxu0 0.0
        %4860 = vmatpush1.msra.mxu0 0.0
        %4861 = vmatprep.subr.mxu0 0.0
        %4862 = vmatpush1.msra.mxu0 0.0
        %4863 = vmatprep.subr.mxu0 0.0
        %4864 = vmatpush1.msra.mxu0 0.0
        %4865 = vmatprep.subr.mxu0 0.0
        %4866 = vmatpush1.msra.mxu0 0.0
        %4867 = vmatprep.subr.mxu0 0.0
        %4868 = vmatpush1.msra.mxu0 0.0
        %4869 = vmatprep.subr.mxu0 0.0
        %4870 = vmatpush1.msra.mxu0 0.0
        %4871 = vmatprep.subr.mxu0 0.0
        %4872 = vmatpush1.msra.mxu0 0.0
        %4873 = vmatprep.subr.mxu0 0.0
        %4874 = vmatpush1.msra.mxu0 0.0
        %4875 = vmatprep.subr.mxu0 0.0
        %4876 = vmatpush1.msra.mxu0 0.0
        %4877 = vmatprep.subr.mxu0 0.0
        %4878 = vmatpush1.msra.mxu0 0.0
        %4879 = vmatprep.subr.mxu0 0.0
        %4880 = vmatpush1.msra.mxu0 0.0
        %4881 = vmatprep.subr.mxu0 0.0
        %4882 = vmatpush1.msra.mxu0 0.0
        %4883 = vmatprep.subr.mxu0 0.0
        %4884 = vmatpush1.msra.mxu0 0.0
        %4885 = vmatprep.subr.mxu0 0.0
        %4886 = vmatpush1.msra.mxu0 0.0
        %4887 = vmatprep.subr.mxu0 0.0
        %4888 = vmatpush1.msra.mxu0 0.0
        %4889 = vmatprep.subr.mxu0 0.0
        %4890 = vmatpush1.msra.mxu0 0.0
        %4891 = vmatprep.subr.mxu0 0.0
        %4892 = vmatpush1.msra.mxu0 0.0
        %4893 = vmatprep.subr.mxu0 0.0
        %4894 = vmatpush1.msra.mxu0 0.0
        %4895 = vmatprep.subr.mxu0 0.0
        %4896 = vmatpush1.msra.mxu0 0.0
        %4897 = vmatprep.subr.mxu0 0.0
        %4898 = vmatpush1.msra.mxu0 0.0
        %4899 = vmatprep.subr.mxu0 0.0
        %4900 = vmatpush1.msra.mxu0 0.0
        %4901 = vmatprep.mubr.f32.mxu0 0.0
        %4902 = vmatmul.mubr.f32.gmra.mrb[0].mxu0 %v4835
        %v4903 = vpop.f32.mrb[0].mxu0
        %v4904 = vadd.f32 0.0, %v4903
        %v4905 = vpop.f32.mrb[0].mxu0
        %v4906 = vadd.f32 0.0, %v4905
        %4907 = vdwg.mxu0
        %4908 = vmatprep.subr.mxu0 %v4772
        %4909 = vmatpush1.msra.mxu0 %v4771
        %4910 = vmatprep.subr.mxu0 %v4788
        %4911 = vmatpush1.msra.mxu0 %v4787
        %4912 = vmatprep.subr.mxu0 %v4804
        %4913 = vmatpush1.msra.mxu0 %v4803
        %4914 = vmatprep.subr.mxu0 %v4820
        %4915 = vmatpush1.msra.mxu0 %v4819
        %4916 = vmatprep.subr.mxu0 0.0
        %4917 = vmatpush1.msra.mxu0 0.0
        %4918 = vmatprep.subr.mxu0 0.0
        %4919 = vmatpush1.msra.mxu0 0.0
        %4920 = vmatprep.subr.mxu0 0.0
        %4921 = vmatpush1.msra.mxu0 0.0
        %4922 = vmatprep.subr.mxu0 0.0
        %4923 = vmatpush1.msra.mxu0 0.0
        %4924 = vmatprep.subr.mxu0 0.0
        %4925 = vmatpush1.msra.mxu0 0.0
        %4926 = vmatprep.subr.mxu0 0.0
        %4927 = vmatpush1.msra.mxu0 0.0
        %4928 = vmatprep.subr.mxu0 0.0
        %4929 = vmatpush1.msra.mxu0 0.0
        %4930 = vmatprep.subr.mxu0 0.0
        %4931 = vmatpush1.msra.mxu0 0.0
        %4932 = vmatprep.subr.mxu0 0.0
        %4933 = vmatpush1.msra.mxu0 0.0
        %4934 = vmatprep.subr.mxu0 0.0
        %4935 = vmatpush1.msra.mxu0 0.0
        %4936 = vmatprep.subr.mxu0 0.0
        %4937 = vmatpush1.msra.mxu0 0.0
        %4938 = vmatprep.subr.mxu0 0.0
        %4939 = vmatpush1.msra.mxu0 0.0
        %4940 = vmatprep.subr.mxu0 0.0
        %4941 = vmatpush1.msra.mxu0 0.0
        %4942 = vmatprep.subr.mxu0 0.0
        %4943 = vmatpush1.msra.mxu0 0.0
        %4944 = vmatprep.subr.mxu0 0.0
        %4945 = vmatpush1.msra.mxu0 0.0
        %4946 = vmatprep.subr.mxu0 0.0
        %4947 = vmatpush1.msra.mxu0 0.0
        %4948 = vmatprep.subr.mxu0 0.0
        %4949 = vmatpush1.msra.mxu0 0.0
        %4950 = vmatprep.subr.mxu0 0.0
        %4951 = vmatpush1.msra.mxu0 0.0
        %4952 = vmatprep.subr.mxu0 0.0
        %4953 = vmatpush1.msra.mxu0 0.0
        %4954 = vmatprep.subr.mxu0 0.0
        %4955 = vmatpush1.msra.mxu0 0.0
        %4956 = vmatprep.subr.mxu0 0.0
        %4957 = vmatpush1.msra.mxu0 0.0
        %4958 = vmatprep.subr.mxu0 0.0
        %4959 = vmatpush1.msra.mxu0 0.0
        %4960 = vmatprep.subr.mxu0 0.0
        %4961 = vmatpush1.msra.mxu0 0.0
        %4962 = vmatprep.subr.mxu0 0.0
        %4963 = vmatpush1.msra.mxu0 0.0
        %4964 = vmatprep.subr.mxu0 0.0
        %4965 = vmatpush1.msra.mxu0 0.0
        %4966 = vmatprep.subr.mxu0 0.0
        %4967 = vmatpush1.msra.mxu0 0.0
        %4968 = vmatprep.subr.mxu0 0.0
        %4969 = vmatpush1.msra.mxu0 0.0
        %4970 = vmatprep.subr.mxu0 0.0
        %4971 = vmatpush1.msra.mxu0 0.0
        %4972 = vmatprep.mubr.f32.mxu0 0.0
        %4973 = vmatmul.mubr.f32.gmra.mrb[0].mxu0 %v4835
        %v4974 = vpop.f32.mrb[0].mxu0
        %v4975 = vadd.f32 0.0, %v4974
        %v4976 = vpop.f32.mrb[0].mxu0
        %v4977 = vadd.f32 0.0, %v4976
        %4978 = vdwg.mxu0
        %4979 = vmatprep.subr.mxu0 %v4774
        %4980 = vmatpush1.msra.mxu0 %v4773
        %4981 = vmatprep.subr.mxu0 %v4790
        %4982 = vmatpush1.msra.mxu0 %v4789
        %4983 = vmatprep.subr.mxu0 %v4806
        %4984 = vmatpush1.msra.mxu0 %v4805
        %4985 = vmatprep.subr.mxu0 %v4822
        %4986 = vmatpush1.msra.mxu0 %v4821
        %4987 = vmatprep.subr.mxu0 0.0
        %4988 = vmatpush1.msra.mxu0 0.0
        %4989 = vmatprep.subr.mxu0 0.0
        %4990 = vmatpush1.msra.mxu0 0.0
        %4991 = vmatprep.subr.mxu0 0.0
        %4992 = vmatpush1.msra.mxu0 0.0
        %4993 = vmatprep.subr.mxu0 0.0
        %4994 = vmatpush1.msra.mxu0 0.0
        %4995 = vmatprep.subr.mxu0 0.0
        %4996 = vmatpush1.msra.mxu0 0.0
        %4997 = vmatprep.subr.mxu0 0.0
        %4998 = vmatpush1.msra.mxu0 0.0
        %4999 = vmatprep.subr.mxu0 0.0
        %5000 = vmatpush1.msra.mxu0 0.0
        %5001 = vmatprep.subr.mxu0 0.0
        %5002 = vmatpush1.msra.mxu0 0.0
        %5003 = vmatprep.subr.mxu0 0.0
        %5004 = vmatpush1.msra.mxu0 0.0
        %5005 = vmatprep.subr.mxu0 0.0
        %5006 = vmatpush1.msra.mxu0 0.0
        %5007 = vmatprep.subr.mxu0 0.0
        %5008 = vmatpush1.msra.mxu0 0.0
        %5009 = vmatprep.subr.mxu0 0.0
        %5010 = vmatpush1.msra.mxu0 0.0
        %5011 = vmatprep.subr.mxu0 0.0
        %5012 = vmatpush1.msra.mxu0 0.0
        %5013 = vmatprep.subr.mxu0 0.0
        %5014 = vmatpush1.msra.mxu0 0.0
        %5015 = vmatprep.subr.mxu0 0.0
        %5016 = vmatpush1.msra.mxu0 0.0
        %5017 = vmatprep.subr.mxu0 0.0
        %5018 = vmatpush1.msra.mxu0 0.0
        %5019 = vmatprep.subr.mxu0 0.0
        %5020 = vmatpush1.msra.mxu0 0.0
        %5021 = vmatprep.subr.mxu0 0.0
        %5022 = vmatpush1.msra.mxu0 0.0
        %5023 = vmatprep.subr.mxu0 0.0
        %5024 = vmatpush1.msra.mxu0 0.0
        %5025 = vmatprep.subr.mxu0 0.0
        %5026 = vmatpush1.msra.mxu0 0.0
        %5027 = vmatprep.subr.mxu0 0.0
        %5028 = vmatpush1.msra.mxu0 0.0
        %5029 = vmatprep.subr.mxu0 0.0
        %5030 = vmatpush1.msra.mxu0 0.0
        %5031 = vmatprep.subr.mxu0 0.0
        %5032 = vmatpush1.msra.mxu0 0.0
        %5033 = vmatprep.subr.mxu0 0.0
        %5034 = vmatpush1.msra.mxu0 0.0
        %5035 = vmatprep.subr.mxu0 0.0
        %5036 = vmatpush1.msra.mxu0 0.0
        %5037 = vmatprep.subr.mxu0 0.0
        %5038 = vmatpush1.msra.mxu0 0.0
        %5039 = vmatprep.subr.mxu0 0.0
        %5040 = vmatpush1.msra.mxu0 0.0
        %5041 = vmatprep.subr.mxu0 0.0
        %5042 = vmatpush1.msra.mxu0 0.0
        %5043 = vmatprep.mubr.f32.mxu0 0.0
        %5044 = vmatmul.mubr.f32.gmra.mrb[0].mxu0 %v4835
        %v5045 = vpop.f32.mrb[0].mxu0
        %v5046 = vadd.f32 0.0, %v5045
        %v5047 = vpop.f32.mrb[0].mxu0
        %v5048 = vadd.f32 0.0, %v5047
        %5049 = vdwg.mxu0
        %5050 = vmatprep.subr.mxu0 %v4776
        %5051 = vmatpush1.msra.mxu0 %v4775
        %5052 = vmatprep.subr.mxu0 %v4792
        %5053 = vmatpush1.msra.mxu0 %v4791
        %5054 = vmatprep.subr.mxu0 %v4808
        %5055 = vmatpush1.msra.mxu0 %v4807
        %5056 = vmatprep.subr.mxu0 %v4824
        %5057 = vmatpush1.msra.mxu0 %v4823
        %5058 = vmatprep.subr.mxu0 0.0
        %5059 = vmatpush1.msra.mxu0 0.0
        %5060 = vmatprep.subr.mxu0 0.0
        %5061 = vmatpush1.msra.mxu0 0.0
        %5062 = vmatprep.subr.mxu0 0.0
        %5063 = vmatpush1.msra.mxu0 0.0
        %5064 = vmatprep.subr.mxu0 0.0
        %5065 = vmatpush1.msra.mxu0 0.0
        %5066 = vmatprep.subr.mxu0 0.0
        %5067 = vmatpush1.msra.mxu0 0.0
        %5068 = vmatprep.subr.mxu0 0.0
        %5069 = vmatpush1.msra.mxu0 0.0
        %5070 = vmatprep.subr.mxu0 0.0
        %5071 = vmatpush1.msra.mxu0 0.0
        %5072 = vmatprep.subr.mxu0 0.0
        %5073 = vmatpush1.msra.mxu0 0.0
        %5074 = vmatprep.subr.mxu0 0.0
        %5075 = vmatpush1.msra.mxu0 0.0
        %5076 = vmatprep.subr.mxu0 0.0
        %5077 = vmatpush1.msra.mxu0 0.0
        %5078 = vmatprep.subr.mxu0 0.0
        %5079 = vmatpush1.msra.mxu0 0.0
        %5080 = vmatprep.subr.mxu0 0.0
        %5081 = vmatpush1.msra.mxu0 0.0
        %5082 = vmatprep.subr.mxu0 0.0
        %5083 = vmatpush1.msra.mxu0 0.0
        %5084 = vmatprep.subr.mxu0 0.0
        %5085 = vmatpush1.msra.mxu0 0.0
        %5086 = vmatprep.subr.mxu0 0.0
        %5087 = vmatpush1.msra.mxu0 0.0
        %5088 = vmatprep.subr.mxu0 0.0
        %5089 = vmatpush1.msra.mxu0 0.0
        %5090 = vmatprep.subr.mxu0 0.0
        %5091 = vmatpush1.msra.mxu0 0.0
        %5092 = vmatprep.subr.mxu0 0.0
        %5093 = vmatpush1.msra.mxu0 0.0
        %5094 = vmatprep.subr.mxu0 0.0
        %5095 = vmatpush1.msra.mxu0 0.0
        %5096 = vmatprep.subr.mxu0 0.0
        %5097 = vmatpush1.msra.mxu0 0.0
        %5098 = vmatprep.subr.mxu0 0.0
        %5099 = vmatpush1.msra.mxu0 0.0
        %5100 = vmatprep.subr.mxu0 0.0
        %5101 = vmatpush1.msra.mxu0 0.0
        %5102 = vmatprep.subr.mxu0 0.0
        %5103 = vmatpush1.msra.mxu0 0.0
        %5104 = vmatprep.subr.mxu0 0.0
        %5105 = vmatpush1.msra.mxu0 0.0
        %5106 = vmatprep.subr.mxu0 0.0
        %5107 = vmatpush1.msra.mxu0 0.0
        %5108 = vmatprep.subr.mxu0 0.0
        %5109 = vmatpush1.msra.mxu0 0.0
        %5110 = vmatprep.subr.mxu0 0.0
        %5111 = vmatpush1.msra.mxu0 0.0
        %5112 = vmatprep.subr.mxu0 0.0
        %5113 = vmatpush1.msra.mxu0 0.0
        %5114 = vmatprep.mubr.f32.mxu0 0.0
        %5115 = vmatmul.mubr.f32.gmra.mrb[0].mxu0 %v4835
        %v5116 = vpop.f32.mrb[0].mxu0
        %v5117 = vadd.f32 0.0, %v5116
        %v5118 = vpop.f32.mrb[0].mxu0
        %v5119 = vadd.f32 0.0, %v5118
        %5120 = vdwg.mxu0
        %5121 = vmatprep.subr.mxu0 %v4778
        %5122 = vmatpush1.msra.mxu0 %v4777
        %5123 = vmatprep.subr.mxu0 %v4794
        %5124 = vmatpush1.msra.mxu0 %v4793
        %5125 = vmatprep.subr.mxu0 %v4810
        %5126 = vmatpush1.msra.mxu0 %v4809
        %5127 = vmatprep.subr.mxu0 %v4826
        %5128 = vmatpush1.msra.mxu0 %v4825
        %5129 = vmatprep.subr.mxu0 0.0
        %5130 = vmatpush1.msra.mxu0 0.0
        %5131 = vmatprep.subr.mxu0 0.0
        %5132 = vmatpush1.msra.mxu0 0.0
        %5133 = vmatprep.subr.mxu0 0.0
        %5134 = vmatpush1.msra.mxu0 0.0
        %5135 = vmatprep.subr.mxu0 0.0
        %5136 = vmatpush1.msra.mxu0 0.0
        %5137 = vmatprep.subr.mxu0 0.0
        %5138 = vmatpush1.msra.mxu0 0.0
        %5139 = vmatprep.subr.mxu0 0.0
        %5140 = vmatpush1.msra.mxu0 0.0
        %5141 = vmatprep.subr.mxu0 0.0
        %5142 = vmatpush1.msra.mxu0 0.0
        %5143 = vmatprep.subr.mxu0 0.0
        %5144 = vmatpush1.msra.mxu0 0.0
        %5145 = vmatprep.subr.mxu0 0.0
        %5146 = vmatpush1.msra.mxu0 0.0
        %5147 = vmatprep.subr.mxu0 0.0
        %5148 = vmatpush1.msra.mxu0 0.0
        %5149 = vmatprep.subr.mxu0 0.0
        %5150 = vmatpush1.msra.mxu0 0.0
        %5151 = vmatprep.subr.mxu0 0.0
        %5152 = vmatpush1.msra.mxu0 0.0
        %5153 = vmatprep.subr.mxu0 0.0
        %5154 = vmatpush1.msra.mxu0 0.0
        %5155 = vmatprep.subr.mxu0 0.0
        %5156 = vmatpush1.msra.mxu0 0.0
        %5157 = vmatprep.subr.mxu0 0.0
        %5158 = vmatpush1.msra.mxu0 0.0
        %5159 = vmatprep.subr.mxu0 0.0
        %5160 = vmatpush1.msra.mxu0 0.0
        %5161 = vmatprep.subr.mxu0 0.0
        %5162 = vmatpush1.msra.mxu0 0.0
        %5163 = vmatprep.subr.mxu0 0.0
        %5164 = vmatpush1.msra.mxu0 0.0
        %5165 = vmatprep.subr.mxu0 0.0
        %5166 = vmatpush1.msra.mxu0 0.0
        %5167 = vmatprep.subr.mxu0 0.0
        %5168 = vmatpush1.msra.mxu0 0.0
        %5169 = vmatprep.subr.mxu0 0.0
        %5170 = vmatpush1.msra.mxu0 0.0
        %5171 = vmatprep.subr.mxu0 0.0
        %5172 = vmatpush1.msra.mxu0 0.0
        %5173 = vmatprep.subr.mxu0 0.0
        %5174 = vmatpush1.msra.mxu0 0.0
        %5175 = vmatprep.subr.mxu0 0.0
        %5176 = vmatpush1.msra.mxu0 0.0
        %5177 = vmatprep.subr.mxu0 0.0
        %5178 = vmatpush1.msra.mxu0 0.0
        %5179 = vmatprep.subr.mxu0 0.0
        %5180 = vmatpush1.msra.mxu0 0.0
        %5181 = vmatprep.subr.mxu0 0.0
        %5182 = vmatpush1.msra.mxu0 0.0
        %5183 = vmatprep.subr.mxu0 0.0
        %5184 = vmatpush1.msra.mxu0 0.0
        %5185 = vmatprep.mubr.f32.mxu0 0.0
        %5186 = vmatmul.mubr.f32.gmra.mrb[0].mxu0 %v4835
        %v5187 = vpop.f32.mrb[0].mxu0
        %v5188 = vadd.f32 0.0, %v5187
        %v5189 = vpop.f32.mrb[0].mxu0
        %v5190 = vadd.f32 0.0, %v5189
        %5191 = vdwg.mxu0
        %5192 = vmatprep.subr.mxu0 %v4780
        %5193 = vmatpush1.msra.mxu0 %v4779
        %5194 = vmatprep.subr.mxu0 %v4796
        %5195 = vmatpush1.msra.mxu0 %v4795
        %5196 = vmatprep.subr.mxu0 %v4812
        %5197 = vmatpush1.msra.mxu0 %v4811
        %5198 = vmatprep.subr.mxu0 %v4828
        %5199 = vmatpush1.msra.mxu0 %v4827
        %5200 = vmatprep.subr.mxu0 0.0
        %5201 = vmatpush1.msra.mxu0 0.0
        %5202 = vmatprep.subr.mxu0 0.0
        %5203 = vmatpush1.msra.mxu0 0.0
        %5204 = vmatprep.subr.mxu0 0.0
        %5205 = vmatpush1.msra.mxu0 0.0
        %5206 = vmatprep.subr.mxu0 0.0
        %5207 = vmatpush1.msra.mxu0 0.0
        %5208 = vmatprep.subr.mxu0 0.0
        %5209 = vmatpush1.msra.mxu0 0.0
        %5210 = vmatprep.subr.mxu0 0.0
        %5211 = vmatpush1.msra.mxu0 0.0
        %5212 = vmatprep.subr.mxu0 0.0
        %5213 = vmatpush1.msra.mxu0 0.0
        %5214 = vmatprep.subr.mxu0 0.0
        %5215 = vmatpush1.msra.mxu0 0.0
        %5216 = vmatprep.subr.mxu0 0.0
        %5217 = vmatpush1.msra.mxu0 0.0
        %5218 = vmatprep.subr.mxu0 0.0
        %5219 = vmatpush1.msra.mxu0 0.0
        %5220 = vmatprep.subr.mxu0 0.0
        %5221 = vmatpush1.msra.mxu0 0.0
        %5222 = vmatprep.subr.mxu0 0.0
        %5223 = vmatpush1.msra.mxu0 0.0
        %5224 = vmatprep.subr.mxu0 0.0
        %5225 = vmatpush1.msra.mxu0 0.0
        %5226 = vmatprep.subr.mxu0 0.0
        %5227 = vmatpush1.msra.mxu0 0.0
        %5228 = vmatprep.subr.mxu0 0.0
        %5229 = vmatpush1.msra.mxu0 0.0
        %5230 = vmatprep.subr.mxu0 0.0
        %5231 = vmatpush1.msra.mxu0 0.0
        %5232 = vmatprep.subr.mxu0 0.0
        %5233 = vmatpush1.msra.mxu0 0.0
        %5234 = vmatprep.subr.mxu0 0.0
        %5235 = vmatpush1.msra.mxu0 0.0
        %5236 = vmatprep.subr.mxu0 0.0
        %5237 = vmatpush1.msra.mxu0 0.0
        %5238 = vmatprep.subr.mxu0 0.0
        %5239 = vmatpush1.msra.mxu0 0.0
        %5240 = vmatprep.subr.mxu0 0.0
        %5241 = vmatpush1.msra.mxu0 0.0
        %5242 = vmatprep.subr.mxu0 0.0
        %5243 = vmatpush1.msra.mxu0 0.0
        %5244 = vmatprep.subr.mxu0 0.0
        %5245 = vmatpush1.msra.mxu0 0.0
        %5246 = vmatprep.subr.mxu0 0.0
        %5247 = vmatpush1.msra.mxu0 0.0
        %5248 = vmatprep.subr.mxu0 0.0
        %5249 = vmatpush1.msra.mxu0 0.0
        %5250 = vmatprep.subr.mxu0 0.0
        %5251 = vmatpush1.msra.mxu0 0.0
        %5252 = vmatprep.subr.mxu0 0.0
        %5253 = vmatpush1.msra.mxu0 0.0
        %5254 = vmatprep.subr.mxu0 0.0
        %5255 = vmatpush1.msra.mxu0 0.0
        %5256 = vmatprep.mubr.f32.mxu0 0.0
        %5257 = vmatmul.mubr.f32.gmra.mrb[0].mxu0 %v4835
        %v5258 = vpop.f32.mrb[0].mxu0
        %v5259 = vadd.f32 0.0, %v5258
        %v5260 = vpop.f32.mrb[0].mxu0
        %v5261 = vadd.f32 0.0, %v5260
        %5262 = vdwg.mxu0
        %5263 = vmatprep.subr.mxu0 %v4782
        %5264 = vmatpush1.msra.mxu0 %v4781
        %5265 = vmatprep.subr.mxu0 %v4798
        %5266 = vmatpush1.msra.mxu0 %v4797
        %5267 = vmatprep.subr.mxu0 %v4814
        %5268 = vmatpush1.msra.mxu0 %v4813
        %5269 = vmatprep.subr.mxu0 %v4830
        %5270 = vmatpush1.msra.mxu0 %v4829
        %5271 = vmatprep.subr.mxu0 0.0
        %5272 = vmatpush1.msra.mxu0 0.0
        %5273 = vmatprep.subr.mxu0 0.0
        %5274 = vmatpush1.msra.mxu0 0.0
        %5275 = vmatprep.subr.mxu0 0.0
        %5276 = vmatpush1.msra.mxu0 0.0
        %5277 = vmatprep.subr.mxu0 0.0
        %5278 = vmatpush1.msra.mxu0 0.0
        %5279 = vmatprep.subr.mxu0 0.0
        %5280 = vmatpush1.msra.mxu0 0.0
        %5281 = vmatprep.subr.mxu0 0.0
        %5282 = vmatpush1.msra.mxu0 0.0
        %5283 = vmatprep.subr.mxu0 0.0
        %5284 = vmatpush1.msra.mxu0 0.0
        %5285 = vmatprep.subr.mxu0 0.0
        %5286 = vmatpush1.msra.mxu0 0.0
        %5287 = vmatprep.subr.mxu0 0.0
        %5288 = vmatpush1.msra.mxu0 0.0
        %5289 = vmatprep.subr.mxu0 0.0
        %5290 = vmatpush1.msra.mxu0 0.0
        %5291 = vmatprep.subr.mxu0 0.0
        %5292 = vmatpush1.msra.mxu0 0.0
        %5293 = vmatprep.subr.mxu0 0.0
        %5294 = vmatpush1.msra.mxu0 0.0
        %5295 = vmatprep.subr.mxu0 0.0
        %5296 = vmatpush1.msra.mxu0 0.0
        %5297 = vmatprep.subr.mxu0 0.0
        %5298 = vmatpush1.msra.mxu0 0.0
        %5299 = vmatprep.subr.mxu0 0.0
        %5300 = vmatpush1.msra.mxu0 0.0
        %5301 = vmatprep.subr.mxu0 0.0
        %5302 = vmatpush1.msra.mxu0 0.0
        %5303 = vmatprep.subr.mxu0 0.0
        %5304 = vmatpush1.msra.mxu0 0.0
        %5305 = vmatprep.subr.mxu0 0.0
        %5306 = vmatpush1.msra.mxu0 0.0
        %5307 = vmatprep.subr.mxu0 0.0
        %5308 = vmatpush1.msra.mxu0 0.0
        %5309 = vmatprep.subr.mxu0 0.0
        %5310 = vmatpush1.msra.mxu0 0.0
        %5311 = vmatprep.subr.mxu0 0.0
        %5312 = vmatpush1.msra.mxu0 0.0
        %5313 = vmatprep.subr.mxu0 0.0
        %5314 = vmatpush1.msra.mxu0 0.0
        %5315 = vmatprep.subr.mxu0 0.0
        %5316 = vmatpush1.msra.mxu0 0.0
        %5317 = vmatprep.subr.mxu0 0.0
        %5318 = vmatpush1.msra.mxu0 0.0
        %5319 = vmatprep.subr.mxu0 0.0
        %5320 = vmatpush1.msra.mxu0 0.0
        %5321 = vmatprep.subr.mxu0 0.0
        %5322 = vmatpush1.msra.mxu0 0.0
        %5323 = vmatprep.subr.mxu0 0.0
        %5324 = vmatpush1.msra.mxu0 0.0
        %5325 = vmatprep.subr.mxu0 0.0
        %5326 = vmatpush1.msra.mxu0 0.0
        %5327 = vmatprep.mubr.f32.mxu0 0.0
        %5328 = vmatmul.mubr.f32.gmra.mrb[0].mxu0 %v4835
        %v5329 = vpop.f32.mrb[0].mxu0
        %v5330 = vadd.f32 0.0, %v5329
        %v5331 = vpop.f32.mrb[0].mxu0
        %v5332 = vadd.f32 0.0, %v5331
        %5333 = vdwg.mxu0
        %5334 = vmatprep.subr.mxu0 %v4784
        %5335 = vmatpush1.msra.mxu0 %v4783
        %5336 = vmatprep.subr.mxu0 %v4800
        %5337 = vmatpush1.msra.mxu0 %v4799
        %5338 = vmatprep.subr.mxu0 %v4816
        %5339 = vmatpush1.msra.mxu0 %v4815
        %5340 = vmatprep.subr.mxu0 %v4832
        %5341 = vmatpush1.msra.mxu0 %v4831
        %5342 = vmatprep.subr.mxu0 0.0
        %5343 = vmatpush1.msra.mxu0 0.0
        %5344 = vmatprep.subr.mxu0 0.0
        %5345 = vmatpush1.msra.mxu0 0.0
        %5346 = vmatprep.subr.mxu0 0.0
        %5347 = vmatpush1.msra.mxu0 0.0
        %5348 = vmatprep.subr.mxu0 0.0
        %5349 = vmatpush1.msra.mxu0 0.0
        %5350 = vmatprep.subr.mxu0 0.0
        %5351 = vmatpush1.msra.mxu0 0.0
        %5352 = vmatprep.subr.mxu0 0.0
        %5353 = vmatpush1.msra.mxu0 0.0
        %5354 = vmatprep.subr.mxu0 0.0
        %5355 = vmatpush1.msra.mxu0 0.0
        %5356 = vmatprep.subr.mxu0 0.0
        %5357 = vmatpush1.msra.mxu0 0.0
        %5358 = vmatprep.subr.mxu0 0.0
        %5359 = vmatpush1.msra.mxu0 0.0
        %5360 = vmatprep.subr.mxu0 0.0
        %5361 = vmatpush1.msra.mxu0 0.0
        %5362 = vmatprep.subr.mxu0 0.0
        %5363 = vmatpush1.msra.mxu0 0.0
        %5364 = vmatprep.subr.mxu0 0.0
        %5365 = vmatpush1.msra.mxu0 0.0
        %5366 = vmatprep.subr.mxu0 0.0
        %5367 = vmatpush1.msra.mxu0 0.0
        %5368 = vmatprep.subr.mxu0 0.0
        %5369 = vmatpush1.msra.mxu0 0.0
        %5370 = vmatprep.subr.mxu0 0.0
        %5371 = vmatpush1.msra.mxu0 0.0
        %5372 = vmatprep.subr.mxu0 0.0
        %5373 = vmatpush1.msra.mxu0 0.0
        %5374 = vmatprep.subr.mxu0 0.0
        %5375 = vmatpush1.msra.mxu0 0.0
        %5376 = vmatprep.subr.mxu0 0.0
        %5377 = vmatpush1.msra.mxu0 0.0
        %5378 = vmatprep.subr.mxu0 0.0
        %5379 = vmatpush1.msra.mxu0 0.0
        %5380 = vmatprep.subr.mxu0 0.0
        %5381 = vmatpush1.msra.mxu0 0.0
        %5382 = vmatprep.subr.mxu0 0.0
        %5383 = vmatpush1.msra.mxu0 0.0
        %5384 = vmatprep.subr.mxu0 0.0
        %5385 = vmatpush1.msra.mxu0 0.0
        %5386 = vmatprep.subr.mxu0 0.0
        %5387 = vmatpush1.msra.mxu0 0.0
        %5388 = vmatprep.subr.mxu0 0.0
        %5389 = vmatpush1.msra.mxu0 0.0
        %5390 = vmatprep.subr.mxu0 0.0
        %5391 = vmatpush1.msra.mxu0 0.0
        %5392 = vmatprep.subr.mxu0 0.0
        %5393 = vmatpush1.msra.mxu0 0.0
        %5394 = vmatprep.subr.mxu0 0.0
        %5395 = vmatpush1.msra.mxu0 0.0
        %5396 = vmatprep.subr.mxu0 0.0
        %5397 = vmatpush1.msra.mxu0 0.0
        %5398 = vmatprep.mubr.f32.mxu0 0.0
        %5399 = vmatmul.mubr.f32.gmra.mrb[0].mxu0 %v4835
        %v5400 = vpop.f32.mrb[0].mxu0
        %v5401 = vadd.f32 0.0, %v5400
        %v5402 = vpop.f32.mrb[0].mxu0
        %v5403 = vadd.f32 0.0, %v5402
        %5404 = vdwg.mxu0
        %v5421 = vcombine.low %v4904, %v4906
        %v5422 = vcombine.low %v4975, %v4977
        %v5423 = vcombine.low %v5046, %v5048
        %v5424 = vcombine.low %v5117, %v5119
        %v5426 = vunpack.c.l.s4 1966171168
        %v5427 = vunpack.c.0.s8 %v5426
        %v5428 = vlaneseq
        %v5429 = vshrl.u32 %v5428, 7
        %v5430 = vsub.s32 %v5427, %v5429
        %v5431 = vrot.slane %v5421, %v5430
        %v5433 = vunpack.c.l.s4 1966171168
        %v5434 = vunpack.c.0.s8 %v5433
        %v5435 = vlaneseq
        %v5436 = vshrl.u32 %v5435, 7
        %v5437 = vsub.s32 %v5434, %v5436
        %v5438 = vrot.slane %v5422, %v5437
        %v5440 = vunpack.c.l.s4 1966171168
        %v5441 = vunpack.c.0.s8 %v5440
        %v5442 = vlaneseq
        %v5443 = vshrl.u32 %v5442, 7
        %v5444 = vsub.s32 %v5441, %v5443
        %v5445 = vrot.slane %v5423, %v5444
        %v5447 = vunpack.c.l.s4 1966171168
        %v5448 = vunpack.c.0.s8 %v5447
        %v5449 = vlaneseq
        %v5450 = vshrl.u32 %v5449, 7
        %v5451 = vsub.s32 %v5448, %v5450
        %v5452 = vrot.slane %v5424, %v5451
        %v5453 = vcombine.low %v5431, %v5438
        %v5454 = vcombine.low %v5445, %v5452
        %v5456 = vunpack.c.l.s4 1966171168
        %v5457 = vunpack.c.0.s8 %v5456
        %v5458 = vlaneseq
        %v5459 = vshrl.u32 %v5458, 7
        %v5460 = vsub.s32 %v5457, %v5459
        %v5461 = vrot.slane %v5453, %v5460
        %v5463 = vunpack.c.l.s4 1966171168
        %v5464 = vunpack.c.0.s8 %v5463
        %v5465 = vlaneseq
        %v5466 = vshrl.u32 %v5465, 7
        %v5467 = vsub.s32 %v5464, %v5466
        %v5468 = vrot.slane %v5454, %v5467
        %v5469 = vcombine.low %v5461, %v5468
        %v5470 = vcombine.low %v5188, %v5190
        %v5471 = vcombine.low %v5259, %v5261
        %v5472 = vcombine.low %v5330, %v5332
        %v5473 = vcombine.low %v5401, %v5403
        %v5475 = vunpack.c.l.s4 1966171168
        %v5476 = vunpack.c.0.s8 %v5475
        %v5477 = vlaneseq
        %v5478 = vshrl.u32 %v5477, 7
        %v5479 = vsub.s32 %v5476, %v5478
        %v5480 = vrot.slane %v5470, %v5479
        %v5482 = vunpack.c.l.s4 1966171168
        %v5483 = vunpack.c.0.s8 %v5482
        %v5484 = vlaneseq
        %v5485 = vshrl.u32 %v5484, 7
        %v5486 = vsub.s32 %v5483, %v5485
        %v5487 = vrot.slane %v5471, %v5486
        %v5489 = vunpack.c.l.s4 1966171168
        %v5490 = vunpack.c.0.s8 %v5489
        %v5491 = vlaneseq
        %v5492 = vshrl.u32 %v5491, 7
        %v5493 = vsub.s32 %v5490, %v5492
        %v5494 = vrot.slane %v5472, %v5493
        %v5496 = vunpack.c.l.s4 1966171168
        %v5497 = vunpack.c.0.s8 %v5496
        %v5498 = vlaneseq
        %v5499 = vshrl.u32 %v5498, 7
        %v5500 = vsub.s32 %v5497, %v5499
        %v5501 = vrot.slane %v5473, %v5500
        %v5502 = vcombine.low %v5480, %v5487
        %v5503 = vcombine.low %v5494, %v5501
        %v5505 = vunpack.c.l.s4 1966171168
        %v5506 = vunpack.c.0.s8 %v5505
        %v5507 = vlaneseq
        %v5508 = vshrl.u32 %v5507, 7
        %v5509 = vsub.s32 %v5506, %v5508
        %v5510 = vrot.slane %v5502, %v5509
        %v5512 = vunpack.c.l.s4 1966171168
        %v5513 = vunpack.c.0.s8 %v5512
        %v5514 = vlaneseq
        %v5515 = vshrl.u32 %v5514, 7
        %v5516 = vsub.s32 %v5513, %v5515
        %v5517 = vrot.slane %v5503, %v5516
        %v5518 = vcombine.low %v5510, %v5517
        %5521 = vst [vmem:[%s245] sm:$0xff] %v5469
        %5522 = vst [vmem:[%s245 + $0x8] sm:$0xff] %v5518
        %s5523 = sand.u32 %s159, 1
        %s5524 = scalar_lea.sflag [#allocation3], %s5523
        %s5525 = sand.u32 %s159, 1
        %s5526 = smul.addr %s5525, 16
        %s5527 = scalar_lea.vmem [#allocation2], %s5526
        // Predicated region
        $region45: #{tpu_custom_call.1} parent=43 // pred_check
          %p5528 = pneg %p169
        $region46: #{tpu_custom_call.1} parent=43 // pred_check_branch
          %5530 = sbr.rel (%p5528) target = $region48
        $region47: #{tpu_custom_call.1} parent=43 // pred_region
          %s5531 = smul.u32 16, %s20
          %s5533 = ssub.s32 256, 256
          %5534 = vsyncadd %s5524, %s5533
          %s5535 = smul.addr %s5531, 16
          %s5536 = scalar_lea.hbm %s6, %s5535
          %s5538 = sshll.u32 %s5527, 4
          %s5539 = int_to_ptr.vmem [resolvable:$true] %s5538
          %5541 = dma.vmem_to_hbm [thread:$0]  %s5539, 256, %s5536, %s5524
        $region48: #{tpu_custom_call.1} parent=43 // pred_fallthru
          _
      $region44: #{tpu_custom_call.1} parent=5 // pred_fallthru
        _
      %p5542 = scmp.le.s32.totalorder 2, %s15
      // Predicated region
      $region49: #{tpu_custom_call.1} parent=5 // pred_check
        %p5543 = pneg %p5542
      $region50: #{tpu_custom_call.1} parent=5 // pred_check_branch
        %5545 = sbr.rel (%p5543) target = $region52
      $region51: #{tpu_custom_call.1} parent=5 // pred_region
        %s5546 = ssub.s32 %s15, 2
        // Predicated region
        $region53: #{tpu_custom_call.1} parent=51 // pred_check
          %p5547 = pneg %p175
        $region54: #{tpu_custom_call.1} parent=51 // pred_check_branch
          %5549 = sbr.rel (%p5547) target = $region56
        $region55: #{tpu_custom_call.1} parent=51 // pred_region
          %s5550 = sand.u32 %s160, 1
          %s5551 = scalar_lea.sflag [#allocation3], %s5550
          %s5552 = sand.u32 %s160, 1
          %s5553 = smul.addr %s5552, 16
          %s5554 = scalar_lea.vmem [#allocation2], %s5553
          %5555 = dma.done %s5551, 256
        $region56: #{tpu_custom_call.1} parent=51 // pred_fallthru
          _
      $region52: #{tpu_custom_call.1} parent=5 // pred_fallthru
        _
    $region6: #{tpu_custom_call.1} parent=1 // loop_footer
      %s19 = sadd.s32 1, %s15
    $region7: #{tpu_custom_call.1} parent=1 // loop_footer_branch
      %14 = sbr.rel target = $region3
    $region8: #{tpu_custom_call.1} parent=1 // loop_exit
      _
    %5556 = vsyncpa [#allocation3], 1
    %s5557 = scalar_lea.sflag [#allocation3], 1
    %5558 = vsyncpa %s5557, 1

</llo_original>
